<compile_context>
chip_gen: v5e
topology: v5e:2x2
jax: 0.10.0
libtpu: 0.0.40
codegen_flags: <defaults>
</compile_context>

<pallas_src>
import jax
import jax.numpy as jnp
from jax import lax
from jax.experimental import pallas as pl
from jax.experimental.pallas import tpu as pltpu


# -----------------------------------------------------------------------------
# Generation-aware budgets.
# -----------------------------------------------------------------------------
def _vmem_capacity_bytes():
    try:
        cap = int(pltpu.get_tpu_info().vmem_capacity_bytes)
        if cap > 0:
            return cap
    except Exception:
        pass
    return 64 * 1024 * 1024            # conservative default (v7x per-TensorCore)


_VMEM_CAP_BYTES = _vmem_capacity_bytes()
_VMEM_LIMIT_BYTES = min((_VMEM_CAP_BYTES * 3) // 4, 96 * 1024 * 1024)
_RESIDENT_TABLE_BYTES = (_VMEM_CAP_BYTES * 3) // 8   # 48 MiB v5e/v6e, 24 MiB v7x

_RESIDENT_TOKEN_BLOCK = 256      # fills the 256x256 MXU on v6e/v7x
_DMA_TOKEN_BLOCK = 128
_DMA_WINDOW = 16                 # in-flight per-row HBM gathers (latency-bound)
_ONE_HOT_MAX_VOCAB = 8192        # beyond this, one-hot matmul stops paying off
_MAX_DMA_TOKENS_PER_CALL = 8192  # bounds the scalar-prefetched id stream in SMEM


# -----------------------------------------------------------------------------
# Path 1: VMEM-resident table — one-hot MXU gather.
# -----------------------------------------------------------------------------
def _embedding_onehot_kernel(ids_ref, table_ref, out_ref):
    # ids_ref:   (TB, 1) int32 VMEM block of token ids
    # table_ref: (V, D)  float32, resident across the grid (constant block idx)
    # out_ref:   (TB, D) float32 output block
    tb = out_ref.shape[0]
    vocab = table_ref.shape[0]
    lane_iota = lax.broadcasted_iota(jnp.int32, (tb, vocab), 1)
    one_hot = (ids_ref[...] == lane_iota).astype(table_ref.dtype)
    # HIGHEST precision keeps the f32 one-hot gather exact on the MXU.
    out_ref[...] = jax.lax.dot(
        one_hot,
        table_ref[...],
        precision=jax.lax.Precision.HIGHEST,
        preferred_element_type=jnp.float32,
    ).astype(out_ref.dtype)


def _resident_gather(table, flat_ids, *, single_buffer_table=True):
    """One-hot MXU gather with the whole table resident in VMEM."""
    vocab, d = table.shape
    # Pad vocab to a lane multiple so both matmul operands have dense layouts.
    v_pad = pl.cdiv(vocab, 128) * 128
    if v_pad != vocab:
        table = jnp.pad(table, ((0, v_pad - vocab), (0, 0)))

    n = flat_ids.shape[0]
    tb = _RESIDENT_TOKEN_BLOCK
    n_pad = pl.cdiv(n, tb) * tb
    ids2d = jnp.pad(flat_ids, (0, n_pad - n)).reshape(n_pad, 1)

    table_spec_kwargs = {}
    if single_buffer_table:
        # Constant block index -> fetched once; single-buffer it so the
        # resident table costs 1x (not 2x) its size in VMEM.
        table_spec_kwargs["pipeline_mode"] = pl.Buffered(1)

    out = pl.pallas_call(
        _embedding_onehot_kernel,
        out_shape=jax.ShapeDtypeStruct((n_pad, d), table.dtype),
        grid=(n_pad // tb,),
        in_specs=[
            pl.BlockSpec((tb, 1), lambda i: (i, 0)),
            pl.BlockSpec((v_pad, d), lambda i: (0, 0), **table_spec_kwargs),
        ],
        out_specs=pl.BlockSpec((tb, d), lambda i: (i, 0)),
        compiler_params=pltpu.CompilerParams(
            dimension_semantics=("parallel",),
            vmem_limit_bytes=_VMEM_LIMIT_BYTES,
        ),
    )(ids2d, table)
    return out[:n]


# -----------------------------------------------------------------------------
# Path 2: table stays in HBM — per-row DMA gather straight into the out block.
# -----------------------------------------------------------------------------
def _embedding_dma_kernel(ids_ref, table_hbm, out_ref, sems):
    # ids_ref:   (n_padded,) int32 scalar-prefetched into SMEM
    # table_hbm: (V, D) in HBM (memory_space=pl.ANY)
    # out_ref:   (TB, D) VMEM output block (rows written directly by the DMAs)
    # sems:      (_DMA_WINDOW,) DMA semaphores — rotating in-flight window
    tb = out_ref.shape[0]
    base = pl.program_id(0) * tb

    def issue(t, idx):
        pltpu.make_async_copy(
            table_hbm.at[idx], out_ref.at[t], sems.at[t % _DMA_WINDOW]
        ).start()

    def wait_row(t):
        pltpu.make_async_copy(
            table_hbm.at[0], out_ref.at[t], sems.at[t % _DMA_WINDOW]
        ).wait()

    # Prime the window with the first _DMA_WINDOW row gathers.
    @pl.loop(0, min(_DMA_WINDOW, tb))
    def _(t):
        issue(t, ids_ref[base + t])

    # Complete row t, immediately refill its semaphore slot with row t + W.
    @pl.loop(0, tb)
    def _(t):
        # Hoist the SMEM id read above the wait (.wait() breaks sst->sld
        # forwarding); clamp so the read never goes past this block's ids.
        next_idx = ids_ref[base + jnp.minimum(t + _DMA_WINDOW, tb - 1)]
        wait_row(t)

        @pl.when(t + _DMA_WINDOW < tb)
        def _():
            issue(t + _DMA_WINDOW, next_idx)

    # TODO(synk): hide the per-block window drain by prefetching the first
    # _DMA_WINDOW rows of block i+1 into a persistent scratch staging buffer.


def _dma_gather_chunk(table, chunk_ids):
    vocab, d = table.shape
    n = chunk_ids.shape[0]
    tb = _DMA_TOKEN_BLOCK
    n_pad = pl.cdiv(n, tb) * tb
    ids = jnp.pad(chunk_ids, (0, n_pad - n))

    grid_spec = pltpu.PrefetchScalarGridSpec(
        num_scalar_prefetch=1,
        grid=(n_pad // tb,),
        in_specs=[pl.BlockSpec(memory_space=pl.ANY)],
        out_specs=pl.BlockSpec((tb, d), lambda i, ids: (i, 0)),
        scratch_shapes=[pltpu.SemaphoreType.DMA((_DMA_WINDOW,))],
    )
    out = pl.pallas_call(
        _embedding_dma_kernel,
        out_shape=jax.ShapeDtypeStruct((n_pad, d), table.dtype),
        grid_spec=grid_spec,
        compiler_params=pltpu.CompilerParams(
            dimension_semantics=("parallel",),
            vmem_limit_bytes=_VMEM_LIMIT_BYTES,
        ),
    )(ids, table)
    return out[:n]


def _dma_gather(table, flat_ids):
    n = flat_ids.shape[0]
    if n <= _MAX_DMA_TOKENS_PER_CALL:
        return _dma_gather_chunk(table, flat_ids)
    parts = [
        _dma_gather_chunk(table, flat_ids[s:s + _MAX_DMA_TOKENS_PER_CALL])
        for s in range(0, n, _MAX_DMA_TOKENS_PER_CALL)
    ]
    return jnp.concatenate(parts, axis=0)


# -----------------------------------------------------------------------------
# Wrapper / module
# -----------------------------------------------------------------------------
def embedding_lookup(table, ids, *, force_dma=False):
    """Pallas equivalent of `nn.Embedding(vocab, D)(ids)`: out = table[ids]."""
    vocab, d = table.shape
    orig_shape = ids.shape
    flat_ids = ids.reshape(-1).astype(jnp.int32)
    # torch raises on out-of-range ids; TPU DMA does not bounds-check — clamp.
    flat_ids = jnp.clip(flat_ids, 0, vocab - 1)

    # Lane-pad D so (TB, D) output blocks are fully dense (unmasked stores).
    d_pad = pl.cdiv(d, 128) * 128
    table_p = jnp.pad(table, ((0, 0), (0, d_pad - d))) if d_pad != d else table

    v_res = pl.cdiv(vocab, 128) * 128
    resident_bytes = v_res * d_pad * table_p.dtype.itemsize
    use_resident = (
        not force_dma
        and vocab <= _ONE_HOT_MAX_VOCAB
        and resident_bytes <= _RESIDENT_TABLE_BYTES
    )

    if use_resident:
        try:
            out = _resident_gather(table_p, flat_ids, single_buffer_table=True)
        except Exception:
            try:
                # Retry with default double-buffering of the resident table.
                out = _resident_gather(table_p, flat_ids, single_buffer_table=False)
            except Exception:
                # Last-resort: HBM per-row DMA gather (always available).
                out = _dma_gather(table_p, flat_ids)
    else:
        # TODO(synk): for resident-size tables with vocab > _ONE_HOT_MAX_VOCAB a
        # vectorized in-VMEM gather (jnp.take) would beat per-row HBM DMAs.
        # TODO(synk): for very large embed_dim (>= ~4K f32) add a second grid
        # axis tiling D so the DMA path's blocks stay inside scoped VMEM.
        out = _dma_gather(table_p, flat_ids)

    if d_pad != d:
        out = out[:, :d]
    return out.reshape(*orig_shape, d)


class Embedding:
    """Minimal JAX counterpart of the PyTorch module (nn.Embedding lookup)."""

    def __init__(self, vocab_size, embed_dim, key):
        # nn.Embedding default init: weight ~ N(0, 1)
        self.weight = jax.random.normal(
            key, (vocab_size, embed_dim), dtype=jnp.float32
        )

    def __call__(self, x):
        return embedding_lookup(self.weight, x)


if __name__ == "__main__":
    vocab_size = 50
    embed_dim = 128
    batch, seq = 2, 8

    key = jax.random.PRNGKey(0)
    k_w, k_x = jax.random.split(key)

    model = Embedding(vocab_size, embed_dim, k_w)
    x = jax.random.randint(k_x, (batch, seq), 0, vocab_size, dtype=jnp.int32)

    ref = model.weight[x]

    # Default path: VMEM-resident table, one-hot MXU gather.
    out = jax.block_until_ready(model(x))
    assert out.shape == (batch, seq, embed_dim)
    assert jnp.allclose(out, ref, rtol=1e-6, atol=1e-6), (
        "resident-path mismatch vs reference gather"
    )

    # Also exercise the large-table manual-DMA gather path at the same shapes.
    out_dma = jax.block_until_ready(
        embedding_lookup(model.weight, x, force_dma=True)
    )
    assert jnp.allclose(out_dma, ref), "dma-path mismatch vs reference gather"

    print("KERNEL_OK")
</pallas_src>

<mosaic_0001>
module attributes {stable_mosaic.version = 11 : i64} {
  func.func @_embedding_onehot_kernel(%arg0: i32, %arg1: memref<256x1xi32, #tpu.memory_space<vmem>>, %arg2: memref<128x128xf32, #tpu.memory_space<vmem>>, %arg3: memref<256x128xf32, #tpu.memory_space<vmem>>) attributes {dimension_semantics = [#tpu.dimension_semantics<parallel>], iteration_bounds = array<i64: 1>, scalar_prefetch = 0 : i64, scratch_operands = 0 : i64, tpu.core_type = #tpu.core_type<tc>, window_params = [{transform_indices = @transform_0, window_bounds = array<i64: 256, 1>}, {pipeline_mode = #tpu.pipeline_mode<synchronous>, transform_indices = @transform_1, window_bounds = array<i64: 128, 128>}, {transform_indices = @transform_2, window_bounds = array<i64: 256, 128>}]} {
    %0 = tpu.iota {dimensions = array<i32: 1>} : vector<256x128xi32>
    %c0 = arith.constant 0 : index
    %c0_0 = arith.constant 0 : index
    %1 = vector.load %arg1[%c0, %c0_0] : memref<256x1xi32, #tpu.memory_space<vmem>>, vector<256x1xi32>
    %2 = vector.broadcast %1 : vector<256x1xi32> to vector<256x128xi32>
    %3 = arith.cmpi eq, %2, %0 : vector<256x128xi32>
    %4 = arith.extui %3 : vector<256x128xi1> to vector<256x128xi32>
    %5 = arith.sitofp %4 : vector<256x128xi32> to vector<256x128xf32>
    %c0_1 = arith.constant 0 : index
    %c0_2 = arith.constant 0 : index
    %6 = vector.load %arg2[%c0_1, %c0_2] : memref<128x128xf32, #tpu.memory_space<vmem>>, vector<128x128xf32>
    %cst = arith.constant dense<0.000000e+00> : vector<256x128xf32>
    %7 = tpu.matmul %5, %6, %cst {dimension_numbers = #tpu.dot_dimension_numbers<[1], [0], [0], [1], [0, 0, 1, 1], [], []>, precision = #tpu.contract_precision<fp32>} : vector<256x128xf32>, vector<128x128xf32>, vector<256x128xf32> -> vector<256x128xf32>
    %c0_3 = arith.constant 0 : index
    %c0_4 = arith.constant 0 : index
    %8 = vector.load %arg3[%c0_3, %c0_4] : memref<256x128xf32, #tpu.memory_space<vmem>>, vector<256x128xf32>
    tpu.vector_store %arg3[%c0_3, %c0_4], %7 {strides = array<i32>} : memref<256x128xf32, #tpu.memory_space<vmem>>, vector<256x128xf32>,
    return
  }
  func.func @transform_0(%arg0: i32) -> (i32, i32) {
    %c0_i32 = arith.constant 0 : i32
    %c0_i32_0 = arith.constant 0 : i32
    return %arg0, %c0_i32 : i32, i32
  }
  func.func @transform_1(%arg0: i32) -> (i32, i32) {
    %c0_i32 = arith.constant 0 : i32
    %c0_i32_0 = arith.constant 0 : i32
    %c0_i32_1 = arith.constant 0 : i32
    return %c0_i32, %c0_i32_0 : i32, i32
  }
  func.func @transform_2(%arg0: i32) -> (i32, i32) {
    %c0_i32 = arith.constant 0 : i32
    %c0_i32_0 = arith.constant 0 : i32
    return %arg0, %c0_i32 : i32, i32
  }
}

module attributes {stable_mosaic.version = 11 : i64} {
  func.func @_embedding_onehot_kernel(%arg0: i32, %arg1: memref<256x1xi32, #tpu.memory_space<vmem>>, %arg2: memref<128x128xf32, #tpu.memory_space<vmem>>, %arg3: memref<256x128xf32, #tpu.memory_space<vmem>>) attributes {dimension_semantics = [#tpu.dimension_semantics<parallel>], iteration_bounds = array<i64: 1>, scalar_prefetch = 0 : i64, scratch_operands = 0 : i64, tpu.core_type = #tpu.core_type<tc>, window_params = [{transform_indices = @transform_0, window_bounds = array<i64: 256, 1>}, {pipeline_mode = #tpu.pipeline_mode<synchronous>, transform_indices = @transform_1, window_bounds = array<i64: 128, 128>}, {transform_indices = @transform_2, window_bounds = array<i64: 256, 128>}]} {
    %0 = tpu.iota {dimensions = array<i32: 1>} : vector<256x128xi32>
    %c0 = arith.constant 0 : index
    %c0_0 = arith.constant 0 : index
    %1 = vector.load %arg1[%c0, %c0_0] : memref<256x1xi32, #tpu.memory_space<vmem>>, vector<256x1xi32>
    %2 = vector.broadcast %1 : vector<256x1xi32> to vector<256x128xi32>
    %3 = arith.cmpi eq, %2, %0 : vector<256x128xi32>
    %4 = arith.extui %3 : vector<256x128xi1> to vector<256x128xi32>
    %5 = arith.sitofp %4 : vector<256x128xi32> to vector<256x128xf32>
    %c0_1 = arith.constant 0 : index
    %c0_2 = arith.constant 0 : index
    %6 = vector.load %arg2[%c0_1, %c0_2] : memref<128x128xf32, #tpu.memory_space<vmem>>, vector<128x128xf32>
    %cst = arith.constant dense<0.000000e+00> : vector<256x128xf32>
    %7 = tpu.matmul %5, %6, %cst {dimension_numbers = #tpu.dot_dimension_numbers<[1], [0], [0], [1], [0, 0, 1, 1], [], []>, precision = #tpu.contract_precision<fp32>} : vector<256x128xf32>, vector<128x128xf32>, vector<256x128xf32> -> vector<256x128xf32>
    %c0_3 = arith.constant 0 : index
    %c0_4 = arith.constant 0 : index
    %8 = vector.load %arg3[%c0_3, %c0_4] : memref<256x128xf32, #tpu.memory_space<vmem>>, vector<256x128xf32>
    tpu.vector_store %arg3[%c0_3, %c0_4], %7 {strides = array<i32>} : memref<256x128xf32, #tpu.memory_space<vmem>>, vector<256x128xf32>,
    return
  }
  func.func @transform_0(%arg0: i32) -> (i32, i32) {
    %c0_i32 = arith.constant 0 : i32
    %c0_i32_0 = arith.constant 0 : i32
    return %arg0, %c0_i32 : i32, i32
  }
  func.func @transform_1(%arg0: i32) -> (i32, i32) {
    %c0_i32 = arith.constant 0 : i32
    %c0_i32_0 = arith.constant 0 : i32
    %c0_i32_1 = arith.constant 0 : i32
    return %c0_i32, %c0_i32_0 : i32, i32
  }
  func.func @transform_2(%arg0: i32) -> (i32, i32) {
    %c0_i32 = arith.constant 0 : i32
    %c0_i32_0 = arith.constant 0 : i32
    return %arg0, %c0_i32 : i32, i32
  }
}

module attributes {stable_mosaic.version = 11 : i64} {
  func.func @_embedding_dma_kernel(%arg0: i32, %arg1: memref<128xi32, #tpu.memory_space<smem>>, %arg2: memref<50x128xf32, #tpu.memory_space<any>>, %arg3: memref<128x128xf32, #tpu.memory_space<vmem>>, %arg4: memref<16x!tpu.dma_semaphore, #tpu.memory_space<semaphore_mem>>) attributes {dimension_semantics = [#tpu.dimension_semantics<parallel>], iteration_bounds = array<i64: 1>, scalar_prefetch = 1 : i64, scratch_operands = 1 : i64, tpu.core_type = #tpu.core_type<tc>, window_params = [{}, {transform_indices = @transform_1, window_bounds = array<i64: 128, 128>}]} {
    %c128_i32 = arith.constant 128 : i32
    %0 = arith.muli %arg0, %c128_i32 : i32
    %c0_i32 = arith.constant 0 : i32
    %c16_i32 = arith.constant 16 : i32
    %1 = arith.addi %c0_i32, %c16_i32 : i32
    %c1_i32 = arith.constant 1 : i32
    scf.for %arg5 = %c0_i32 to %1 step %c1_i32  : i32 {
      %c1_i32_5 = arith.constant 1 : i32
      %3 = arith.muli %arg5, %c1_i32_5 : i32
      %c0_i32_6 = arith.constant 0 : i32
      %4 = arith.addi %c0_i32_6, %3 : i32
      %5 = arith.addi %0, %4 : i32
      %6 = arith.index_cast %5 : i32 to index
      %7 = memref.load %arg1[%6] : memref<128xi32, #tpu.memory_space<smem>>
      %c16_i32_7 = arith.constant 16 : i32
      %c0_i32_8 = arith.constant 0 : i32
      %8 = arith.cmpi eq, %c16_i32_7, %c0_i32_8 : i32
      %c1_i32_9 = arith.constant 1 : i32
      %9 = arith.select %8, %c1_i32_9, %c16_i32_7 : i32
      %10 = arith.remsi %4, %9 : i32
      %c0_i32_10 = arith.constant 0 : i32
      %11 = arith.cmpi ne, %10, %c0_i32_10 : i32
      %c0_i32_11 = arith.constant 0 : i32
      %12 = arith.cmpi slt, %10, %c0_i32_11 : i32
      %c0_i32_12 = arith.constant 0 : i32
      %13 = arith.cmpi slt, %9, %c0_i32_12 : i32
      %14 = arith.xori %12, %13 : i1
      %15 = arith.andi %14, %11 : i1
      %16 = arith.addi %10, %9 : i32
      %17 = arith.select %15, %16, %10 : i32
      %c0_i32_13 = arith.constant 0 : i32
      %18 = tpu.memref_slice %arg2[%7, %c0_i32_13] : memref<50x128xf32, #tpu.memory_space<any>> -> memref<1x128xf32, #tpu.memory_space<any>>
      %19 = tpu.memref_squeeze %18 : memref<1x128xf32, #tpu.memory_space<any>> -> memref<128xf32, #tpu.memory_space<any>>
      %c0_i32_14 = arith.constant 0 : i32
      %20 = tpu.memref_slice %arg3[%4, %c0_i32_14] : memref<128x128xf32, #tpu.memory_space<vmem>> -> memref<1x128xf32, #tpu.memory_space<vmem>>
      %21 = tpu.memref_squeeze %20 : memref<1x128xf32, #tpu.memory_space<vmem>> -> memref<128xf32, #tpu.memory_space<vmem>>
      %22 = tpu.memref_slice %arg4[%17] : memref<16x!tpu.dma_semaphore, #tpu.memory_space<semaphore_mem>> -> memref<1x!tpu.dma_semaphore, #tpu.memory_space<semaphore_mem>>
      %23 = tpu.memref_squeeze %22 : memref<1x!tpu.dma_semaphore, #tpu.memory_space<semaphore_mem>> -> memref<!tpu.dma_semaphore, #tpu.memory_space<semaphore_mem>>
      tpu.enqueue_dma source(%19 : memref<128xf32, #tpu.memory_space<any>>) target(%21 : memref<128xf32, #tpu.memory_space<vmem>>) target_semaphore(%23 : memref<!tpu.dma_semaphore, #tpu.memory_space<semaphore_mem>>)
    }
    %c16_i32_0 = arith.constant 16 : i32
    %c0_i32_1 = arith.constant 0 : i32
    %c128_i32_2 = arith.constant 128 : i32
    %2 = arith.addi %c0_i32_1, %c128_i32_2 : i32
    %c1_i32_3 = arith.constant 1 : i32
    scf.for %arg5 = %c0_i32_1 to %2 step %c1_i32_3  : i32 {
      %c1_i32_5 = arith.constant 1 : i32
      %3 = arith.muli %arg5, %c1_i32_5 : i32
      %c0_i32_6 = arith.constant 0 : i32
      %4 = arith.addi %c0_i32_6, %3 : i32
      %c16_i32_7 = arith.constant 16 : i32
      %5 = arith.addi %4, %c16_i32_7 : i32
      %c127_i32 = arith.constant 127 : i32
      %6 = arith.minsi %5, %c127_i32 : i32
      %7 = arith.addi %0, %6 : i32
      %8 = arith.index_cast %7 : i32 to index
      %9 = memref.load %arg1[%8] : memref<128xi32, #tpu.memory_space<smem>>
      %c16_i32_8 = arith.constant 16 : i32
      %c0_i32_9 = arith.constant 0 : i32
      %10 = arith.cmpi eq, %c16_i32_8, %c0_i32_9 : i32
      %c1_i32_10 = arith.constant 1 : i32
      %11 = arith.select %10, %c1_i32_10, %c16_i32_8 : i32
      %12 = arith.remsi %4, %11 : i32
      %c0_i32_11 = arith.constant 0 : i32
      %13 = arith.cmpi ne, %12, %c0_i32_11 : i32
      %c0_i32_12 = arith.constant 0 : i32
      %14 = arith.cmpi slt, %12, %c0_i32_12 : i32
      %c0_i32_13 = arith.constant 0 : i32
      %15 = arith.cmpi slt, %11, %c0_i32_13 : i32
      %16 = arith.xori %14, %15 : i1
      %17 = arith.andi %16, %13 : i1
      %18 = arith.addi %12, %11 : i32
      %19 = arith.select %17, %18, %12 : i32
      %c0_i32_14 = arith.constant 0 : i32
      %c0_i32_15 = arith.constant 0 : i32
      %20 = tpu.memref_slice %arg2[%c0_i32_14, %c0_i32_15] : memref<50x128xf32, #tpu.memory_space<any>> -> memref<1x128xf32, #tpu.memory_space<any>>
      %21 = tpu.memref_squeeze %20 : memref<1x128xf32, #tpu.memory_space<any>> -> memref<128xf32, #tpu.memory_space<any>>
      %c0_i32_16 = arith.constant 0 : i32
      %22 = tpu.memref_slice %arg3[%4, %c0_i32_16] : memref<128x128xf32, #tpu.memory_space<vmem>> -> memref<1x128xf32, #tpu.memory_space<vmem>>
      %23 = tpu.memref_squeeze %22 : memref<1x128xf32, #tpu.memory_space<vmem>> -> memref<128xf32, #tpu.memory_space<vmem>>
      %24 = tpu.memref_slice %arg4[%19] : memref<16x!tpu.dma_semaphore, #tpu.memory_space<semaphore_mem>> -> memref<1x!tpu.dma_semaphore, #tpu.memory_space<semaphore_mem>>
      %25 = tpu.memref_squeeze %24 : memref<1x!tpu.dma_semaphore, #tpu.memory_space<semaphore_mem>> -> memref<!tpu.dma_semaphore, #tpu.memory_space<semaphore_mem>>
      tpu.wait_dma2 semaphore(%25 : memref<!tpu.dma_semaphore, #tpu.memory_space<semaphore_mem>>) src(%21 : memref<128xf32, #tpu.memory_space<any>>) dst(%23 : memref<128xf32, #tpu.memory_space<vmem>>)
      %c16_i32_17 = arith.constant 16 : i32
      %26 = arith.addi %4, %c16_i32_17 : i32
      %c128_i32_18 = arith.constant 128 : i32
      %27 = arith.cmpi slt, %26, %c128_i32_18 : i32
      %28 = arith.extui %27 : i1 to i32
      %c0_i32_19 = arith.constant 0 : i32
      %29 = arith.cmpi ne, %28, %c0_i32_19 : i32
      scf.if %29 {
        %c16_i32_20 = arith.constant 16 : i32
        %30 = arith.addi %4, %c16_i32_20 : i32
        %c16_i32_21 = arith.constant 16 : i32
        %c0_i32_22 = arith.constant 0 : i32
        %31 = arith.cmpi eq, %c16_i32_21, %c0_i32_22 : i32
        %c1_i32_23 = arith.constant 1 : i32
        %32 = arith.select %31, %c1_i32_23, %c16_i32_21 : i32
        %33 = arith.remsi %30, %32 : i32
        %c0_i32_24 = arith.constant 0 : i32
        %34 = arith.cmpi ne, %33, %c0_i32_24 : i32
        %c0_i32_25 = arith.constant 0 : i32
        %35 = arith.cmpi slt, %33, %c0_i32_25 : i32
        %c0_i32_26 = arith.constant 0 : i32
        %36 = arith.cmpi slt, %32, %c0_i32_26 : i32
        %37 = arith.xori %35, %36 : i1
        %38 = arith.andi %37, %34 : i1
        %39 = arith.addi %33, %32 : i32
        %40 = arith.select %38, %39, %33 : i32
        %c0_i32_27 = arith.constant 0 : i32
        %41 = tpu.memref_slice %arg2[%9, %c0_i32_27] : memref<50x128xf32, #tpu.memory_space<any>> -> memref<1x128xf32, #tpu.memory_space<any>>
        %42 = tpu.memref_squeeze %41 : memref<1x128xf32, #tpu.memory_space<any>> -> memref<128xf32, #tpu.memory_space<any>>
        %c0_i32_28 = arith.constant 0 : i32
        %43 = tpu.memref_slice %arg3[%30, %c0_i32_28] : memref<128x128xf32, #tpu.memory_space<vmem>> -> memref<1x128xf32, #tpu.memory_space<vmem>>
        %44 = tpu.memref_squeeze %43 : memref<1x128xf32, #tpu.memory_space<vmem>> -> memref<128xf32, #tpu.memory_space<vmem>>
        %45 = tpu.memref_slice %arg4[%40] : memref<16x!tpu.dma_semaphore, #tpu.memory_space<semaphore_mem>> -> memref<1x!tpu.dma_semaphore, #tpu.memory_space<semaphore_mem>>
        %46 = tpu.memref_squeeze %45 : memref<1x!tpu.dma_semaphore, #tpu.memory_space<semaphore_mem>> -> memref<!tpu.dma_semaphore, #tpu.memory_space<semaphore_mem>>
        tpu.enqueue_dma source(%42 : memref<128xf32, #tpu.memory_space<any>>) target(%44 : memref<128xf32, #tpu.memory_space<vmem>>) target_semaphore(%46 : memref<!tpu.dma_semaphore, #tpu.memory_space<semaphore_mem>>)
      } else {
      }
    }
    %c128_i32_4 = arith.constant 128 : i32
    return
  }
  func.func @transform_1(%arg0: i32, %arg1: memref<128xi32, #tpu.memory_space<smem>>) -> (i32, i32) {
    %c0_i32 = arith.constant 0 : i32
    %c0_i32_0 = arith.constant 0 : i32
    return %arg0, %c0_i32 : i32, i32
  }
}

</mosaic_0001>

<llo_original>
// kernel: tpu_custom_call.1
$region0: #{tpu_custom_call.1}
  #allocation0 [shape = 'u32[]', space=smem, size = 0x4, offset = 0x4, fixed_abs, tag = 'smem constant byte address 0x4 - core index']
  #allocation1 [shape = 'u32[72,128]{1,0:T(1,128)}', space=vmem, size = 0x9000, scoped, tag = 'internal scratch']
  %s0 = inlined_call_operand.vmem [shape: s32[256,1], index: 0, kind: input, shape index: {}]
  %s1 = inlined_call_operand.vmem [shape: f32[128,128], index: 1, kind: input, shape index: {}]
  %s2 = inlined_call_operand.hbm [shape: f32[256,128], index: 2, kind: output, shape index: {}]
  %s3 = sld [smem:[#allocation0]]
  $region18: #{tpu_custom_call.1} parent=0
    _
  %s5 = ssub.s32 1, %s3
  %s6 = scalar_select 0, %s5, %s3
  $region1: #{tpu_custom_call.1} parent=0
    #allocation2 [shape = 'u8[131072]{0}', space=vmem, size = 0x20000, scoped, tag = 'output window, operand 0, single buffered']
    #allocation3 [shape = 's32[1]{0}', space=sflag, size = 0x4, scoped, tag = 'scoped memory for tpu_custom_call.1']
    %7 = vsyncpa [#allocation3], 0
    // Predicated region
    $region2: #{tpu_custom_call.1} parent=1 // pred_check
      _
    $region3: #{tpu_custom_call.1} parent=1 // pred_check_branch
      %9 = sbr.rel (0) target = $region5
    $region4: #{tpu_custom_call.1} parent=1 // pred_region
      _
    $region5: #{tpu_custom_call.1} parent=1 // pred_fallthru
      _
    // Predicated region
    $region6: #{tpu_custom_call.1} parent=1 // pred_check
      _
    $region7: #{tpu_custom_call.1} parent=1 // pred_check_branch
      %11 = sbr.rel (0) target = $region9
    $region8: #{tpu_custom_call.1} parent=1 // pred_region
      _
    $region9: #{tpu_custom_call.1} parent=1 // pred_fallthru
      _
    %v12 = vlaneseq
    %v13 = vand.u32 %v12, 127
    %v14 = vld [vmem:[%s0] sm:$0xff]
    %v15 = vld [vmem:[%s0 + $0x8] sm:$0xff]
    %v16 = vld [vmem:[%s0 + $0x10] sm:$0xff]
    %v17 = vld [vmem:[%s0 + $0x18] sm:$0xff]
    %v18 = vld [vmem:[%s0 + $0x20] sm:$0xff]
    %v19 = vld [vmem:[%s0 + $0x28] sm:$0xff]
    %v20 = vld [vmem:[%s0 + $0x30] sm:$0xff]
    %v21 = vld [vmem:[%s0 + $0x38] sm:$0xff]
    %v22 = vld [vmem:[%s0 + $0x40] sm:$0xff]
    %v23 = vld [vmem:[%s0 + $0x48] sm:$0xff]
    %v24 = vld [vmem:[%s0 + $0x50] sm:$0xff]
    %v25 = vld [vmem:[%s0 + $0x58] sm:$0xff]
    %v26 = vld [vmem:[%s0 + $0x60] sm:$0xff]
    %v27 = vld [vmem:[%s0 + $0x68] sm:$0xff]
    %v28 = vld [vmem:[%s0 + $0x70] sm:$0xff]
    %v29 = vld [vmem:[%s0 + $0x78] sm:$0xff]
    %v30 = vld [vmem:[%s0 + $0x80] sm:$0xff]
    %v31 = vld [vmem:[%s0 + $0x88] sm:$0xff]
    %v32 = vld [vmem:[%s0 + $0x90] sm:$0xff]
    %v33 = vld [vmem:[%s0 + $0x98] sm:$0xff]
    %v34 = vld [vmem:[%s0 + $0xa0] sm:$0xff]
    %v35 = vld [vmem:[%s0 + $0xa8] sm:$0xff]
    %v36 = vld [vmem:[%s0 + $0xb0] sm:$0xff]
    %v37 = vld [vmem:[%s0 + $0xb8] sm:$0xff]
    %v38 = vld [vmem:[%s0 + $0xc0] sm:$0xff]
    %v39 = vld [vmem:[%s0 + $0xc8] sm:$0xff]
    %v40 = vld [vmem:[%s0 + $0xd0] sm:$0xff]
    %v41 = vld [vmem:[%s0 + $0xd8] sm:$0xff]
    %v42 = vld [vmem:[%s0 + $0xe0] sm:$0xff]
    %v43 = vld [vmem:[%s0 + $0xe8] sm:$0xff]
    %v44 = vld [vmem:[%s0 + $0xf0] sm:$0xff]
    %v45 = vld [vmem:[%s0 + $0xf8] sm:$0xff]
    %46 = vset.pattern.permute.xlu0 0
    %47 = vperm.xlu0 %46, %v14
    %v48 = vpop.permute.xlu0 %47
    %49 = vset.pattern.permute.xlu0 0
    %50 = vperm.xlu0 %49, %v15
    %v51 = vpop.permute.xlu0 %50
    %52 = vset.pattern.permute.xlu0 0
    %53 = vperm.xlu0 %52, %v16
    %v54 = vpop.permute.xlu0 %53
    %55 = vset.pattern.permute.xlu0 0
    %56 = vperm.xlu0 %55, %v17
    %v57 = vpop.permute.xlu0 %56
    %58 = vset.pattern.permute.xlu0 0
    %59 = vperm.xlu0 %58, %v18
    %v60 = vpop.permute.xlu0 %59
    %61 = vset.pattern.permute.xlu0 0
    %62 = vperm.xlu0 %61, %v19
    %v63 = vpop.permute.xlu0 %62
    %64 = vset.pattern.permute.xlu0 0
    %65 = vperm.xlu0 %64, %v20
    %v66 = vpop.permute.xlu0 %65
    %67 = vset.pattern.permute.xlu0 0
    %68 = vperm.xlu0 %67, %v21
    %v69 = vpop.permute.xlu0 %68
    %70 = vset.pattern.permute.xlu0 0
    %71 = vperm.xlu0 %70, %v22
    %v72 = vpop.permute.xlu0 %71
    %73 = vset.pattern.permute.xlu0 0
    %74 = vperm.xlu0 %73, %v23
    %v75 = vpop.permute.xlu0 %74
    %76 = vset.pattern.permute.xlu0 0
    %77 = vperm.xlu0 %76, %v24
    %v78 = vpop.permute.xlu0 %77
    %79 = vset.pattern.permute.xlu0 0
    %80 = vperm.xlu0 %79, %v25
    %v81 = vpop.permute.xlu0 %80
    %82 = vset.pattern.permute.xlu0 0
    %83 = vperm.xlu0 %82, %v26
    %v84 = vpop.permute.xlu0 %83
    %85 = vset.pattern.permute.xlu0 0
    %86 = vperm.xlu0 %85, %v27
    %v87 = vpop.permute.xlu0 %86
    %88 = vset.pattern.permute.xlu0 0
    %89 = vperm.xlu0 %88, %v28
    %v90 = vpop.permute.xlu0 %89
    %91 = vset.pattern.permute.xlu0 0
    %92 = vperm.xlu0 %91, %v29
    %v93 = vpop.permute.xlu0 %92
    %94 = vset.pattern.permute.xlu0 0
    %95 = vperm.xlu0 %94, %v30
    %v96 = vpop.permute.xlu0 %95
    %97 = vset.pattern.permute.xlu0 0
    %98 = vperm.xlu0 %97, %v31
    %v99 = vpop.permute.xlu0 %98
    %100 = vset.pattern.permute.xlu0 0
    %101 = vperm.xlu0 %100, %v32
    %v102 = vpop.permute.xlu0 %101
    %103 = vset.pattern.permute.xlu0 0
    %104 = vperm.xlu0 %103, %v33
    %v105 = vpop.permute.xlu0 %104
    %106 = vset.pattern.permute.xlu0 0
    %107 = vperm.xlu0 %106, %v34
    %v108 = vpop.permute.xlu0 %107
    %109 = vset.pattern.permute.xlu0 0
    %110 = vperm.xlu0 %109, %v35
    %v111 = vpop.permute.xlu0 %110
    %112 = vset.pattern.permute.xlu0 0
    %113 = vperm.xlu0 %112, %v36
    %v114 = vpop.permute.xlu0 %113
    %115 = vset.pattern.permute.xlu0 0
    %116 = vperm.xlu0 %115, %v37
    %v117 = vpop.permute.xlu0 %116
    %118 = vset.pattern.permute.xlu0 0
    %119 = vperm.xlu0 %118, %v38
    %v120 = vpop.permute.xlu0 %119
    %121 = vset.pattern.permute.xlu0 0
    %122 = vperm.xlu0 %121, %v39
    %v123 = vpop.permute.xlu0 %122
    %124 = vset.pattern.permute.xlu0 0
    %125 = vperm.xlu0 %124, %v40
    %v126 = vpop.permute.xlu0 %125
    %127 = vset.pattern.permute.xlu0 0
    %128 = vperm.xlu0 %127, %v41
    %v129 = vpop.permute.xlu0 %128
    %130 = vset.pattern.permute.xlu0 0
    %131 = vperm.xlu0 %130, %v42
    %v132 = vpop.permute.xlu0 %131
    %133 = vset.pattern.permute.xlu0 0
    %134 = vperm.xlu0 %133, %v43
    %v135 = vpop.permute.xlu0 %134
    %136 = vset.pattern.permute.xlu0 0
    %137 = vperm.xlu0 %136, %v44
    %v138 = vpop.permute.xlu0 %137
    %139 = vset.pattern.permute.xlu0 0
    %140 = vperm.xlu0 %139, %v45
    %v141 = vpop.permute.xlu0 %140
    %vm142 = vcmp.eq.s32.totalorder %v48, %v13
    %vm143 = vcmp.eq.s32.totalorder %v51, %v13
    %vm144 = vcmp.eq.s32.totalorder %v54, %v13
    %vm145 = vcmp.eq.s32.totalorder %v57, %v13
    %vm146 = vcmp.eq.s32.totalorder %v60, %v13
    %vm147 = vcmp.eq.s32.totalorder %v63, %v13
    %vm148 = vcmp.eq.s32.totalorder %v66, %v13
    %vm149 = vcmp.eq.s32.totalorder %v69, %v13
    %vm150 = vcmp.eq.s32.totalorder %v72, %v13
    %vm151 = vcmp.eq.s32.totalorder %v75, %v13
    %vm152 = vcmp.eq.s32.totalorder %v78, %v13
    %vm153 = vcmp.eq.s32.totalorder %v81, %v13
    %vm154 = vcmp.eq.s32.totalorder %v84, %v13
    %vm155 = vcmp.eq.s32.totalorder %v87, %v13
    %vm156 = vcmp.eq.s32.totalorder %v90, %v13
    %vm157 = vcmp.eq.s32.totalorder %v93, %v13
    %vm158 = vcmp.eq.s32.totalorder %v96, %v13
    %vm159 = vcmp.eq.s32.totalorder %v99, %v13
    %vm160 = vcmp.eq.s32.totalorder %v102, %v13
    %vm161 = vcmp.eq.s32.totalorder %v105, %v13
    %vm162 = vcmp.eq.s32.totalorder %v108, %v13
    %vm163 = vcmp.eq.s32.totalorder %v111, %v13
    %vm164 = vcmp.eq.s32.totalorder %v114, %v13
    %vm165 = vcmp.eq.s32.totalorder %v117, %v13
    %vm166 = vcmp.eq.s32.totalorder %v120, %v13
    %vm167 = vcmp.eq.s32.totalorder %v123, %v13
    %vm168 = vcmp.eq.s32.totalorder %v126, %v13
    %vm169 = vcmp.eq.s32.totalorder %v129, %v13
    %vm170 = vcmp.eq.s32.totalorder %v132, %v13
    %vm171 = vcmp.eq.s32.totalorder %v135, %v13
    %vm172 = vcmp.eq.s32.totalorder %v138, %v13
    %vm173 = vcmp.eq.s32.totalorder %v141, %v13
    %v174 = vsel %vm142, 1, 0
    %v175 = vsel %vm143, 1, 0
    %v176 = vsel %vm144, 1, 0
    %v177 = vsel %vm145, 1, 0
    %v178 = vsel %vm146, 1, 0
    %v179 = vsel %vm147, 1, 0
    %v180 = vsel %vm148, 1, 0
    %v181 = vsel %vm149, 1, 0
    %v182 = vsel %vm150, 1, 0
    %v183 = vsel %vm151, 1, 0
    %v184 = vsel %vm152, 1, 0
    %v185 = vsel %vm153, 1, 0
    %v186 = vsel %vm154, 1, 0
    %v187 = vsel %vm155, 1, 0
    %v188 = vsel %vm156, 1, 0
    %v189 = vsel %vm157, 1, 0
    %v190 = vsel %vm158, 1, 0
    %v191 = vsel %vm159, 1, 0
    %v192 = vsel %vm160, 1, 0
    %v193 = vsel %vm161, 1, 0
    %v194 = vsel %vm162, 1, 0
    %v195 = vsel %vm163, 1, 0
    %v196 = vsel %vm164, 1, 0
    %v197 = vsel %vm165, 1, 0
    %v198 = vsel %vm166, 1, 0
    %v199 = vsel %vm167, 1, 0
    %v200 = vsel %vm168, 1, 0
    %v201 = vsel %vm169, 1, 0
    %v202 = vsel %vm170, 1, 0
    %v203 = vsel %vm171, 1, 0
    %v204 = vsel %vm172, 1, 0
    %v205 = vsel %vm173, 1, 0
    %v206 = vcvt.s32.f32 %v174
    %v207 = vcvt.s32.f32 %v175
    %v208 = vcvt.s32.f32 %v176
    %v209 = vcvt.s32.f32 %v177
    %v210 = vcvt.s32.f32 %v178
    %v211 = vcvt.s32.f32 %v179
    %v212 = vcvt.s32.f32 %v180
    %v213 = vcvt.s32.f32 %v181
    %v214 = vcvt.s32.f32 %v182
    %v215 = vcvt.s32.f32 %v183
    %v216 = vcvt.s32.f32 %v184
    %v217 = vcvt.s32.f32 %v185
    %v218 = vcvt.s32.f32 %v186
    %v219 = vcvt.s32.f32 %v187
    %v220 = vcvt.s32.f32 %v188
    %v221 = vcvt.s32.f32 %v189
    %v222 = vcvt.s32.f32 %v190
    %v223 = vcvt.s32.f32 %v191
    %v224 = vcvt.s32.f32 %v192
    %v225 = vcvt.s32.f32 %v193
    %v226 = vcvt.s32.f32 %v194
    %v227 = vcvt.s32.f32 %v195
    %v228 = vcvt.s32.f32 %v196
    %v229 = vcvt.s32.f32 %v197
    %v230 = vcvt.s32.f32 %v198
    %v231 = vcvt.s32.f32 %v199
    %v232 = vcvt.s32.f32 %v200
    %v233 = vcvt.s32.f32 %v201
    %v234 = vcvt.s32.f32 %v202
    %v235 = vcvt.s32.f32 %v203
    %v236 = vcvt.s32.f32 %v204
    %v237 = vcvt.s32.f32 %v205
    %v238 = vld [vmem:[%s1] sm:$0xff]
    %v239 = vld [vmem:[%s1 + $0x8] sm:$0xff]
    %v240 = vld [vmem:[%s1 + $0x10] sm:$0xff]
    %v241 = vld [vmem:[%s1 + $0x18] sm:$0xff]
    %v242 = vld [vmem:[%s1 + $0x20] sm:$0xff]
    %v243 = vld [vmem:[%s1 + $0x28] sm:$0xff]
    %v244 = vld [vmem:[%s1 + $0x30] sm:$0xff]
    %v245 = vld [vmem:[%s1 + $0x38] sm:$0xff]
    %v246 = vld [vmem:[%s1 + $0x40] sm:$0xff]
    %v247 = vld [vmem:[%s1 + $0x48] sm:$0xff]
    %v248 = vld [vmem:[%s1 + $0x50] sm:$0xff]
    %v249 = vld [vmem:[%s1 + $0x58] sm:$0xff]
    %v250 = vld [vmem:[%s1 + $0x60] sm:$0xff]
    %v251 = vld [vmem:[%s1 + $0x68] sm:$0xff]
    %v252 = vld [vmem:[%s1 + $0x70] sm:$0xff]
    %v253 = vld [vmem:[%s1 + $0x78] sm:$0xff]
    %v254 = vand.u32 %v253, 4294901760
    %255 = vmatpush.msra.mxu0 %v254
    %v256 = vand.u32 %v252, 4294901760
    %257 = vmatpush.msra.mxu0 %v256
    %v258 = vand.u32 %v251, 4294901760
    %259 = vmatpush.msra.mxu0 %v258
    %v260 = vand.u32 %v250, 4294901760
    %261 = vmatpush.msra.mxu0 %v260
    %v262 = vand.u32 %v249, 4294901760
    %263 = vmatpush.msra.mxu0 %v262
    %v264 = vand.u32 %v248, 4294901760
    %265 = vmatpush.msra.mxu0 %v264
    %v266 = vand.u32 %v247, 4294901760
    %267 = vmatpush.msra.mxu0 %v266
    %v268 = vand.u32 %v246, 4294901760
    %269 = vmatpush.msra.mxu0 %v268
    %v270 = vand.u32 %v245, 4294901760
    %271 = vmatpush.msra.mxu0 %v270
    %v272 = vand.u32 %v244, 4294901760
    %273 = vmatpush.msra.mxu0 %v272
    %v274 = vand.u32 %v243, 4294901760
    %275 = vmatpush.msra.mxu0 %v274
    %v276 = vand.u32 %v242, 4294901760
    %277 = vmatpush.msra.mxu0 %v276
    %v278 = vand.u32 %v241, 4294901760
    %279 = vmatpush.msra.mxu0 %v278
    %v280 = vand.u32 %v240, 4294901760
    %281 = vmatpush.msra.mxu0 %v280
    %v282 = vand.u32 %v239, 4294901760
    %283 = vmatpush.msra.mxu0 %v282
    %v284 = vand.u32 %v238, 4294901760
    %285 = vmatpush.msra.mxu0 %v284
    %v286 = vand.u32 %v206, 4294901760
    %v287 = vsub.f32 %v206, %v286
    %v288 = vand.u32 %v287, 4294901760
    %v289 = vsub.f32 %v287, %v288
    %v290 = vand.u32 %v289, 4294901760
    %291 = vmatmul.f32.gmra.mxu0 %v290
    %v292 = vpop.f32.mrf.mxu0
    %v293 = vadd.f32 0.0, %v292
    %v294 = vand.u32 %v207, 4294901760
    %v295 = vsub.f32 %v207, %v294
    %v296 = vand.u32 %v295, 4294901760
    %v297 = vsub.f32 %v295, %v296
    %v298 = vand.u32 %v297, 4294901760
    %299 = vmatmul.f32.gmra.mxu0 %v298
    %v300 = vpop.f32.mrf.mxu0
    %v301 = vadd.f32 0.0, %v300
    %v302 = vand.u32 %v208, 4294901760
    %v303 = vsub.f32 %v208, %v302
    %v304 = vand.u32 %v303, 4294901760
    %v305 = vsub.f32 %v303, %v304
    %v306 = vand.u32 %v305, 4294901760
    %307 = vmatmul.f32.gmra.mxu0 %v306
    %v308 = vpop.f32.mrf.mxu0
    %v309 = vadd.f32 0.0, %v308
    %v310 = vand.u32 %v209, 4294901760
    %v311 = vsub.f32 %v209, %v310
    %v312 = vand.u32 %v311, 4294901760
    %v313 = vsub.f32 %v311, %v312
    %v314 = vand.u32 %v313, 4294901760
    %315 = vmatmul.f32.gmra.mxu0 %v314
    %v316 = vpop.f32.mrf.mxu0
    %v317 = vadd.f32 0.0, %v316
    %v318 = vand.u32 %v210, 4294901760
    %v319 = vsub.f32 %v210, %v318
    %v320 = vand.u32 %v319, 4294901760
    %v321 = vsub.f32 %v319, %v320
    %v322 = vand.u32 %v321, 4294901760
    %323 = vmatmul.f32.gmra.mxu0 %v322
    %v324 = vpop.f32.mrf.mxu0
    %v325 = vadd.f32 0.0, %v324
    %v326 = vand.u32 %v211, 4294901760
    %v327 = vsub.f32 %v211, %v326
    %v328 = vand.u32 %v327, 4294901760
    %v329 = vsub.f32 %v327, %v328
    %v330 = vand.u32 %v329, 4294901760
    %331 = vmatmul.f32.gmra.mxu0 %v330
    %v332 = vpop.f32.mrf.mxu0
    %v333 = vadd.f32 0.0, %v332
    %v334 = vand.u32 %v212, 4294901760
    %v335 = vsub.f32 %v212, %v334
    %v336 = vand.u32 %v335, 4294901760
    %v337 = vsub.f32 %v335, %v336
    %v338 = vand.u32 %v337, 4294901760
    %339 = vmatmul.f32.gmra.mxu0 %v338
    %v340 = vpop.f32.mrf.mxu0
    %v341 = vadd.f32 0.0, %v340
    %v342 = vand.u32 %v213, 4294901760
    %v343 = vsub.f32 %v213, %v342
    %v344 = vand.u32 %v343, 4294901760
    %v345 = vsub.f32 %v343, %v344
    %v346 = vand.u32 %v345, 4294901760
    %347 = vmatmul.f32.gmra.mxu0 %v346
    %v348 = vpop.f32.mrf.mxu0
    %v349 = vadd.f32 0.0, %v348
    %v350 = vand.u32 %v214, 4294901760
    %v351 = vsub.f32 %v214, %v350
    %v352 = vand.u32 %v351, 4294901760
    %v353 = vsub.f32 %v351, %v352
    %v354 = vand.u32 %v353, 4294901760
    %355 = vmatmul.f32.gmra.mxu0 %v354
    %v356 = vpop.f32.mrf.mxu0
    %v357 = vadd.f32 0.0, %v356
    %v358 = vand.u32 %v215, 4294901760
    %v359 = vsub.f32 %v215, %v358
    %v360 = vand.u32 %v359, 4294901760
    %v361 = vsub.f32 %v359, %v360
    %v362 = vand.u32 %v361, 4294901760
    %363 = vmatmul.f32.gmra.mxu0 %v362
    %v364 = vpop.f32.mrf.mxu0
    %v365 = vadd.f32 0.0, %v364
    %v366 = vand.u32 %v216, 4294901760
    %v367 = vsub.f32 %v216, %v366
    %v368 = vand.u32 %v367, 4294901760
    %v369 = vsub.f32 %v367, %v368
    %v370 = vand.u32 %v369, 4294901760
    %371 = vmatmul.f32.gmra.mxu0 %v370
    %v372 = vpop.f32.mrf.mxu0
    %v373 = vadd.f32 0.0, %v372
    %v374 = vand.u32 %v217, 4294901760
    %v375 = vsub.f32 %v217, %v374
    %v376 = vand.u32 %v375, 4294901760
    %v377 = vsub.f32 %v375, %v376
    %v378 = vand.u32 %v377, 4294901760
    %379 = vmatmul.f32.gmra.mxu0 %v378
    %v380 = vpop.f32.mrf.mxu0
    %v381 = vadd.f32 0.0, %v380
    %v382 = vand.u32 %v218, 4294901760
    %v383 = vsub.f32 %v218, %v382
    %v384 = vand.u32 %v383, 4294901760
    %v385 = vsub.f32 %v383, %v384
    %v386 = vand.u32 %v385, 4294901760
    %387 = vmatmul.f32.gmra.mxu0 %v386
    %v388 = vpop.f32.mrf.mxu0
    %v389 = vadd.f32 0.0, %v388
    %v390 = vand.u32 %v219, 4294901760
    %v391 = vsub.f32 %v219, %v390
    %v392 = vand.u32 %v391, 4294901760
    %v393 = vsub.f32 %v391, %v392
    %v394 = vand.u32 %v393, 4294901760
    %395 = vmatmul.f32.gmra.mxu0 %v394
    %v396 = vpop.f32.mrf.mxu0
    %v397 = vadd.f32 0.0, %v396
    %v398 = vand.u32 %v220, 4294901760
    %v399 = vsub.f32 %v220, %v398
    %v400 = vand.u32 %v399, 4294901760
    %v401 = vsub.f32 %v399, %v400
    %v402 = vand.u32 %v401, 4294901760
    %403 = vmatmul.f32.gmra.mxu0 %v402
    %v404 = vpop.f32.mrf.mxu0
    %v405 = vadd.f32 0.0, %v404
    %v406 = vand.u32 %v221, 4294901760
    %v407 = vsub.f32 %v221, %v406
    %v408 = vand.u32 %v407, 4294901760
    %v409 = vsub.f32 %v407, %v408
    %v410 = vand.u32 %v409, 4294901760
    %411 = vmatmul.f32.gmra.mxu0 %v410
    %v412 = vpop.f32.mrf.mxu0
    %v413 = vadd.f32 0.0, %v412
    %v414 = vand.u32 %v222, 4294901760
    %v415 = vsub.f32 %v222, %v414
    %v416 = vand.u32 %v415, 4294901760
    %v417 = vsub.f32 %v415, %v416
    %v418 = vand.u32 %v417, 4294901760
    %419 = vmatmul.f32.gmra.mxu0 %v418
    %v420 = vpop.f32.mrf.mxu0
    %v421 = vadd.f32 0.0, %v420
    %v422 = vand.u32 %v223, 4294901760
    %v423 = vsub.f32 %v223, %v422
    %v424 = vand.u32 %v423, 4294901760
    %v425 = vsub.f32 %v423, %v424
    %v426 = vand.u32 %v425, 4294901760
    %427 = vmatmul.f32.gmra.mxu0 %v426
    %v428 = vpop.f32.mrf.mxu0
    %v429 = vadd.f32 0.0, %v428
    %v430 = vand.u32 %v224, 4294901760
    %v431 = vsub.f32 %v224, %v430
    %v432 = vand.u32 %v431, 4294901760
    %v433 = vsub.f32 %v431, %v432
    %v434 = vand.u32 %v433, 4294901760
    %435 = vmatmul.f32.gmra.mxu0 %v434
    %v436 = vpop.f32.mrf.mxu0
    %v437 = vadd.f32 0.0, %v436
    %v438 = vand.u32 %v225, 4294901760
    %v439 = vsub.f32 %v225, %v438
    %v440 = vand.u32 %v439, 4294901760
    %v441 = vsub.f32 %v439, %v440
    %v442 = vand.u32 %v441, 4294901760
    %443 = vmatmul.f32.gmra.mxu0 %v442
    %v444 = vpop.f32.mrf.mxu0
    %v445 = vadd.f32 0.0, %v444
    %v446 = vand.u32 %v226, 4294901760
    %v447 = vsub.f32 %v226, %v446
    %v448 = vand.u32 %v447, 4294901760
    %v449 = vsub.f32 %v447, %v448
    %v450 = vand.u32 %v449, 4294901760
    %451 = vmatmul.f32.gmra.mxu0 %v450
    %v452 = vpop.f32.mrf.mxu0
    %v453 = vadd.f32 0.0, %v452
    %v454 = vand.u32 %v227, 4294901760
    %v455 = vsub.f32 %v227, %v454
    %v456 = vand.u32 %v455, 4294901760
    %v457 = vsub.f32 %v455, %v456
    %v458 = vand.u32 %v457, 4294901760
    %459 = vmatmul.f32.gmra.mxu0 %v458
    %v460 = vpop.f32.mrf.mxu0
    %v461 = vadd.f32 0.0, %v460
    %v462 = vand.u32 %v228, 4294901760
    %v463 = vsub.f32 %v228, %v462
    %v464 = vand.u32 %v463, 4294901760
    %v465 = vsub.f32 %v463, %v464
    %v466 = vand.u32 %v465, 4294901760
    %467 = vmatmul.f32.gmra.mxu0 %v466
    %v468 = vpop.f32.mrf.mxu0
    %v469 = vadd.f32 0.0, %v468
    %v470 = vand.u32 %v229, 4294901760
    %v471 = vsub.f32 %v229, %v470
    %v472 = vand.u32 %v471, 4294901760
    %v473 = vsub.f32 %v471, %v472
    %v474 = vand.u32 %v473, 4294901760
    %475 = vmatmul.f32.gmra.mxu0 %v474
    %v476 = vpop.f32.mrf.mxu0
    %v477 = vadd.f32 0.0, %v476
    %v478 = vand.u32 %v230, 4294901760
    %v479 = vsub.f32 %v230, %v478
    %v480 = vand.u32 %v479, 4294901760
    %v481 = vsub.f32 %v479, %v480
    %v482 = vand.u32 %v481, 4294901760
    %483 = vmatmul.f32.gmra.mxu0 %v482
    %v484 = vpop.f32.mrf.mxu0
    %v485 = vadd.f32 0.0, %v484
    %v486 = vand.u32 %v231, 4294901760
    %v487 = vsub.f32 %v231, %v486
    %v488 = vand.u32 %v487, 4294901760
    %v489 = vsub.f32 %v487, %v488
    %v490 = vand.u32 %v489, 4294901760
    %491 = vmatmul.f32.gmra.mxu0 %v490
    %v492 = vpop.f32.mrf.mxu0
    %v493 = vadd.f32 0.0, %v492
    %v494 = vand.u32 %v232, 4294901760
    %v495 = vsub.f32 %v232, %v494
    %v496 = vand.u32 %v495, 4294901760
    %v497 = vsub.f32 %v495, %v496
    %v498 = vand.u32 %v497, 4294901760
    %499 = vmatmul.f32.gmra.mxu0 %v498
    %v500 = vpop.f32.mrf.mxu0
    %v501 = vadd.f32 0.0, %v500
    %v502 = vand.u32 %v233, 4294901760
    %v503 = vsub.f32 %v233, %v502
    %v504 = vand.u32 %v503, 4294901760
    %v505 = vsub.f32 %v503, %v504
    %v506 = vand.u32 %v505, 4294901760
    %507 = vmatmul.f32.gmra.mxu0 %v506
    %v508 = vpop.f32.mrf.mxu0
    %v509 = vadd.f32 0.0, %v508
    %v510 = vand.u32 %v234, 4294901760
    %v511 = vsub.f32 %v234, %v510
    %v512 = vand.u32 %v511, 4294901760
    %v513 = vsub.f32 %v511, %v512
    %v514 = vand.u32 %v513, 4294901760
    %515 = vmatmul.f32.gmra.mxu0 %v514
    %v516 = vpop.f32.mrf.mxu0
    %v517 = vadd.f32 0.0, %v516
    %v518 = vand.u32 %v235, 4294901760
    %v519 = vsub.f32 %v235, %v518
    %v520 = vand.u32 %v519, 4294901760
    %v521 = vsub.f32 %v519, %v520
    %v522 = vand.u32 %v521, 4294901760
    %523 = vmatmul.f32.gmra.mxu0 %v522
    %v524 = vpop.f32.mrf.mxu0
    %v525 = vadd.f32 0.0, %v524
    %v526 = vand.u32 %v236, 4294901760
    %v527 = vsub.f32 %v236, %v526
    %v528 = vand.u32 %v527, 4294901760
    %v529 = vsub.f32 %v527, %v528
    %v530 = vand.u32 %v529, 4294901760
    %531 = vmatmul.f32.gmra.mxu0 %v530
    %v532 = vpop.f32.mrf.mxu0
    %v533 = vadd.f32 0.0, %v532
    %v534 = vand.u32 %v237, 4294901760
    %v535 = vsub.f32 %v237, %v534
    %v536 = vand.u32 %v535, 4294901760
    %v537 = vsub.f32 %v535, %v536
    %v538 = vand.u32 %v537, 4294901760
    %539 = vmatmul.f32.gmra.mxu0 %v538
    %v540 = vpop.f32.mrf.mxu0
    %v541 = vadd.f32 0.0, %v540
    %542 = vdwg.mxu0
    %v543 = vand.u32 %v253, 4294901760
    %v544 = vsub.f32 %v253, %v543
    %v545 = vand.u32 %v544, 4294901760
    %v546 = vsub.f32 %v544, %v545
    %v547 = vand.u32 %v546, 4294901760
    %548 = vmatpush.msra.mxu0 %v547
    %v549 = vand.u32 %v252, 4294901760
    %v550 = vsub.f32 %v252, %v549
    %v551 = vand.u32 %v550, 4294901760
    %v552 = vsub.f32 %v550, %v551
    %v553 = vand.u32 %v552, 4294901760
    %554 = vmatpush.msra.mxu0 %v553
    %v555 = vand.u32 %v251, 4294901760
    %v556 = vsub.f32 %v251, %v555
    %v557 = vand.u32 %v556, 4294901760
    %v558 = vsub.f32 %v556, %v557
    %v559 = vand.u32 %v558, 4294901760
    %560 = vmatpush.msra.mxu0 %v559
    %v561 = vand.u32 %v250, 4294901760
    %v562 = vsub.f32 %v250, %v561
    %v563 = vand.u32 %v562, 4294901760
    %v564 = vsub.f32 %v562, %v563
    %v565 = vand.u32 %v564, 4294901760
    %566 = vmatpush.msra.mxu0 %v565
    %v567 = vand.u32 %v249, 4294901760
    %v568 = vsub.f32 %v249, %v567
    %v569 = vand.u32 %v568, 4294901760
    %v570 = vsub.f32 %v568, %v569
    %v571 = vand.u32 %v570, 4294901760
    %572 = vmatpush.msra.mxu0 %v571
    %v573 = vand.u32 %v248, 4294901760
    %v574 = vsub.f32 %v248, %v573
    %v575 = vand.u32 %v574, 4294901760
    %v576 = vsub.f32 %v574, %v575
    %v577 = vand.u32 %v576, 4294901760
    %578 = vmatpush.msra.mxu0 %v577
    %v579 = vand.u32 %v247, 4294901760
    %v580 = vsub.f32 %v247, %v579
    %v581 = vand.u32 %v580, 4294901760
    %v582 = vsub.f32 %v580, %v581
    %v583 = vand.u32 %v582, 4294901760
    %584 = vmatpush.msra.mxu0 %v583
    %v585 = vand.u32 %v246, 4294901760
    %v586 = vsub.f32 %v246, %v585
    %v587 = vand.u32 %v586, 4294901760
    %v588 = vsub.f32 %v586, %v587
    %v589 = vand.u32 %v588, 4294901760
    %590 = vmatpush.msra.mxu0 %v589
    %v591 = vand.u32 %v245, 4294901760
    %v592 = vsub.f32 %v245, %v591
    %v593 = vand.u32 %v592, 4294901760
    %v594 = vsub.f32 %v592, %v593
    %v595 = vand.u32 %v594, 4294901760
    %596 = vmatpush.msra.mxu0 %v595
    %v597 = vand.u32 %v244, 4294901760
    %v598 = vsub.f32 %v244, %v597
    %v599 = vand.u32 %v598, 4294901760
    %v600 = vsub.f32 %v598, %v599
    %v601 = vand.u32 %v600, 4294901760
    %602 = vmatpush.msra.mxu0 %v601
    %v603 = vand.u32 %v243, 4294901760
    %v604 = vsub.f32 %v243, %v603
    %v605 = vand.u32 %v604, 4294901760
    %v606 = vsub.f32 %v604, %v605
    %v607 = vand.u32 %v606, 4294901760
    %608 = vmatpush.msra.mxu0 %v607
    %v609 = vand.u32 %v242, 4294901760
    %v610 = vsub.f32 %v242, %v609
    %v611 = vand.u32 %v610, 4294901760
    %v612 = vsub.f32 %v610, %v611
    %v613 = vand.u32 %v612, 4294901760
    %614 = vmatpush.msra.mxu0 %v613
    %v615 = vand.u32 %v241, 4294901760
    %v616 = vsub.f32 %v241, %v615
    %v617 = vand.u32 %v616, 4294901760
    %v618 = vsub.f32 %v616, %v617
    %v619 = vand.u32 %v618, 4294901760
    %620 = vmatpush.msra.mxu0 %v619
    %v621 = vand.u32 %v240, 4294901760
    %v622 = vsub.f32 %v240, %v621
    %v623 = vand.u32 %v622, 4294901760
    %v624 = vsub.f32 %v622, %v623
    %v625 = vand.u32 %v624, 4294901760
    %626 = vmatpush.msra.mxu0 %v625
    %v627 = vand.u32 %v239, 4294901760
    %v628 = vsub.f32 %v239, %v627
    %v629 = vand.u32 %v628, 4294901760
    %v630 = vsub.f32 %v628, %v629
    %v631 = vand.u32 %v630, 4294901760
    %632 = vmatpush.msra.mxu0 %v631
    %v633 = vand.u32 %v238, 4294901760
    %v634 = vsub.f32 %v238, %v633
    %v635 = vand.u32 %v634, 4294901760
    %v636 = vsub.f32 %v634, %v635
    %v637 = vand.u32 %v636, 4294901760
    %638 = vmatpush.msra.mxu0 %v637
    %v639 = vand.u32 %v206, 4294901760
    %640 = vmatmul.f32.gmra.mxu0 %v639
    %v641 = vpop.f32.mrf.mxu0
    %v642 = vadd.f32 %v293, %v641
    %v643 = vand.u32 %v207, 4294901760
    %644 = vmatmul.f32.gmra.mxu0 %v643
    %v645 = vpop.f32.mrf.mxu0
    %v646 = vadd.f32 %v301, %v645
    %v647 = vand.u32 %v208, 4294901760
    %648 = vmatmul.f32.gmra.mxu0 %v647
    %v649 = vpop.f32.mrf.mxu0
    %v650 = vadd.f32 %v309, %v649
    %v651 = vand.u32 %v209, 4294901760
    %652 = vmatmul.f32.gmra.mxu0 %v651
    %v653 = vpop.f32.mrf.mxu0
    %v654 = vadd.f32 %v317, %v653
    %v655 = vand.u32 %v210, 4294901760
    %656 = vmatmul.f32.gmra.mxu0 %v655
    %v657 = vpop.f32.mrf.mxu0
    %v658 = vadd.f32 %v325, %v657
    %v659 = vand.u32 %v211, 4294901760
    %660 = vmatmul.f32.gmra.mxu0 %v659
    %v661 = vpop.f32.mrf.mxu0
    %v662 = vadd.f32 %v333, %v661
    %v663 = vand.u32 %v212, 4294901760
    %664 = vmatmul.f32.gmra.mxu0 %v663
    %v665 = vpop.f32.mrf.mxu0
    %v666 = vadd.f32 %v341, %v665
    %v667 = vand.u32 %v213, 4294901760
    %668 = vmatmul.f32.gmra.mxu0 %v667
    %v669 = vpop.f32.mrf.mxu0
    %v670 = vadd.f32 %v349, %v669
    %v671 = vand.u32 %v214, 4294901760
    %672 = vmatmul.f32.gmra.mxu0 %v671
    %v673 = vpop.f32.mrf.mxu0
    %v674 = vadd.f32 %v357, %v673
    %v675 = vand.u32 %v215, 4294901760
    %676 = vmatmul.f32.gmra.mxu0 %v675
    %v677 = vpop.f32.mrf.mxu0
    %v678 = vadd.f32 %v365, %v677
    %v679 = vand.u32 %v216, 4294901760
    %680 = vmatmul.f32.gmra.mxu0 %v679
    %v681 = vpop.f32.mrf.mxu0
    %v682 = vadd.f32 %v373, %v681
    %v683 = vand.u32 %v217, 4294901760
    %684 = vmatmul.f32.gmra.mxu0 %v683
    %v685 = vpop.f32.mrf.mxu0
    %v686 = vadd.f32 %v381, %v685
    %v687 = vand.u32 %v218, 4294901760
    %688 = vmatmul.f32.gmra.mxu0 %v687
    %v689 = vpop.f32.mrf.mxu0
    %v690 = vadd.f32 %v389, %v689
    %v691 = vand.u32 %v219, 4294901760
    %692 = vmatmul.f32.gmra.mxu0 %v691
    %v693 = vpop.f32.mrf.mxu0
    %v694 = vadd.f32 %v397, %v693
    %v695 = vand.u32 %v220, 4294901760
    %696 = vmatmul.f32.gmra.mxu0 %v695
    %v697 = vpop.f32.mrf.mxu0
    %v698 = vadd.f32 %v405, %v697
    %v699 = vand.u32 %v221, 4294901760
    %700 = vmatmul.f32.gmra.mxu0 %v699
    %v701 = vpop.f32.mrf.mxu0
    %v702 = vadd.f32 %v413, %v701
    %v703 = vand.u32 %v222, 4294901760
    %704 = vmatmul.f32.gmra.mxu0 %v703
    %v705 = vpop.f32.mrf.mxu0
    %v706 = vadd.f32 %v421, %v705
    %v707 = vand.u32 %v223, 4294901760
    %708 = vmatmul.f32.gmra.mxu0 %v707
    %v709 = vpop.f32.mrf.mxu0
    %v710 = vadd.f32 %v429, %v709
    %v711 = vand.u32 %v224, 4294901760
    %712 = vmatmul.f32.gmra.mxu0 %v711
    %v713 = vpop.f32.mrf.mxu0
    %v714 = vadd.f32 %v437, %v713
    %v715 = vand.u32 %v225, 4294901760
    %716 = vmatmul.f32.gmra.mxu0 %v715
    %v717 = vpop.f32.mrf.mxu0
    %v718 = vadd.f32 %v445, %v717
    %v719 = vand.u32 %v226, 4294901760
    %720 = vmatmul.f32.gmra.mxu0 %v719
    %v721 = vpop.f32.mrf.mxu0
    %v722 = vadd.f32 %v453, %v721
    %v723 = vand.u32 %v227, 4294901760
    %724 = vmatmul.f32.gmra.mxu0 %v723
    %v725 = vpop.f32.mrf.mxu0
    %v726 = vadd.f32 %v461, %v725
    %v727 = vand.u32 %v228, 4294901760
    %728 = vmatmul.f32.gmra.mxu0 %v727
    %v729 = vpop.f32.mrf.mxu0
    %v730 = vadd.f32 %v469, %v729
    %v731 = vand.u32 %v229, 4294901760
    %732 = vmatmul.f32.gmra.mxu0 %v731
    %v733 = vpop.f32.mrf.mxu0
    %v734 = vadd.f32 %v477, %v733
    %v735 = vand.u32 %v230, 4294901760
    %736 = vmatmul.f32.gmra.mxu0 %v735
    %v737 = vpop.f32.mrf.mxu0
    %v738 = vadd.f32 %v485, %v737
    %v739 = vand.u32 %v231, 4294901760
    %740 = vmatmul.f32.gmra.mxu0 %v739
    %v741 = vpop.f32.mrf.mxu0
    %v742 = vadd.f32 %v493, %v741
    %v743 = vand.u32 %v232, 4294901760
    %744 = vmatmul.f32.gmra.mxu0 %v743
    %v745 = vpop.f32.mrf.mxu0
    %v746 = vadd.f32 %v501, %v745
    %v747 = vand.u32 %v233, 4294901760
    %748 = vmatmul.f32.gmra.mxu0 %v747
    %v749 = vpop.f32.mrf.mxu0
    %v750 = vadd.f32 %v509, %v749
    %v751 = vand.u32 %v234, 4294901760
    %752 = vmatmul.f32.gmra.mxu0 %v751
    %v753 = vpop.f32.mrf.mxu0
    %v754 = vadd.f32 %v517, %v753
    %v755 = vand.u32 %v235, 4294901760
    %756 = vmatmul.f32.gmra.mxu0 %v755
    %v757 = vpop.f32.mrf.mxu0
    %v758 = vadd.f32 %v525, %v757
    %v759 = vand.u32 %v236, 4294901760
    %760 = vmatmul.f32.gmra.mxu0 %v759
    %v761 = vpop.f32.mrf.mxu0
    %v762 = vadd.f32 %v533, %v761
    %v763 = vand.u32 %v237, 4294901760
    %764 = vmatmul.f32.gmra.mxu0 %v763
    %v765 = vpop.f32.mrf.mxu0
    %v766 = vadd.f32 %v541, %v765
    %767 = vdwg.mxu0
    %v768 = vand.u32 %v253, 4294901760
    %v769 = vsub.f32 %v253, %v768
    %770 = vmatpush.msra.mxu0 %v769
    %v771 = vand.u32 %v252, 4294901760
    %v772 = vsub.f32 %v252, %v771
    %773 = vmatpush.msra.mxu0 %v772
    %v774 = vand.u32 %v251, 4294901760
    %v775 = vsub.f32 %v251, %v774
    %776 = vmatpush.msra.mxu0 %v775
    %v777 = vand.u32 %v250, 4294901760
    %v778 = vsub.f32 %v250, %v777
    %779 = vmatpush.msra.mxu0 %v778
    %v780 = vand.u32 %v249, 4294901760
    %v781 = vsub.f32 %v249, %v780
    %782 = vmatpush.msra.mxu0 %v781
    %v783 = vand.u32 %v248, 4294901760
    %v784 = vsub.f32 %v248, %v783
    %785 = vmatpush.msra.mxu0 %v784
    %v786 = vand.u32 %v247, 4294901760
    %v787 = vsub.f32 %v247, %v786
    %788 = vmatpush.msra.mxu0 %v787
    %v789 = vand.u32 %v246, 4294901760
    %v790 = vsub.f32 %v246, %v789
    %791 = vmatpush.msra.mxu0 %v790
    %v792 = vand.u32 %v245, 4294901760
    %v793 = vsub.f32 %v245, %v792
    %794 = vmatpush.msra.mxu0 %v793
    %v795 = vand.u32 %v244, 4294901760
    %v796 = vsub.f32 %v244, %v795
    %797 = vmatpush.msra.mxu0 %v796
    %v798 = vand.u32 %v243, 4294901760
    %v799 = vsub.f32 %v243, %v798
    %800 = vmatpush.msra.mxu0 %v799
    %v801 = vand.u32 %v242, 4294901760
    %v802 = vsub.f32 %v242, %v801
    %803 = vmatpush.msra.mxu0 %v802
    %v804 = vand.u32 %v241, 4294901760
    %v805 = vsub.f32 %v241, %v804
    %806 = vmatpush.msra.mxu0 %v805
    %v807 = vand.u32 %v240, 4294901760
    %v808 = vsub.f32 %v240, %v807
    %809 = vmatpush.msra.mxu0 %v808
    %v810 = vand.u32 %v239, 4294901760
    %v811 = vsub.f32 %v239, %v810
    %812 = vmatpush.msra.mxu0 %v811
    %v813 = vand.u32 %v238, 4294901760
    %v814 = vsub.f32 %v238, %v813
    %815 = vmatpush.msra.mxu0 %v814
    %v816 = vand.u32 %v206, 4294901760
    %v817 = vsub.f32 %v206, %v816
    %818 = vmatmul.f32.gmra.mxu0 %v817
    %v819 = vpop.f32.mrf.mxu0
    %v820 = vadd.f32 %v642, %v819
    %v821 = vand.u32 %v207, 4294901760
    %v822 = vsub.f32 %v207, %v821
    %823 = vmatmul.f32.gmra.mxu0 %v822
    %v824 = vpop.f32.mrf.mxu0
    %v825 = vadd.f32 %v646, %v824
    %v826 = vand.u32 %v208, 4294901760
    %v827 = vsub.f32 %v208, %v826
    %828 = vmatmul.f32.gmra.mxu0 %v827
    %v829 = vpop.f32.mrf.mxu0
    %v830 = vadd.f32 %v650, %v829
    %v831 = vand.u32 %v209, 4294901760
    %v832 = vsub.f32 %v209, %v831
    %833 = vmatmul.f32.gmra.mxu0 %v832
    %v834 = vpop.f32.mrf.mxu0
    %v835 = vadd.f32 %v654, %v834
    %v836 = vand.u32 %v210, 4294901760
    %v837 = vsub.f32 %v210, %v836
    %838 = vmatmul.f32.gmra.mxu0 %v837
    %v839 = vpop.f32.mrf.mxu0
    %v840 = vadd.f32 %v658, %v839
    %v841 = vand.u32 %v211, 4294901760
    %v842 = vsub.f32 %v211, %v841
    %843 = vmatmul.f32.gmra.mxu0 %v842
    %v844 = vpop.f32.mrf.mxu0
    %v845 = vadd.f32 %v662, %v844
    %v846 = vand.u32 %v212, 4294901760
    %v847 = vsub.f32 %v212, %v846
    %848 = vmatmul.f32.gmra.mxu0 %v847
    %v849 = vpop.f32.mrf.mxu0
    %v850 = vadd.f32 %v666, %v849
    %v851 = vand.u32 %v213, 4294901760
    %v852 = vsub.f32 %v213, %v851
    %853 = vmatmul.f32.gmra.mxu0 %v852
    %v854 = vpop.f32.mrf.mxu0
    %v855 = vadd.f32 %v670, %v854
    %v856 = vand.u32 %v214, 4294901760
    %v857 = vsub.f32 %v214, %v856
    %858 = vmatmul.f32.gmra.mxu0 %v857
    %v859 = vpop.f32.mrf.mxu0
    %v860 = vadd.f32 %v674, %v859
    %v861 = vand.u32 %v215, 4294901760
    %v862 = vsub.f32 %v215, %v861
    %863 = vmatmul.f32.gmra.mxu0 %v862
    %v864 = vpop.f32.mrf.mxu0
    %v865 = vadd.f32 %v678, %v864
    %v866 = vand.u32 %v216, 4294901760
    %v867 = vsub.f32 %v216, %v866
    %868 = vmatmul.f32.gmra.mxu0 %v867
    %v869 = vpop.f32.mrf.mxu0
    %v870 = vadd.f32 %v682, %v869
    %v871 = vand.u32 %v217, 4294901760
    %v872 = vsub.f32 %v217, %v871
    %873 = vmatmul.f32.gmra.mxu0 %v872
    %v874 = vpop.f32.mrf.mxu0
    %v875 = vadd.f32 %v686, %v874
    %v876 = vand.u32 %v218, 4294901760
    %v877 = vsub.f32 %v218, %v876
    %878 = vmatmul.f32.gmra.mxu0 %v877
    %v879 = vpop.f32.mrf.mxu0
    %v880 = vadd.f32 %v690, %v879
    %v881 = vand.u32 %v219, 4294901760
    %v882 = vsub.f32 %v219, %v881
    %883 = vmatmul.f32.gmra.mxu0 %v882
    %v884 = vpop.f32.mrf.mxu0
    %v885 = vadd.f32 %v694, %v884
    %v886 = vand.u32 %v220, 4294901760
    %v887 = vsub.f32 %v220, %v886
    %888 = vmatmul.f32.gmra.mxu0 %v887
    %v889 = vpop.f32.mrf.mxu0
    %v890 = vadd.f32 %v698, %v889
    %v891 = vand.u32 %v221, 4294901760
    %v892 = vsub.f32 %v221, %v891
    %893 = vmatmul.f32.gmra.mxu0 %v892
    %v894 = vpop.f32.mrf.mxu0
    %v895 = vadd.f32 %v702, %v894
    %v896 = vand.u32 %v222, 4294901760
    %v897 = vsub.f32 %v222, %v896
    %898 = vmatmul.f32.gmra.mxu0 %v897
    %v899 = vpop.f32.mrf.mxu0
    %v900 = vadd.f32 %v706, %v899
    %v901 = vand.u32 %v223, 4294901760
    %v902 = vsub.f32 %v223, %v901
    %903 = vmatmul.f32.gmra.mxu0 %v902
    %v904 = vpop.f32.mrf.mxu0
    %v905 = vadd.f32 %v710, %v904
    %v906 = vand.u32 %v224, 4294901760
    %v907 = vsub.f32 %v224, %v906
    %908 = vmatmul.f32.gmra.mxu0 %v907
    %v909 = vpop.f32.mrf.mxu0
    %v910 = vadd.f32 %v714, %v909
    %v911 = vand.u32 %v225, 4294901760
    %v912 = vsub.f32 %v225, %v911
    %913 = vmatmul.f32.gmra.mxu0 %v912
    %v914 = vpop.f32.mrf.mxu0
    %v915 = vadd.f32 %v718, %v914
    %v916 = vand.u32 %v226, 4294901760
    %v917 = vsub.f32 %v226, %v916
    %918 = vmatmul.f32.gmra.mxu0 %v917
    %v919 = vpop.f32.mrf.mxu0
    %v920 = vadd.f32 %v722, %v919
    %v921 = vand.u32 %v227, 4294901760
    %v922 = vsub.f32 %v227, %v921
    %923 = vmatmul.f32.gmra.mxu0 %v922
    %v924 = vpop.f32.mrf.mxu0
    %v925 = vadd.f32 %v726, %v924
    %v926 = vand.u32 %v228, 4294901760
    %v927 = vsub.f32 %v228, %v926
    %928 = vmatmul.f32.gmra.mxu0 %v927
    %v929 = vpop.f32.mrf.mxu0
    %v930 = vadd.f32 %v730, %v929
    %v931 = vand.u32 %v229, 4294901760
    %v932 = vsub.f32 %v229, %v931
    %933 = vmatmul.f32.gmra.mxu0 %v932
    %v934 = vpop.f32.mrf.mxu0
    %v935 = vadd.f32 %v734, %v934
    %v936 = vand.u32 %v230, 4294901760
    %v937 = vsub.f32 %v230, %v936
    %938 = vmatmul.f32.gmra.mxu0 %v937
    %v939 = vpop.f32.mrf.mxu0
    %v940 = vadd.f32 %v738, %v939
    %v941 = vand.u32 %v231, 4294901760
    %v942 = vsub.f32 %v231, %v941
    %943 = vmatmul.f32.gmra.mxu0 %v942
    %v944 = vpop.f32.mrf.mxu0
    %v945 = vadd.f32 %v742, %v944
    %v946 = vand.u32 %v232, 4294901760
    %v947 = vsub.f32 %v232, %v946
    %948 = vmatmul.f32.gmra.mxu0 %v947
    %v949 = vpop.f32.mrf.mxu0
    %v950 = vadd.f32 %v746, %v949
    %v951 = vand.u32 %v233, 4294901760
    %v952 = vsub.f32 %v233, %v951
    %953 = vmatmul.f32.gmra.mxu0 %v952
    %v954 = vpop.f32.mrf.mxu0
    %v955 = vadd.f32 %v750, %v954
    %v956 = vand.u32 %v234, 4294901760
    %v957 = vsub.f32 %v234, %v956
    %958 = vmatmul.f32.gmra.mxu0 %v957
    %v959 = vpop.f32.mrf.mxu0
    %v960 = vadd.f32 %v754, %v959
    %v961 = vand.u32 %v235, 4294901760
    %v962 = vsub.f32 %v235, %v961
    %963 = vmatmul.f32.gmra.mxu0 %v962
    %v964 = vpop.f32.mrf.mxu0
    %v965 = vadd.f32 %v758, %v964
    %v966 = vand.u32 %v236, 4294901760
    %v967 = vsub.f32 %v236, %v966
    %968 = vmatmul.f32.gmra.mxu0 %v967
    %v969 = vpop.f32.mrf.mxu0
    %v970 = vadd.f32 %v762, %v969
    %v971 = vand.u32 %v237, 4294901760
    %v972 = vsub.f32 %v237, %v971
    %973 = vmatmul.f32.gmra.mxu0 %v972
    %v974 = vpop.f32.mrf.mxu0
    %v975 = vadd.f32 %v766, %v974
    %976 = vdwg.mxu0
    %v977 = vand.u32 %v253, 4294901760
    %978 = vmatpush.msra.mxu0 %v977
    %v979 = vand.u32 %v252, 4294901760
    %980 = vmatpush.msra.mxu0 %v979
    %v981 = vand.u32 %v251, 4294901760
    %982 = vmatpush.msra.mxu0 %v981
    %v983 = vand.u32 %v250, 4294901760
    %984 = vmatpush.msra.mxu0 %v983
    %v985 = vand.u32 %v249, 4294901760
    %986 = vmatpush.msra.mxu0 %v985
    %v987 = vand.u32 %v248, 4294901760
    %988 = vmatpush.msra.mxu0 %v987
    %v989 = vand.u32 %v247, 4294901760
    %990 = vmatpush.msra.mxu0 %v989
    %v991 = vand.u32 %v246, 4294901760
    %992 = vmatpush.msra.mxu0 %v991
    %v993 = vand.u32 %v245, 4294901760
    %994 = vmatpush.msra.mxu0 %v993
    %v995 = vand.u32 %v244, 4294901760
    %996 = vmatpush.msra.mxu0 %v995
    %v997 = vand.u32 %v243, 4294901760
    %998 = vmatpush.msra.mxu0 %v997
    %v999 = vand.u32 %v242, 4294901760
    %1000 = vmatpush.msra.mxu0 %v999
    %v1001 = vand.u32 %v241, 4294901760
    %1002 = vmatpush.msra.mxu0 %v1001
    %v1003 = vand.u32 %v240, 4294901760
    %1004 = vmatpush.msra.mxu0 %v1003
    %v1005 = vand.u32 %v239, 4294901760
    %1006 = vmatpush.msra.mxu0 %v1005
    %v1007 = vand.u32 %v238, 4294901760
    %1008 = vmatpush.msra.mxu0 %v1007
    %v1009 = vand.u32 %v206, 4294901760
    %v1010 = vsub.f32 %v206, %v1009
    %v1011 = vand.u32 %v1010, 4294901760
    %1012 = vmatmul.f32.gmra.mxu0 %v1011
    %v1013 = vpop.f32.mrf.mxu0
    %v1014 = vadd.f32 %v820, %v1013
    %v1015 = vand.u32 %v207, 4294901760
    %v1016 = vsub.f32 %v207, %v1015
    %v1017 = vand.u32 %v1016, 4294901760
    %1018 = vmatmul.f32.gmra.mxu0 %v1017
    %v1019 = vpop.f32.mrf.mxu0
    %v1020 = vadd.f32 %v825, %v1019
    %v1021 = vand.u32 %v208, 4294901760
    %v1022 = vsub.f32 %v208, %v1021
    %v1023 = vand.u32 %v1022, 4294901760
    %1024 = vmatmul.f32.gmra.mxu0 %v1023
    %v1025 = vpop.f32.mrf.mxu0
    %v1026 = vadd.f32 %v830, %v1025
    %v1027 = vand.u32 %v209, 4294901760
    %v1028 = vsub.f32 %v209, %v1027
    %v1029 = vand.u32 %v1028, 4294901760
    %1030 = vmatmul.f32.gmra.mxu0 %v1029
    %v1031 = vpop.f32.mrf.mxu0
    %v1032 = vadd.f32 %v835, %v1031
    %v1033 = vand.u32 %v210, 4294901760
    %v1034 = vsub.f32 %v210, %v1033
    %v1035 = vand.u32 %v1034, 4294901760
    %1036 = vmatmul.f32.gmra.mxu0 %v1035
    %v1037 = vpop.f32.mrf.mxu0
    %v1038 = vadd.f32 %v840, %v1037
    %v1039 = vand.u32 %v211, 4294901760
    %v1040 = vsub.f32 %v211, %v1039
    %v1041 = vand.u32 %v1040, 4294901760
    %1042 = vmatmul.f32.gmra.mxu0 %v1041
    %v1043 = vpop.f32.mrf.mxu0
    %v1044 = vadd.f32 %v845, %v1043
    %v1045 = vand.u32 %v212, 4294901760
    %v1046 = vsub.f32 %v212, %v1045
    %v1047 = vand.u32 %v1046, 4294901760
    %1048 = vmatmul.f32.gmra.mxu0 %v1047
    %v1049 = vpop.f32.mrf.mxu0
    %v1050 = vadd.f32 %v850, %v1049
    %v1051 = vand.u32 %v213, 4294901760
    %v1052 = vsub.f32 %v213, %v1051
    %v1053 = vand.u32 %v1052, 4294901760
    %1054 = vmatmul.f32.gmra.mxu0 %v1053
    %v1055 = vpop.f32.mrf.mxu0
    %v1056 = vadd.f32 %v855, %v1055
    %v1057 = vand.u32 %v214, 4294901760
    %v1058 = vsub.f32 %v214, %v1057
    %v1059 = vand.u32 %v1058, 4294901760
    %1060 = vmatmul.f32.gmra.mxu0 %v1059
    %v1061 = vpop.f32.mrf.mxu0
    %v1062 = vadd.f32 %v860, %v1061
    %v1063 = vand.u32 %v215, 4294901760
    %v1064 = vsub.f32 %v215, %v1063
    %v1065 = vand.u32 %v1064, 4294901760
    %1066 = vmatmul.f32.gmra.mxu0 %v1065
    %v1067 = vpop.f32.mrf.mxu0
    %v1068 = vadd.f32 %v865, %v1067
    %v1069 = vand.u32 %v216, 4294901760
    %v1070 = vsub.f32 %v216, %v1069
    %v1071 = vand.u32 %v1070, 4294901760
    %1072 = vmatmul.f32.gmra.mxu0 %v1071
    %v1073 = vpop.f32.mrf.mxu0
    %v1074 = vadd.f32 %v870, %v1073
    %v1075 = vand.u32 %v217, 4294901760
    %v1076 = vsub.f32 %v217, %v1075
    %v1077 = vand.u32 %v1076, 4294901760
    %1078 = vmatmul.f32.gmra.mxu0 %v1077
    %v1079 = vpop.f32.mrf.mxu0
    %v1080 = vadd.f32 %v875, %v1079
    %v1081 = vand.u32 %v218, 4294901760
    %v1082 = vsub.f32 %v218, %v1081
    %v1083 = vand.u32 %v1082, 4294901760
    %1084 = vmatmul.f32.gmra.mxu0 %v1083
    %v1085 = vpop.f32.mrf.mxu0
    %v1086 = vadd.f32 %v880, %v1085
    %v1087 = vand.u32 %v219, 4294901760
    %v1088 = vsub.f32 %v219, %v1087
    %v1089 = vand.u32 %v1088, 4294901760
    %1090 = vmatmul.f32.gmra.mxu0 %v1089
    %v1091 = vpop.f32.mrf.mxu0
    %v1092 = vadd.f32 %v885, %v1091
    %v1093 = vand.u32 %v220, 4294901760
    %v1094 = vsub.f32 %v220, %v1093
    %v1095 = vand.u32 %v1094, 4294901760
    %1096 = vmatmul.f32.gmra.mxu0 %v1095
    %v1097 = vpop.f32.mrf.mxu0
    %v1098 = vadd.f32 %v890, %v1097
    %v1099 = vand.u32 %v221, 4294901760
    %v1100 = vsub.f32 %v221, %v1099
    %v1101 = vand.u32 %v1100, 4294901760
    %1102 = vmatmul.f32.gmra.mxu0 %v1101
    %v1103 = vpop.f32.mrf.mxu0
    %v1104 = vadd.f32 %v895, %v1103
    %v1105 = vand.u32 %v222, 4294901760
    %v1106 = vsub.f32 %v222, %v1105
    %v1107 = vand.u32 %v1106, 4294901760
    %1108 = vmatmul.f32.gmra.mxu0 %v1107
    %v1109 = vpop.f32.mrf.mxu0
    %v1110 = vadd.f32 %v900, %v1109
    %v1111 = vand.u32 %v223, 4294901760
    %v1112 = vsub.f32 %v223, %v1111
    %v1113 = vand.u32 %v1112, 4294901760
    %1114 = vmatmul.f32.gmra.mxu0 %v1113
    %v1115 = vpop.f32.mrf.mxu0
    %v1116 = vadd.f32 %v905, %v1115
    %v1117 = vand.u32 %v224, 4294901760
    %v1118 = vsub.f32 %v224, %v1117
    %v1119 = vand.u32 %v1118, 4294901760
    %1120 = vmatmul.f32.gmra.mxu0 %v1119
    %v1121 = vpop.f32.mrf.mxu0
    %v1122 = vadd.f32 %v910, %v1121
    %v1123 = vand.u32 %v225, 4294901760
    %v1124 = vsub.f32 %v225, %v1123
    %v1125 = vand.u32 %v1124, 4294901760
    %1126 = vmatmul.f32.gmra.mxu0 %v1125
    %v1127 = vpop.f32.mrf.mxu0
    %v1128 = vadd.f32 %v915, %v1127
    %v1129 = vand.u32 %v226, 4294901760
    %v1130 = vsub.f32 %v226, %v1129
    %v1131 = vand.u32 %v1130, 4294901760
    %1132 = vmatmul.f32.gmra.mxu0 %v1131
    %v1133 = vpop.f32.mrf.mxu0
    %v1134 = vadd.f32 %v920, %v1133
    %v1135 = vand.u32 %v227, 4294901760
    %v1136 = vsub.f32 %v227, %v1135
    %v1137 = vand.u32 %v1136, 4294901760
    %1138 = vmatmul.f32.gmra.mxu0 %v1137
    %v1139 = vpop.f32.mrf.mxu0
    %v1140 = vadd.f32 %v925, %v1139
    %v1141 = vand.u32 %v228, 4294901760
    %v1142 = vsub.f32 %v228, %v1141
    %v1143 = vand.u32 %v1142, 4294901760
    %1144 = vmatmul.f32.gmra.mxu0 %v1143
    %v1145 = vpop.f32.mrf.mxu0
    %v1146 = vadd.f32 %v930, %v1145
    %v1147 = vand.u32 %v229, 4294901760
    %v1148 = vsub.f32 %v229, %v1147
    %v1149 = vand.u32 %v1148, 4294901760
    %1150 = vmatmul.f32.gmra.mxu0 %v1149
    %v1151 = vpop.f32.mrf.mxu0
    %v1152 = vadd.f32 %v935, %v1151
    %v1153 = vand.u32 %v230, 4294901760
    %v1154 = vsub.f32 %v230, %v1153
    %v1155 = vand.u32 %v1154, 4294901760
    %1156 = vmatmul.f32.gmra.mxu0 %v1155
    %v1157 = vpop.f32.mrf.mxu0
    %v1158 = vadd.f32 %v940, %v1157
    %v1159 = vand.u32 %v231, 4294901760
    %v1160 = vsub.f32 %v231, %v1159
    %v1161 = vand.u32 %v1160, 4294901760
    %1162 = vmatmul.f32.gmra.mxu0 %v1161
    %v1163 = vpop.f32.mrf.mxu0
    %v1164 = vadd.f32 %v945, %v1163
    %v1165 = vand.u32 %v232, 4294901760
    %v1166 = vsub.f32 %v232, %v1165
    %v1167 = vand.u32 %v1166, 4294901760
    %1168 = vmatmul.f32.gmra.mxu0 %v1167
    %v1169 = vpop.f32.mrf.mxu0
    %v1170 = vadd.f32 %v950, %v1169
    %v1171 = vand.u32 %v233, 4294901760
    %v1172 = vsub.f32 %v233, %v1171
    %v1173 = vand.u32 %v1172, 4294901760
    %1174 = vmatmul.f32.gmra.mxu0 %v1173
    %v1175 = vpop.f32.mrf.mxu0
    %v1176 = vadd.f32 %v955, %v1175
    %v1177 = vand.u32 %v234, 4294901760
    %v1178 = vsub.f32 %v234, %v1177
    %v1179 = vand.u32 %v1178, 4294901760
    %1180 = vmatmul.f32.gmra.mxu0 %v1179
    %v1181 = vpop.f32.mrf.mxu0
    %v1182 = vadd.f32 %v960, %v1181
    %v1183 = vand.u32 %v235, 4294901760
    %v1184 = vsub.f32 %v235, %v1183
    %v1185 = vand.u32 %v1184, 4294901760
    %1186 = vmatmul.f32.gmra.mxu0 %v1185
    %v1187 = vpop.f32.mrf.mxu0
    %v1188 = vadd.f32 %v965, %v1187
    %v1189 = vand.u32 %v236, 4294901760
    %v1190 = vsub.f32 %v236, %v1189
    %v1191 = vand.u32 %v1190, 4294901760
    %1192 = vmatmul.f32.gmra.mxu0 %v1191
    %v1193 = vpop.f32.mrf.mxu0
    %v1194 = vadd.f32 %v970, %v1193
    %v1195 = vand.u32 %v237, 4294901760
    %v1196 = vsub.f32 %v237, %v1195
    %v1197 = vand.u32 %v1196, 4294901760
    %1198 = vmatmul.f32.gmra.mxu0 %v1197
    %v1199 = vpop.f32.mrf.mxu0
    %v1200 = vadd.f32 %v975, %v1199
    %1201 = vdwg.mxu0
    %v1202 = vand.u32 %v253, 4294901760
    %v1203 = vsub.f32 %v253, %v1202
    %v1204 = vand.u32 %v1203, 4294901760
    %1205 = vmatpush.msra.mxu0 %v1204
    %v1206 = vand.u32 %v252, 4294901760
    %v1207 = vsub.f32 %v252, %v1206
    %v1208 = vand.u32 %v1207, 4294901760
    %1209 = vmatpush.msra.mxu0 %v1208
    %v1210 = vand.u32 %v251, 4294901760
    %v1211 = vsub.f32 %v251, %v1210
    %v1212 = vand.u32 %v1211, 4294901760
    %1213 = vmatpush.msra.mxu0 %v1212
    %v1214 = vand.u32 %v250, 4294901760
    %v1215 = vsub.f32 %v250, %v1214
    %v1216 = vand.u32 %v1215, 4294901760
    %1217 = vmatpush.msra.mxu0 %v1216
    %v1218 = vand.u32 %v249, 4294901760
    %v1219 = vsub.f32 %v249, %v1218
    %v1220 = vand.u32 %v1219, 4294901760
    %1221 = vmatpush.msra.mxu0 %v1220
    %v1222 = vand.u32 %v248, 4294901760
    %v1223 = vsub.f32 %v248, %v1222
    %v1224 = vand.u32 %v1223, 4294901760
    %1225 = vmatpush.msra.mxu0 %v1224
    %v1226 = vand.u32 %v247, 4294901760
    %v1227 = vsub.f32 %v247, %v1226
    %v1228 = vand.u32 %v1227, 4294901760
    %1229 = vmatpush.msra.mxu0 %v1228
    %v1230 = vand.u32 %v246, 4294901760
    %v1231 = vsub.f32 %v246, %v1230
    %v1232 = vand.u32 %v1231, 4294901760
    %1233 = vmatpush.msra.mxu0 %v1232
    %v1234 = vand.u32 %v245, 4294901760
    %v1235 = vsub.f32 %v245, %v1234
    %v1236 = vand.u32 %v1235, 4294901760
    %1237 = vmatpush.msra.mxu0 %v1236
    %v1238 = vand.u32 %v244, 4294901760
    %v1239 = vsub.f32 %v244, %v1238
    %v1240 = vand.u32 %v1239, 4294901760
    %1241 = vmatpush.msra.mxu0 %v1240
    %v1242 = vand.u32 %v243, 4294901760
    %v1243 = vsub.f32 %v243, %v1242
    %v1244 = vand.u32 %v1243, 4294901760
    %1245 = vmatpush.msra.mxu0 %v1244
    %v1246 = vand.u32 %v242, 4294901760
    %v1247 = vsub.f32 %v242, %v1246
    %v1248 = vand.u32 %v1247, 4294901760
    %1249 = vmatpush.msra.mxu0 %v1248
    %v1250 = vand.u32 %v241, 4294901760
    %v1251 = vsub.f32 %v241, %v1250
    %v1252 = vand.u32 %v1251, 4294901760
    %1253 = vmatpush.msra.mxu0 %v1252
    %v1254 = vand.u32 %v240, 4294901760
    %v1255 = vsub.f32 %v240, %v1254
    %v1256 = vand.u32 %v1255, 4294901760
    %1257 = vmatpush.msra.mxu0 %v1256
    %v1258 = vand.u32 %v239, 4294901760
    %v1259 = vsub.f32 %v239, %v1258
    %v1260 = vand.u32 %v1259, 4294901760
    %1261 = vmatpush.msra.mxu0 %v1260
    %v1262 = vand.u32 %v238, 4294901760
    %v1263 = vsub.f32 %v238, %v1262
    %v1264 = vand.u32 %v1263, 4294901760
    %1265 = vmatpush.msra.mxu0 %v1264
    %v1266 = vand.u32 %v206, 4294901760
    %1267 = vmatmul.f32.gmra.mxu0 %v1266
    %v1268 = vpop.f32.mrf.mxu0
    %v1269 = vadd.f32 %v1014, %v1268
    %v1270 = vand.u32 %v207, 4294901760
    %1271 = vmatmul.f32.gmra.mxu0 %v1270
    %v1272 = vpop.f32.mrf.mxu0
    %v1273 = vadd.f32 %v1020, %v1272
    %v1274 = vand.u32 %v208, 4294901760
    %1275 = vmatmul.f32.gmra.mxu0 %v1274
    %v1276 = vpop.f32.mrf.mxu0
    %v1277 = vadd.f32 %v1026, %v1276
    %v1278 = vand.u32 %v209, 4294901760
    %1279 = vmatmul.f32.gmra.mxu0 %v1278
    %v1280 = vpop.f32.mrf.mxu0
    %v1281 = vadd.f32 %v1032, %v1280
    %v1282 = vand.u32 %v210, 4294901760
    %1283 = vmatmul.f32.gmra.mxu0 %v1282
    %v1284 = vpop.f32.mrf.mxu0
    %v1285 = vadd.f32 %v1038, %v1284
    %v1286 = vand.u32 %v211, 4294901760
    %1287 = vmatmul.f32.gmra.mxu0 %v1286
    %v1288 = vpop.f32.mrf.mxu0
    %v1289 = vadd.f32 %v1044, %v1288
    %v1290 = vand.u32 %v212, 4294901760
    %1291 = vmatmul.f32.gmra.mxu0 %v1290
    %v1292 = vpop.f32.mrf.mxu0
    %v1293 = vadd.f32 %v1050, %v1292
    %v1294 = vand.u32 %v213, 4294901760
    %1295 = vmatmul.f32.gmra.mxu0 %v1294
    %v1296 = vpop.f32.mrf.mxu0
    %v1297 = vadd.f32 %v1056, %v1296
    %v1298 = vand.u32 %v214, 4294901760
    %1299 = vmatmul.f32.gmra.mxu0 %v1298
    %v1300 = vpop.f32.mrf.mxu0
    %v1301 = vadd.f32 %v1062, %v1300
    %v1302 = vand.u32 %v215, 4294901760
    %1303 = vmatmul.f32.gmra.mxu0 %v1302
    %v1304 = vpop.f32.mrf.mxu0
    %v1305 = vadd.f32 %v1068, %v1304
    %v1306 = vand.u32 %v216, 4294901760
    %1307 = vmatmul.f32.gmra.mxu0 %v1306
    %v1308 = vpop.f32.mrf.mxu0
    %v1309 = vadd.f32 %v1074, %v1308
    %v1310 = vand.u32 %v217, 4294901760
    %1311 = vmatmul.f32.gmra.mxu0 %v1310
    %v1312 = vpop.f32.mrf.mxu0
    %v1313 = vadd.f32 %v1080, %v1312
    %v1314 = vand.u32 %v218, 4294901760
    %1315 = vmatmul.f32.gmra.mxu0 %v1314
    %v1316 = vpop.f32.mrf.mxu0
    %v1317 = vadd.f32 %v1086, %v1316
    %v1318 = vand.u32 %v219, 4294901760
    %1319 = vmatmul.f32.gmra.mxu0 %v1318
    %v1320 = vpop.f32.mrf.mxu0
    %v1321 = vadd.f32 %v1092, %v1320
    %v1322 = vand.u32 %v220, 4294901760
    %1323 = vmatmul.f32.gmra.mxu0 %v1322
    %v1324 = vpop.f32.mrf.mxu0
    %v1325 = vadd.f32 %v1098, %v1324
    %v1326 = vand.u32 %v221, 4294901760
    %1327 = vmatmul.f32.gmra.mxu0 %v1326
    %v1328 = vpop.f32.mrf.mxu0
    %v1329 = vadd.f32 %v1104, %v1328
    %v1330 = vand.u32 %v222, 4294901760
    %1331 = vmatmul.f32.gmra.mxu0 %v1330
    %v1332 = vpop.f32.mrf.mxu0
    %v1333 = vadd.f32 %v1110, %v1332
    %v1334 = vand.u32 %v223, 4294901760
    %1335 = vmatmul.f32.gmra.mxu0 %v1334
    %v1336 = vpop.f32.mrf.mxu0
    %v1337 = vadd.f32 %v1116, %v1336
    %v1338 = vand.u32 %v224, 4294901760
    %1339 = vmatmul.f32.gmra.mxu0 %v1338
    %v1340 = vpop.f32.mrf.mxu0
    %v1341 = vadd.f32 %v1122, %v1340
    %v1342 = vand.u32 %v225, 4294901760
    %1343 = vmatmul.f32.gmra.mxu0 %v1342
    %v1344 = vpop.f32.mrf.mxu0
    %v1345 = vadd.f32 %v1128, %v1344
    %v1346 = vand.u32 %v226, 4294901760
    %1347 = vmatmul.f32.gmra.mxu0 %v1346
    %v1348 = vpop.f32.mrf.mxu0
    %v1349 = vadd.f32 %v1134, %v1348
    %v1350 = vand.u32 %v227, 4294901760
    %1351 = vmatmul.f32.gmra.mxu0 %v1350
    %v1352 = vpop.f32.mrf.mxu0
    %v1353 = vadd.f32 %v1140, %v1352
    %v1354 = vand.u32 %v228, 4294901760
    %1355 = vmatmul.f32.gmra.mxu0 %v1354
    %v1356 = vpop.f32.mrf.mxu0
    %v1357 = vadd.f32 %v1146, %v1356
    %v1358 = vand.u32 %v229, 4294901760
    %1359 = vmatmul.f32.gmra.mxu0 %v1358
    %v1360 = vpop.f32.mrf.mxu0
    %v1361 = vadd.f32 %v1152, %v1360
    %v1362 = vand.u32 %v230, 4294901760
    %1363 = vmatmul.f32.gmra.mxu0 %v1362
    %v1364 = vpop.f32.mrf.mxu0
    %v1365 = vadd.f32 %v1158, %v1364
    %v1366 = vand.u32 %v231, 4294901760
    %1367 = vmatmul.f32.gmra.mxu0 %v1366
    %v1368 = vpop.f32.mrf.mxu0
    %v1369 = vadd.f32 %v1164, %v1368
    %v1370 = vand.u32 %v232, 4294901760
    %1371 = vmatmul.f32.gmra.mxu0 %v1370
    %v1372 = vpop.f32.mrf.mxu0
    %v1373 = vadd.f32 %v1170, %v1372
    %v1374 = vand.u32 %v233, 4294901760
    %1375 = vmatmul.f32.gmra.mxu0 %v1374
    %v1376 = vpop.f32.mrf.mxu0
    %v1377 = vadd.f32 %v1176, %v1376
    %v1378 = vand.u32 %v234, 4294901760
    %1379 = vmatmul.f32.gmra.mxu0 %v1378
    %v1380 = vpop.f32.mrf.mxu0
    %v1381 = vadd.f32 %v1182, %v1380
    %v1382 = vand.u32 %v235, 4294901760
    %1383 = vmatmul.f32.gmra.mxu0 %v1382
    %v1384 = vpop.f32.mrf.mxu0
    %v1385 = vadd.f32 %v1188, %v1384
    %v1386 = vand.u32 %v236, 4294901760
    %1387 = vmatmul.f32.gmra.mxu0 %v1386
    %v1388 = vpop.f32.mrf.mxu0
    %v1389 = vadd.f32 %v1194, %v1388
    %v1390 = vand.u32 %v237, 4294901760
    %1391 = vmatmul.f32.gmra.mxu0 %v1390
    %v1392 = vpop.f32.mrf.mxu0
    %v1393 = vadd.f32 %v1200, %v1392
    %1394 = vdwg.mxu0
    %v1395 = vand.u32 %v253, 4294901760
    %1396 = vmatpush.msra.mxu0 %v1395
    %v1397 = vand.u32 %v252, 4294901760
    %1398 = vmatpush.msra.mxu0 %v1397
    %v1399 = vand.u32 %v251, 4294901760
    %1400 = vmatpush.msra.mxu0 %v1399
    %v1401 = vand.u32 %v250, 4294901760
    %1402 = vmatpush.msra.mxu0 %v1401
    %v1403 = vand.u32 %v249, 4294901760
    %1404 = vmatpush.msra.mxu0 %v1403
    %v1405 = vand.u32 %v248, 4294901760
    %1406 = vmatpush.msra.mxu0 %v1405
    %v1407 = vand.u32 %v247, 4294901760
    %1408 = vmatpush.msra.mxu0 %v1407
    %v1409 = vand.u32 %v246, 4294901760
    %1410 = vmatpush.msra.mxu0 %v1409
    %v1411 = vand.u32 %v245, 4294901760
    %1412 = vmatpush.msra.mxu0 %v1411
    %v1413 = vand.u32 %v244, 4294901760
    %1414 = vmatpush.msra.mxu0 %v1413
    %v1415 = vand.u32 %v243, 4294901760
    %1416 = vmatpush.msra.mxu0 %v1415
    %v1417 = vand.u32 %v242, 4294901760
    %1418 = vmatpush.msra.mxu0 %v1417
    %v1419 = vand.u32 %v241, 4294901760
    %1420 = vmatpush.msra.mxu0 %v1419
    %v1421 = vand.u32 %v240, 4294901760
    %1422 = vmatpush.msra.mxu0 %v1421
    %v1423 = vand.u32 %v239, 4294901760
    %1424 = vmatpush.msra.mxu0 %v1423
    %v1425 = vand.u32 %v238, 4294901760
    %1426 = vmatpush.msra.mxu0 %v1425
    %v1427 = vand.u32 %v206, 4294901760
    %1428 = vmatmul.f32.gmra.mxu0 %v1427
    %v1429 = vpop.f32.mrf.mxu0
    %v1430 = vadd.f32 %v1269, %v1429
    %v1431 = vand.u32 %v207, 4294901760
    %1432 = vmatmul.f32.gmra.mxu0 %v1431
    %v1433 = vpop.f32.mrf.mxu0
    %v1434 = vadd.f32 %v1273, %v1433
    %v1435 = vand.u32 %v208, 4294901760
    %1436 = vmatmul.f32.gmra.mxu0 %v1435
    %v1437 = vpop.f32.mrf.mxu0
    %v1438 = vadd.f32 %v1277, %v1437
    %v1439 = vand.u32 %v209, 4294901760
    %1440 = vmatmul.f32.gmra.mxu0 %v1439
    %v1441 = vpop.f32.mrf.mxu0
    %v1442 = vadd.f32 %v1281, %v1441
    %v1443 = vand.u32 %v210, 4294901760
    %1444 = vmatmul.f32.gmra.mxu0 %v1443
    %v1445 = vpop.f32.mrf.mxu0
    %v1446 = vadd.f32 %v1285, %v1445
    %v1447 = vand.u32 %v211, 4294901760
    %1448 = vmatmul.f32.gmra.mxu0 %v1447
    %v1449 = vpop.f32.mrf.mxu0
    %v1450 = vadd.f32 %v1289, %v1449
    %v1451 = vand.u32 %v212, 4294901760
    %1452 = vmatmul.f32.gmra.mxu0 %v1451
    %v1453 = vpop.f32.mrf.mxu0
    %v1454 = vadd.f32 %v1293, %v1453
    %v1455 = vand.u32 %v213, 4294901760
    %1456 = vmatmul.f32.gmra.mxu0 %v1455
    %v1457 = vpop.f32.mrf.mxu0
    %v1458 = vadd.f32 %v1297, %v1457
    %v1459 = vand.u32 %v214, 4294901760
    %1460 = vmatmul.f32.gmra.mxu0 %v1459
    %v1461 = vpop.f32.mrf.mxu0
    %v1462 = vadd.f32 %v1301, %v1461
    %v1463 = vand.u32 %v215, 4294901760
    %1464 = vmatmul.f32.gmra.mxu0 %v1463
    %v1465 = vpop.f32.mrf.mxu0
    %v1466 = vadd.f32 %v1305, %v1465
    %v1467 = vand.u32 %v216, 4294901760
    %1468 = vmatmul.f32.gmra.mxu0 %v1467
    %v1469 = vpop.f32.mrf.mxu0
    %v1470 = vadd.f32 %v1309, %v1469
    %v1471 = vand.u32 %v217, 4294901760
    %1472 = vmatmul.f32.gmra.mxu0 %v1471
    %v1473 = vpop.f32.mrf.mxu0
    %v1474 = vadd.f32 %v1313, %v1473
    %v1475 = vand.u32 %v218, 4294901760
    %1476 = vmatmul.f32.gmra.mxu0 %v1475
    %v1477 = vpop.f32.mrf.mxu0
    %v1478 = vadd.f32 %v1317, %v1477
    %v1479 = vand.u32 %v219, 4294901760
    %1480 = vmatmul.f32.gmra.mxu0 %v1479
    %v1481 = vpop.f32.mrf.mxu0
    %v1482 = vadd.f32 %v1321, %v1481
    %v1483 = vand.u32 %v220, 4294901760
    %1484 = vmatmul.f32.gmra.mxu0 %v1483
    %v1485 = vpop.f32.mrf.mxu0
    %v1486 = vadd.f32 %v1325, %v1485
    %v1487 = vand.u32 %v221, 4294901760
    %1488 = vmatmul.f32.gmra.mxu0 %v1487
    %v1489 = vpop.f32.mrf.mxu0
    %v1490 = vadd.f32 %v1329, %v1489
    %v1491 = vand.u32 %v222, 4294901760
    %1492 = vmatmul.f32.gmra.mxu0 %v1491
    %v1493 = vpop.f32.mrf.mxu0
    %v1494 = vadd.f32 %v1333, %v1493
    %v1495 = vand.u32 %v223, 4294901760
    %1496 = vmatmul.f32.gmra.mxu0 %v1495
    %v1497 = vpop.f32.mrf.mxu0
    %v1498 = vadd.f32 %v1337, %v1497
    %v1499 = vand.u32 %v224, 4294901760
    %1500 = vmatmul.f32.gmra.mxu0 %v1499
    %v1501 = vpop.f32.mrf.mxu0
    %v1502 = vadd.f32 %v1341, %v1501
    %v1503 = vand.u32 %v225, 4294901760
    %1504 = vmatmul.f32.gmra.mxu0 %v1503
    %v1505 = vpop.f32.mrf.mxu0
    %v1506 = vadd.f32 %v1345, %v1505
    %v1507 = vand.u32 %v226, 4294901760
    %1508 = vmatmul.f32.gmra.mxu0 %v1507
    %v1509 = vpop.f32.mrf.mxu0
    %v1510 = vadd.f32 %v1349, %v1509
    %v1511 = vand.u32 %v227, 4294901760
    %1512 = vmatmul.f32.gmra.mxu0 %v1511
    %v1513 = vpop.f32.mrf.mxu0
    %v1514 = vadd.f32 %v1353, %v1513
    %v1515 = vand.u32 %v228, 4294901760
    %1516 = vmatmul.f32.gmra.mxu0 %v1515
    %v1517 = vpop.f32.mrf.mxu0
    %v1518 = vadd.f32 %v1357, %v1517
    %v1519 = vand.u32 %v229, 4294901760
    %1520 = vmatmul.f32.gmra.mxu0 %v1519
    %v1521 = vpop.f32.mrf.mxu0
    %v1522 = vadd.f32 %v1361, %v1521
    %v1523 = vand.u32 %v230, 4294901760
    %1524 = vmatmul.f32.gmra.mxu0 %v1523
    %v1525 = vpop.f32.mrf.mxu0
    %v1526 = vadd.f32 %v1365, %v1525
    %v1527 = vand.u32 %v231, 4294901760
    %1528 = vmatmul.f32.gmra.mxu0 %v1527
    %v1529 = vpop.f32.mrf.mxu0
    %v1530 = vadd.f32 %v1369, %v1529
    %v1531 = vand.u32 %v232, 4294901760
    %1532 = vmatmul.f32.gmra.mxu0 %v1531
    %v1533 = vpop.f32.mrf.mxu0
    %v1534 = vadd.f32 %v1373, %v1533
    %v1535 = vand.u32 %v233, 4294901760
    %1536 = vmatmul.f32.gmra.mxu0 %v1535
    %v1537 = vpop.f32.mrf.mxu0
    %v1538 = vadd.f32 %v1377, %v1537
    %v1539 = vand.u32 %v234, 4294901760
    %1540 = vmatmul.f32.gmra.mxu0 %v1539
    %v1541 = vpop.f32.mrf.mxu0
    %v1542 = vadd.f32 %v1381, %v1541
    %v1543 = vand.u32 %v235, 4294901760
    %1544 = vmatmul.f32.gmra.mxu0 %v1543
    %v1545 = vpop.f32.mrf.mxu0
    %v1546 = vadd.f32 %v1385, %v1545
    %v1547 = vand.u32 %v236, 4294901760
    %1548 = vmatmul.f32.gmra.mxu0 %v1547
    %v1549 = vpop.f32.mrf.mxu0
    %v1550 = vadd.f32 %v1389, %v1549
    %v1551 = vand.u32 %v237, 4294901760
    %1552 = vmatmul.f32.gmra.mxu0 %v1551
    %v1553 = vpop.f32.mrf.mxu0
    %v1554 = vadd.f32 %v1393, %v1553
    %1555 = vdwg.mxu0
    %1556 = vst [vmem:[#allocation2] sm:$0xff] %v1430
    %1557 = vst [vmem:[#allocation2 + $0x8] sm:$0xff] %v1434
    %1558 = vst [vmem:[#allocation2 + $0x10] sm:$0xff] %v1438
    %1559 = vst [vmem:[#allocation2 + $0x18] sm:$0xff] %v1442
    %1560 = vst [vmem:[#allocation2 + $0x20] sm:$0xff] %v1446
    %1561 = vst [vmem:[#allocation2 + $0x28] sm:$0xff] %v1450
    %1562 = vst [vmem:[#allocation2 + $0x30] sm:$0xff] %v1454
    %1563 = vst [vmem:[#allocation2 + $0x38] sm:$0xff] %v1458
    %1564 = vst [vmem:[#allocation2 + $0x40] sm:$0xff] %v1462
    %1565 = vst [vmem:[#allocation2 + $0x48] sm:$0xff] %v1466
    %1566 = vst [vmem:[#allocation2 + $0x50] sm:$0xff] %v1470
    %1567 = vst [vmem:[#allocation2 + $0x58] sm:$0xff] %v1474
    %1568 = vst [vmem:[#allocation2 + $0x60] sm:$0xff] %v1478
    %1569 = vst [vmem:[#allocation2 + $0x68] sm:$0xff] %v1482
    %1570 = vst [vmem:[#allocation2 + $0x70] sm:$0xff] %v1486
    %1571 = vst [vmem:[#allocation2 + $0x78] sm:$0xff] %v1490
    %1572 = vst [vmem:[#allocation2 + $0x80] sm:$0xff] %v1494
    %1573 = vst [vmem:[#allocation2 + $0x88] sm:$0xff] %v1498
    %1574 = vst [vmem:[#allocation2 + $0x90] sm:$0xff] %v1502
    %1575 = vst [vmem:[#allocation2 + $0x98] sm:$0xff] %v1506
    %1576 = vst [vmem:[#allocation2 + $0xa0] sm:$0xff] %v1510
    %1577 = vst [vmem:[#allocation2 + $0xa8] sm:$0xff] %v1514
    %1578 = vst [vmem:[#allocation2 + $0xb0] sm:$0xff] %v1518
    %1579 = vst [vmem:[#allocation2 + $0xb8] sm:$0xff] %v1522
    %1580 = vst [vmem:[#allocation2 + $0xc0] sm:$0xff] %v1526
    %1581 = vst [vmem:[#allocation2 + $0xc8] sm:$0xff] %v1530
    %1582 = vst [vmem:[#allocation2 + $0xd0] sm:$0xff] %v1534
    %1583 = vst [vmem:[#allocation2 + $0xd8] sm:$0xff] %v1538
    %1584 = vst [vmem:[#allocation2 + $0xe0] sm:$0xff] %v1542
    %1585 = vst [vmem:[#allocation2 + $0xe8] sm:$0xff] %v1546
    %1586 = vst [vmem:[#allocation2 + $0xf0] sm:$0xff] %v1550
    %1587 = vst [vmem:[#allocation2 + $0xf8] sm:$0xff] %v1554
    // Predicated region
    $region10: #{tpu_custom_call.1} parent=1 // pred_check
      _
    $region11: #{tpu_custom_call.1} parent=1 // pred_check_branch
      %1589 = sbr.rel (0) target = $region13
    $region12: #{tpu_custom_call.1} parent=1 // pred_region
      %1591 = vsyncadd [#allocation3], 0
      %s1592 = sshll.u32 [#allocation2], 4
      %s1593 = int_to_ptr.vmem [resolvable:$true] %s1592
      %s1594 = sshll.u32 %s2, 4
      %s1595 = int_to_ptr.hbm [resolvable:$true] %s1594
      %1600 = dma.vmem_to_hbm [thread:$0]  %s1593, 4096, %s1595, [#allocation3], 128, 128, 8
    $region13: #{tpu_custom_call.1} parent=1 // pred_fallthru
      _
    // Predicated region
    $region14: #{tpu_custom_call.1} parent=1 // pred_check
      _
    $region15: #{tpu_custom_call.1} parent=1 // pred_check_branch
      %1602 = sbr.rel (0) target = $region17
    $region16: #{tpu_custom_call.1} parent=1 // pred_region
      %1604 = dma.done [#allocation3], 4096
    $region17: #{tpu_custom_call.1} parent=1 // pred_fallthru
      _
    %1605 = vsyncpa [#allocation3], 1

// kernel: tpu_custom_call.1
$region0: #{tpu_custom_call.1}
  #allocation0 [shape = 'u32[]', space=smem, size = 0x4, offset = 0x4, fixed_abs, tag = 'smem constant byte address 0x4 - core index']
  #allocation1 [shape = 'u32[72,128]{1,0:T(1,128)}', space=vmem, size = 0x9000, scoped, tag = 'internal scratch']
  %s0 = inlined_call_operand.vmem [shape: s32[256,1], index: 0, kind: input, shape index: {}]
  %s1 = inlined_call_operand.vmem [shape: f32[128,128], index: 1, kind: input, shape index: {}]
  %s2 = inlined_call_operand.hbm [shape: f32[256,128], index: 2, kind: output, shape index: {}]
  %s3 = sld [smem:[#allocation0]]
  $region18: #{tpu_custom_call.1} parent=0
    _
  %s5 = ssub.s32 1, %s3
  %s6 = scalar_select 0, %s5, %s3
  $region1: #{tpu_custom_call.1} parent=0
    #allocation2 [shape = 'u8[131072]{0}', space=vmem, size = 0x20000, scoped, tag = 'output window, operand 0, single buffered']
    #allocation3 [shape = 's32[1]{0}', space=sflag, size = 0x4, scoped, tag = 'scoped memory for tpu_custom_call.1']
    %7 = vsyncpa [#allocation3], 0
    // Predicated region
    $region2: #{tpu_custom_call.1} parent=1 // pred_check
      _
    $region3: #{tpu_custom_call.1} parent=1 // pred_check_branch
      %9 = sbr.rel (0) target = $region5
    $region4: #{tpu_custom_call.1} parent=1 // pred_region
      _
    $region5: #{tpu_custom_call.1} parent=1 // pred_fallthru
      _
    // Predicated region
    $region6: #{tpu_custom_call.1} parent=1 // pred_check
      _
    $region7: #{tpu_custom_call.1} parent=1 // pred_check_branch
      %11 = sbr.rel (0) target = $region9
    $region8: #{tpu_custom_call.1} parent=1 // pred_region
      _
    $region9: #{tpu_custom_call.1} parent=1 // pred_fallthru
      _
    %v12 = vlaneseq
    %v13 = vand.u32 %v12, 127
    %v14 = vld [vmem:[%s0] sm:$0xff]
    %v15 = vld [vmem:[%s0 + $0x8] sm:$0xff]
    %v16 = vld [vmem:[%s0 + $0x10] sm:$0xff]
    %v17 = vld [vmem:[%s0 + $0x18] sm:$0xff]
    %v18 = vld [vmem:[%s0 + $0x20] sm:$0xff]
    %v19 = vld [vmem:[%s0 + $0x28] sm:$0xff]
    %v20 = vld [vmem:[%s0 + $0x30] sm:$0xff]
    %v21 = vld [vmem:[%s0 + $0x38] sm:$0xff]
    %v22 = vld [vmem:[%s0 + $0x40] sm:$0xff]
    %v23 = vld [vmem:[%s0 + $0x48] sm:$0xff]
    %v24 = vld [vmem:[%s0 + $0x50] sm:$0xff]
    %v25 = vld [vmem:[%s0 + $0x58] sm:$0xff]
    %v26 = vld [vmem:[%s0 + $0x60] sm:$0xff]
    %v27 = vld [vmem:[%s0 + $0x68] sm:$0xff]
    %v28 = vld [vmem:[%s0 + $0x70] sm:$0xff]
    %v29 = vld [vmem:[%s0 + $0x78] sm:$0xff]
    %v30 = vld [vmem:[%s0 + $0x80] sm:$0xff]
    %v31 = vld [vmem:[%s0 + $0x88] sm:$0xff]
    %v32 = vld [vmem:[%s0 + $0x90] sm:$0xff]
    %v33 = vld [vmem:[%s0 + $0x98] sm:$0xff]
    %v34 = vld [vmem:[%s0 + $0xa0] sm:$0xff]
    %v35 = vld [vmem:[%s0 + $0xa8] sm:$0xff]
    %v36 = vld [vmem:[%s0 + $0xb0] sm:$0xff]
    %v37 = vld [vmem:[%s0 + $0xb8] sm:$0xff]
    %v38 = vld [vmem:[%s0 + $0xc0] sm:$0xff]
    %v39 = vld [vmem:[%s0 + $0xc8] sm:$0xff]
    %v40 = vld [vmem:[%s0 + $0xd0] sm:$0xff]
    %v41 = vld [vmem:[%s0 + $0xd8] sm:$0xff]
    %v42 = vld [vmem:[%s0 + $0xe0] sm:$0xff]
    %v43 = vld [vmem:[%s0 + $0xe8] sm:$0xff]
    %v44 = vld [vmem:[%s0 + $0xf0] sm:$0xff]
    %v45 = vld [vmem:[%s0 + $0xf8] sm:$0xff]
    %46 = vset.pattern.permute.xlu0 0
    %47 = vperm.xlu0 %46, %v14
    %v48 = vpop.permute.xlu0 %47
    %49 = vset.pattern.permute.xlu0 0
    %50 = vperm.xlu0 %49, %v15
    %v51 = vpop.permute.xlu0 %50
    %52 = vset.pattern.permute.xlu0 0
    %53 = vperm.xlu0 %52, %v16
    %v54 = vpop.permute.xlu0 %53
    %55 = vset.pattern.permute.xlu0 0
    %56 = vperm.xlu0 %55, %v17
    %v57 = vpop.permute.xlu0 %56
    %58 = vset.pattern.permute.xlu0 0
    %59 = vperm.xlu0 %58, %v18
    %v60 = vpop.permute.xlu0 %59
    %61 = vset.pattern.permute.xlu0 0
    %62 = vperm.xlu0 %61, %v19
    %v63 = vpop.permute.xlu0 %62
    %64 = vset.pattern.permute.xlu0 0
    %65 = vperm.xlu0 %64, %v20
    %v66 = vpop.permute.xlu0 %65
    %67 = vset.pattern.permute.xlu0 0
    %68 = vperm.xlu0 %67, %v21
    %v69 = vpop.permute.xlu0 %68
    %70 = vset.pattern.permute.xlu0 0
    %71 = vperm.xlu0 %70, %v22
    %v72 = vpop.permute.xlu0 %71
    %73 = vset.pattern.permute.xlu0 0
    %74 = vperm.xlu0 %73, %v23
    %v75 = vpop.permute.xlu0 %74
    %76 = vset.pattern.permute.xlu0 0
    %77 = vperm.xlu0 %76, %v24
    %v78 = vpop.permute.xlu0 %77
    %79 = vset.pattern.permute.xlu0 0
    %80 = vperm.xlu0 %79, %v25
    %v81 = vpop.permute.xlu0 %80
    %82 = vset.pattern.permute.xlu0 0
    %83 = vperm.xlu0 %82, %v26
    %v84 = vpop.permute.xlu0 %83
    %85 = vset.pattern.permute.xlu0 0
    %86 = vperm.xlu0 %85, %v27
    %v87 = vpop.permute.xlu0 %86
    %88 = vset.pattern.permute.xlu0 0
    %89 = vperm.xlu0 %88, %v28
    %v90 = vpop.permute.xlu0 %89
    %91 = vset.pattern.permute.xlu0 0
    %92 = vperm.xlu0 %91, %v29
    %v93 = vpop.permute.xlu0 %92
    %94 = vset.pattern.permute.xlu0 0
    %95 = vperm.xlu0 %94, %v30
    %v96 = vpop.permute.xlu0 %95
    %97 = vset.pattern.permute.xlu0 0
    %98 = vperm.xlu0 %97, %v31
    %v99 = vpop.permute.xlu0 %98
    %100 = vset.pattern.permute.xlu0 0
    %101 = vperm.xlu0 %100, %v32
    %v102 = vpop.permute.xlu0 %101
    %103 = vset.pattern.permute.xlu0 0
    %104 = vperm.xlu0 %103, %v33
    %v105 = vpop.permute.xlu0 %104
    %106 = vset.pattern.permute.xlu0 0
    %107 = vperm.xlu0 %106, %v34
    %v108 = vpop.permute.xlu0 %107
    %109 = vset.pattern.permute.xlu0 0
    %110 = vperm.xlu0 %109, %v35
    %v111 = vpop.permute.xlu0 %110
    %112 = vset.pattern.permute.xlu0 0
    %113 = vperm.xlu0 %112, %v36
    %v114 = vpop.permute.xlu0 %113
    %115 = vset.pattern.permute.xlu0 0
    %116 = vperm.xlu0 %115, %v37
    %v117 = vpop.permute.xlu0 %116
    %118 = vset.pattern.permute.xlu0 0
    %119 = vperm.xlu0 %118, %v38
    %v120 = vpop.permute.xlu0 %119
    %121 = vset.pattern.permute.xlu0 0
    %122 = vperm.xlu0 %121, %v39
    %v123 = vpop.permute.xlu0 %122
    %124 = vset.pattern.permute.xlu0 0
    %125 = vperm.xlu0 %124, %v40
    %v126 = vpop.permute.xlu0 %125
    %127 = vset.pattern.permute.xlu0 0
    %128 = vperm.xlu0 %127, %v41
    %v129 = vpop.permute.xlu0 %128
    %130 = vset.pattern.permute.xlu0 0
    %131 = vperm.xlu0 %130, %v42
    %v132 = vpop.permute.xlu0 %131
    %133 = vset.pattern.permute.xlu0 0
    %134 = vperm.xlu0 %133, %v43
    %v135 = vpop.permute.xlu0 %134
    %136 = vset.pattern.permute.xlu0 0
    %137 = vperm.xlu0 %136, %v44
    %v138 = vpop.permute.xlu0 %137
    %139 = vset.pattern.permute.xlu0 0
    %140 = vperm.xlu0 %139, %v45
    %v141 = vpop.permute.xlu0 %140
    %vm142 = vcmp.eq.s32.totalorder %v48, %v13
    %vm143 = vcmp.eq.s32.totalorder %v51, %v13
    %vm144 = vcmp.eq.s32.totalorder %v54, %v13
    %vm145 = vcmp.eq.s32.totalorder %v57, %v13
    %vm146 = vcmp.eq.s32.totalorder %v60, %v13
    %vm147 = vcmp.eq.s32.totalorder %v63, %v13
    %vm148 = vcmp.eq.s32.totalorder %v66, %v13
    %vm149 = vcmp.eq.s32.totalorder %v69, %v13
    %vm150 = vcmp.eq.s32.totalorder %v72, %v13
    %vm151 = vcmp.eq.s32.totalorder %v75, %v13
    %vm152 = vcmp.eq.s32.totalorder %v78, %v13
    %vm153 = vcmp.eq.s32.totalorder %v81, %v13
    %vm154 = vcmp.eq.s32.totalorder %v84, %v13
    %vm155 = vcmp.eq.s32.totalorder %v87, %v13
    %vm156 = vcmp.eq.s32.totalorder %v90, %v13
    %vm157 = vcmp.eq.s32.totalorder %v93, %v13
    %vm158 = vcmp.eq.s32.totalorder %v96, %v13
    %vm159 = vcmp.eq.s32.totalorder %v99, %v13
    %vm160 = vcmp.eq.s32.totalorder %v102, %v13
    %vm161 = vcmp.eq.s32.totalorder %v105, %v13
    %vm162 = vcmp.eq.s32.totalorder %v108, %v13
    %vm163 = vcmp.eq.s32.totalorder %v111, %v13
    %vm164 = vcmp.eq.s32.totalorder %v114, %v13
    %vm165 = vcmp.eq.s32.totalorder %v117, %v13
    %vm166 = vcmp.eq.s32.totalorder %v120, %v13
    %vm167 = vcmp.eq.s32.totalorder %v123, %v13
    %vm168 = vcmp.eq.s32.totalorder %v126, %v13
    %vm169 = vcmp.eq.s32.totalorder %v129, %v13
    %vm170 = vcmp.eq.s32.totalorder %v132, %v13
    %vm171 = vcmp.eq.s32.totalorder %v135, %v13
    %vm172 = vcmp.eq.s32.totalorder %v138, %v13
    %vm173 = vcmp.eq.s32.totalorder %v141, %v13
    %v174 = vsel %vm142, 1, 0
    %v175 = vsel %vm143, 1, 0
    %v176 = vsel %vm144, 1, 0
    %v177 = vsel %vm145, 1, 0
    %v178 = vsel %vm146, 1, 0
    %v179 = vsel %vm147, 1, 0
    %v180 = vsel %vm148, 1, 0
    %v181 = vsel %vm149, 1, 0
    %v182 = vsel %vm150, 1, 0
    %v183 = vsel %vm151, 1, 0
    %v184 = vsel %vm152, 1, 0
    %v185 = vsel %vm153, 1, 0
    %v186 = vsel %vm154, 1, 0
    %v187 = vsel %vm155, 1, 0
    %v188 = vsel %vm156, 1, 0
    %v189 = vsel %vm157, 1, 0
    %v190 = vsel %vm158, 1, 0
    %v191 = vsel %vm159, 1, 0
    %v192 = vsel %vm160, 1, 0
    %v193 = vsel %vm161, 1, 0
    %v194 = vsel %vm162, 1, 0
    %v195 = vsel %vm163, 1, 0
    %v196 = vsel %vm164, 1, 0
    %v197 = vsel %vm165, 1, 0
    %v198 = vsel %vm166, 1, 0
    %v199 = vsel %vm167, 1, 0
    %v200 = vsel %vm168, 1, 0
    %v201 = vsel %vm169, 1, 0
    %v202 = vsel %vm170, 1, 0
    %v203 = vsel %vm171, 1, 0
    %v204 = vsel %vm172, 1, 0
    %v205 = vsel %vm173, 1, 0
    %v206 = vcvt.s32.f32 %v174
    %v207 = vcvt.s32.f32 %v175
    %v208 = vcvt.s32.f32 %v176
    %v209 = vcvt.s32.f32 %v177
    %v210 = vcvt.s32.f32 %v178
    %v211 = vcvt.s32.f32 %v179
    %v212 = vcvt.s32.f32 %v180
    %v213 = vcvt.s32.f32 %v181
    %v214 = vcvt.s32.f32 %v182
    %v215 = vcvt.s32.f32 %v183
    %v216 = vcvt.s32.f32 %v184
    %v217 = vcvt.s32.f32 %v185
    %v218 = vcvt.s32.f32 %v186
    %v219 = vcvt.s32.f32 %v187
    %v220 = vcvt.s32.f32 %v188
    %v221 = vcvt.s32.f32 %v189
    %v222 = vcvt.s32.f32 %v190
    %v223 = vcvt.s32.f32 %v191
    %v224 = vcvt.s32.f32 %v192
    %v225 = vcvt.s32.f32 %v193
    %v226 = vcvt.s32.f32 %v194
    %v227 = vcvt.s32.f32 %v195
    %v228 = vcvt.s32.f32 %v196
    %v229 = vcvt.s32.f32 %v197
    %v230 = vcvt.s32.f32 %v198
    %v231 = vcvt.s32.f32 %v199
    %v232 = vcvt.s32.f32 %v200
    %v233 = vcvt.s32.f32 %v201
    %v234 = vcvt.s32.f32 %v202
    %v235 = vcvt.s32.f32 %v203
    %v236 = vcvt.s32.f32 %v204
    %v237 = vcvt.s32.f32 %v205
    %v238 = vld [vmem:[%s1] sm:$0xff]
    %v239 = vld [vmem:[%s1 + $0x8] sm:$0xff]
    %v240 = vld [vmem:[%s1 + $0x10] sm:$0xff]
    %v241 = vld [vmem:[%s1 + $0x18] sm:$0xff]
    %v242 = vld [vmem:[%s1 + $0x20] sm:$0xff]
    %v243 = vld [vmem:[%s1 + $0x28] sm:$0xff]
    %v244 = vld [vmem:[%s1 + $0x30] sm:$0xff]
    %v245 = vld [vmem:[%s1 + $0x38] sm:$0xff]
    %v246 = vld [vmem:[%s1 + $0x40] sm:$0xff]
    %v247 = vld [vmem:[%s1 + $0x48] sm:$0xff]
    %v248 = vld [vmem:[%s1 + $0x50] sm:$0xff]
    %v249 = vld [vmem:[%s1 + $0x58] sm:$0xff]
    %v250 = vld [vmem:[%s1 + $0x60] sm:$0xff]
    %v251 = vld [vmem:[%s1 + $0x68] sm:$0xff]
    %v252 = vld [vmem:[%s1 + $0x70] sm:$0xff]
    %v253 = vld [vmem:[%s1 + $0x78] sm:$0xff]
    %v254 = vand.u32 %v253, 4294901760
    %255 = vmatpush.msra.mxu0 %v254
    %v256 = vand.u32 %v252, 4294901760
    %257 = vmatpush.msra.mxu0 %v256
    %v258 = vand.u32 %v251, 4294901760
    %259 = vmatpush.msra.mxu0 %v258
    %v260 = vand.u32 %v250, 4294901760
    %261 = vmatpush.msra.mxu0 %v260
    %v262 = vand.u32 %v249, 4294901760
    %263 = vmatpush.msra.mxu0 %v262
    %v264 = vand.u32 %v248, 4294901760
    %265 = vmatpush.msra.mxu0 %v264
    %v266 = vand.u32 %v247, 4294901760
    %267 = vmatpush.msra.mxu0 %v266
    %v268 = vand.u32 %v246, 4294901760
    %269 = vmatpush.msra.mxu0 %v268
    %v270 = vand.u32 %v245, 4294901760
    %271 = vmatpush.msra.mxu0 %v270
    %v272 = vand.u32 %v244, 4294901760
    %273 = vmatpush.msra.mxu0 %v272
    %v274 = vand.u32 %v243, 4294901760
    %275 = vmatpush.msra.mxu0 %v274
    %v276 = vand.u32 %v242, 4294901760
    %277 = vmatpush.msra.mxu0 %v276
    %v278 = vand.u32 %v241, 4294901760
    %279 = vmatpush.msra.mxu0 %v278
    %v280 = vand.u32 %v240, 4294901760
    %281 = vmatpush.msra.mxu0 %v280
    %v282 = vand.u32 %v239, 4294901760
    %283 = vmatpush.msra.mxu0 %v282
    %v284 = vand.u32 %v238, 4294901760
    %285 = vmatpush.msra.mxu0 %v284
    %v286 = vand.u32 %v206, 4294901760
    %v287 = vsub.f32 %v206, %v286
    %v288 = vand.u32 %v287, 4294901760
    %v289 = vsub.f32 %v287, %v288
    %v290 = vand.u32 %v289, 4294901760
    %291 = vmatmul.f32.gmra.mxu0 %v290
    %v292 = vpop.f32.mrf.mxu0
    %v293 = vadd.f32 0.0, %v292
    %v294 = vand.u32 %v207, 4294901760
    %v295 = vsub.f32 %v207, %v294
    %v296 = vand.u32 %v295, 4294901760
    %v297 = vsub.f32 %v295, %v296
    %v298 = vand.u32 %v297, 4294901760
    %299 = vmatmul.f32.gmra.mxu0 %v298
    %v300 = vpop.f32.mrf.mxu0
    %v301 = vadd.f32 0.0, %v300
    %v302 = vand.u32 %v208, 4294901760
    %v303 = vsub.f32 %v208, %v302
    %v304 = vand.u32 %v303, 4294901760
    %v305 = vsub.f32 %v303, %v304
    %v306 = vand.u32 %v305, 4294901760
    %307 = vmatmul.f32.gmra.mxu0 %v306
    %v308 = vpop.f32.mrf.mxu0
    %v309 = vadd.f32 0.0, %v308
    %v310 = vand.u32 %v209, 4294901760
    %v311 = vsub.f32 %v209, %v310
    %v312 = vand.u32 %v311, 4294901760
    %v313 = vsub.f32 %v311, %v312
    %v314 = vand.u32 %v313, 4294901760
    %315 = vmatmul.f32.gmra.mxu0 %v314
    %v316 = vpop.f32.mrf.mxu0
    %v317 = vadd.f32 0.0, %v316
    %v318 = vand.u32 %v210, 4294901760
    %v319 = vsub.f32 %v210, %v318
    %v320 = vand.u32 %v319, 4294901760
    %v321 = vsub.f32 %v319, %v320
    %v322 = vand.u32 %v321, 4294901760
    %323 = vmatmul.f32.gmra.mxu0 %v322
    %v324 = vpop.f32.mrf.mxu0
    %v325 = vadd.f32 0.0, %v324
    %v326 = vand.u32 %v211, 4294901760
    %v327 = vsub.f32 %v211, %v326
    %v328 = vand.u32 %v327, 4294901760
    %v329 = vsub.f32 %v327, %v328
    %v330 = vand.u32 %v329, 4294901760
    %331 = vmatmul.f32.gmra.mxu0 %v330
    %v332 = vpop.f32.mrf.mxu0
    %v333 = vadd.f32 0.0, %v332
    %v334 = vand.u32 %v212, 4294901760
    %v335 = vsub.f32 %v212, %v334
    %v336 = vand.u32 %v335, 4294901760
    %v337 = vsub.f32 %v335, %v336
    %v338 = vand.u32 %v337, 4294901760
    %339 = vmatmul.f32.gmra.mxu0 %v338
    %v340 = vpop.f32.mrf.mxu0
    %v341 = vadd.f32 0.0, %v340
    %v342 = vand.u32 %v213, 4294901760
    %v343 = vsub.f32 %v213, %v342
    %v344 = vand.u32 %v343, 4294901760
    %v345 = vsub.f32 %v343, %v344
    %v346 = vand.u32 %v345, 4294901760
    %347 = vmatmul.f32.gmra.mxu0 %v346
    %v348 = vpop.f32.mrf.mxu0
    %v349 = vadd.f32 0.0, %v348
    %v350 = vand.u32 %v214, 4294901760
    %v351 = vsub.f32 %v214, %v350
    %v352 = vand.u32 %v351, 4294901760
    %v353 = vsub.f32 %v351, %v352
    %v354 = vand.u32 %v353, 4294901760
    %355 = vmatmul.f32.gmra.mxu0 %v354
    %v356 = vpop.f32.mrf.mxu0
    %v357 = vadd.f32 0.0, %v356
    %v358 = vand.u32 %v215, 4294901760
    %v359 = vsub.f32 %v215, %v358
    %v360 = vand.u32 %v359, 4294901760
    %v361 = vsub.f32 %v359, %v360
    %v362 = vand.u32 %v361, 4294901760
    %363 = vmatmul.f32.gmra.mxu0 %v362
    %v364 = vpop.f32.mrf.mxu0
    %v365 = vadd.f32 0.0, %v364
    %v366 = vand.u32 %v216, 4294901760
    %v367 = vsub.f32 %v216, %v366
    %v368 = vand.u32 %v367, 4294901760
    %v369 = vsub.f32 %v367, %v368
    %v370 = vand.u32 %v369, 4294901760
    %371 = vmatmul.f32.gmra.mxu0 %v370
    %v372 = vpop.f32.mrf.mxu0
    %v373 = vadd.f32 0.0, %v372
    %v374 = vand.u32 %v217, 4294901760
    %v375 = vsub.f32 %v217, %v374
    %v376 = vand.u32 %v375, 4294901760
    %v377 = vsub.f32 %v375, %v376
    %v378 = vand.u32 %v377, 4294901760
    %379 = vmatmul.f32.gmra.mxu0 %v378
    %v380 = vpop.f32.mrf.mxu0
    %v381 = vadd.f32 0.0, %v380
    %v382 = vand.u32 %v218, 4294901760
    %v383 = vsub.f32 %v218, %v382
    %v384 = vand.u32 %v383, 4294901760
    %v385 = vsub.f32 %v383, %v384
    %v386 = vand.u32 %v385, 4294901760
    %387 = vmatmul.f32.gmra.mxu0 %v386
    %v388 = vpop.f32.mrf.mxu0
    %v389 = vadd.f32 0.0, %v388
    %v390 = vand.u32 %v219, 4294901760
    %v391 = vsub.f32 %v219, %v390
    %v392 = vand.u32 %v391, 4294901760
    %v393 = vsub.f32 %v391, %v392
    %v394 = vand.u32 %v393, 4294901760
    %395 = vmatmul.f32.gmra.mxu0 %v394
    %v396 = vpop.f32.mrf.mxu0
    %v397 = vadd.f32 0.0, %v396
    %v398 = vand.u32 %v220, 4294901760
    %v399 = vsub.f32 %v220, %v398
    %v400 = vand.u32 %v399, 4294901760
    %v401 = vsub.f32 %v399, %v400
    %v402 = vand.u32 %v401, 4294901760
    %403 = vmatmul.f32.gmra.mxu0 %v402
    %v404 = vpop.f32.mrf.mxu0
    %v405 = vadd.f32 0.0, %v404
    %v406 = vand.u32 %v221, 4294901760
    %v407 = vsub.f32 %v221, %v406
    %v408 = vand.u32 %v407, 4294901760
    %v409 = vsub.f32 %v407, %v408
    %v410 = vand.u32 %v409, 4294901760
    %411 = vmatmul.f32.gmra.mxu0 %v410
    %v412 = vpop.f32.mrf.mxu0
    %v413 = vadd.f32 0.0, %v412
    %v414 = vand.u32 %v222, 4294901760
    %v415 = vsub.f32 %v222, %v414
    %v416 = vand.u32 %v415, 4294901760
    %v417 = vsub.f32 %v415, %v416
    %v418 = vand.u32 %v417, 4294901760
    %419 = vmatmul.f32.gmra.mxu0 %v418
    %v420 = vpop.f32.mrf.mxu0
    %v421 = vadd.f32 0.0, %v420
    %v422 = vand.u32 %v223, 4294901760
    %v423 = vsub.f32 %v223, %v422
    %v424 = vand.u32 %v423, 4294901760
    %v425 = vsub.f32 %v423, %v424
    %v426 = vand.u32 %v425, 4294901760
    %427 = vmatmul.f32.gmra.mxu0 %v426
    %v428 = vpop.f32.mrf.mxu0
    %v429 = vadd.f32 0.0, %v428
    %v430 = vand.u32 %v224, 4294901760
    %v431 = vsub.f32 %v224, %v430
    %v432 = vand.u32 %v431, 4294901760
    %v433 = vsub.f32 %v431, %v432
    %v434 = vand.u32 %v433, 4294901760
    %435 = vmatmul.f32.gmra.mxu0 %v434
    %v436 = vpop.f32.mrf.mxu0
    %v437 = vadd.f32 0.0, %v436
    %v438 = vand.u32 %v225, 4294901760
    %v439 = vsub.f32 %v225, %v438
    %v440 = vand.u32 %v439, 4294901760
    %v441 = vsub.f32 %v439, %v440
    %v442 = vand.u32 %v441, 4294901760
    %443 = vmatmul.f32.gmra.mxu0 %v442
    %v444 = vpop.f32.mrf.mxu0
    %v445 = vadd.f32 0.0, %v444
    %v446 = vand.u32 %v226, 4294901760
    %v447 = vsub.f32 %v226, %v446
    %v448 = vand.u32 %v447, 4294901760
    %v449 = vsub.f32 %v447, %v448
    %v450 = vand.u32 %v449, 4294901760
    %451 = vmatmul.f32.gmra.mxu0 %v450
    %v452 = vpop.f32.mrf.mxu0
    %v453 = vadd.f32 0.0, %v452
    %v454 = vand.u32 %v227, 4294901760
    %v455 = vsub.f32 %v227, %v454
    %v456 = vand.u32 %v455, 4294901760
    %v457 = vsub.f32 %v455, %v456
    %v458 = vand.u32 %v457, 4294901760
    %459 = vmatmul.f32.gmra.mxu0 %v458
    %v460 = vpop.f32.mrf.mxu0
    %v461 = vadd.f32 0.0, %v460
    %v462 = vand.u32 %v228, 4294901760
    %v463 = vsub.f32 %v228, %v462
    %v464 = vand.u32 %v463, 4294901760
    %v465 = vsub.f32 %v463, %v464
    %v466 = vand.u32 %v465, 4294901760
    %467 = vmatmul.f32.gmra.mxu0 %v466
    %v468 = vpop.f32.mrf.mxu0
    %v469 = vadd.f32 0.0, %v468
    %v470 = vand.u32 %v229, 4294901760
    %v471 = vsub.f32 %v229, %v470
    %v472 = vand.u32 %v471, 4294901760
    %v473 = vsub.f32 %v471, %v472
    %v474 = vand.u32 %v473, 4294901760
    %475 = vmatmul.f32.gmra.mxu0 %v474
    %v476 = vpop.f32.mrf.mxu0
    %v477 = vadd.f32 0.0, %v476
    %v478 = vand.u32 %v230, 4294901760
    %v479 = vsub.f32 %v230, %v478
    %v480 = vand.u32 %v479, 4294901760
    %v481 = vsub.f32 %v479, %v480
    %v482 = vand.u32 %v481, 4294901760
    %483 = vmatmul.f32.gmra.mxu0 %v482
    %v484 = vpop.f32.mrf.mxu0
    %v485 = vadd.f32 0.0, %v484
    %v486 = vand.u32 %v231, 4294901760
    %v487 = vsub.f32 %v231, %v486
    %v488 = vand.u32 %v487, 4294901760
    %v489 = vsub.f32 %v487, %v488
    %v490 = vand.u32 %v489, 4294901760
    %491 = vmatmul.f32.gmra.mxu0 %v490
    %v492 = vpop.f32.mrf.mxu0
    %v493 = vadd.f32 0.0, %v492
    %v494 = vand.u32 %v232, 4294901760
    %v495 = vsub.f32 %v232, %v494
    %v496 = vand.u32 %v495, 4294901760
    %v497 = vsub.f32 %v495, %v496
    %v498 = vand.u32 %v497, 4294901760
    %499 = vmatmul.f32.gmra.mxu0 %v498
    %v500 = vpop.f32.mrf.mxu0
    %v501 = vadd.f32 0.0, %v500
    %v502 = vand.u32 %v233, 4294901760
    %v503 = vsub.f32 %v233, %v502
    %v504 = vand.u32 %v503, 4294901760
    %v505 = vsub.f32 %v503, %v504
    %v506 = vand.u32 %v505, 4294901760
    %507 = vmatmul.f32.gmra.mxu0 %v506
    %v508 = vpop.f32.mrf.mxu0
    %v509 = vadd.f32 0.0, %v508
    %v510 = vand.u32 %v234, 4294901760
    %v511 = vsub.f32 %v234, %v510
    %v512 = vand.u32 %v511, 4294901760
    %v513 = vsub.f32 %v511, %v512
    %v514 = vand.u32 %v513, 4294901760
    %515 = vmatmul.f32.gmra.mxu0 %v514
    %v516 = vpop.f32.mrf.mxu0
    %v517 = vadd.f32 0.0, %v516
    %v518 = vand.u32 %v235, 4294901760
    %v519 = vsub.f32 %v235, %v518
    %v520 = vand.u32 %v519, 4294901760
    %v521 = vsub.f32 %v519, %v520
    %v522 = vand.u32 %v521, 4294901760
    %523 = vmatmul.f32.gmra.mxu0 %v522
    %v524 = vpop.f32.mrf.mxu0
    %v525 = vadd.f32 0.0, %v524
    %v526 = vand.u32 %v236, 4294901760
    %v527 = vsub.f32 %v236, %v526
    %v528 = vand.u32 %v527, 4294901760
    %v529 = vsub.f32 %v527, %v528
    %v530 = vand.u32 %v529, 4294901760
    %531 = vmatmul.f32.gmra.mxu0 %v530
    %v532 = vpop.f32.mrf.mxu0
    %v533 = vadd.f32 0.0, %v532
    %v534 = vand.u32 %v237, 4294901760
    %v535 = vsub.f32 %v237, %v534
    %v536 = vand.u32 %v535, 4294901760
    %v537 = vsub.f32 %v535, %v536
    %v538 = vand.u32 %v537, 4294901760
    %539 = vmatmul.f32.gmra.mxu0 %v538
    %v540 = vpop.f32.mrf.mxu0
    %v541 = vadd.f32 0.0, %v540
    %542 = vdwg.mxu0
    %v543 = vand.u32 %v253, 4294901760
    %v544 = vsub.f32 %v253, %v543
    %v545 = vand.u32 %v544, 4294901760
    %v546 = vsub.f32 %v544, %v545
    %v547 = vand.u32 %v546, 4294901760
    %548 = vmatpush.msra.mxu0 %v547
    %v549 = vand.u32 %v252, 4294901760
    %v550 = vsub.f32 %v252, %v549
    %v551 = vand.u32 %v550, 4294901760
    %v552 = vsub.f32 %v550, %v551
    %v553 = vand.u32 %v552, 4294901760
    %554 = vmatpush.msra.mxu0 %v553
    %v555 = vand.u32 %v251, 4294901760
    %v556 = vsub.f32 %v251, %v555
    %v557 = vand.u32 %v556, 4294901760
    %v558 = vsub.f32 %v556, %v557
    %v559 = vand.u32 %v558, 4294901760
    %560 = vmatpush.msra.mxu0 %v559
    %v561 = vand.u32 %v250, 4294901760
    %v562 = vsub.f32 %v250, %v561
    %v563 = vand.u32 %v562, 4294901760
    %v564 = vsub.f32 %v562, %v563
    %v565 = vand.u32 %v564, 4294901760
    %566 = vmatpush.msra.mxu0 %v565
    %v567 = vand.u32 %v249, 4294901760
    %v568 = vsub.f32 %v249, %v567
    %v569 = vand.u32 %v568, 4294901760
    %v570 = vsub.f32 %v568, %v569
    %v571 = vand.u32 %v570, 4294901760
    %572 = vmatpush.msra.mxu0 %v571
    %v573 = vand.u32 %v248, 4294901760
    %v574 = vsub.f32 %v248, %v573
    %v575 = vand.u32 %v574, 4294901760
    %v576 = vsub.f32 %v574, %v575
    %v577 = vand.u32 %v576, 4294901760
    %578 = vmatpush.msra.mxu0 %v577
    %v579 = vand.u32 %v247, 4294901760
    %v580 = vsub.f32 %v247, %v579
    %v581 = vand.u32 %v580, 4294901760
    %v582 = vsub.f32 %v580, %v581
    %v583 = vand.u32 %v582, 4294901760
    %584 = vmatpush.msra.mxu0 %v583
    %v585 = vand.u32 %v246, 4294901760
    %v586 = vsub.f32 %v246, %v585
    %v587 = vand.u32 %v586, 4294901760
    %v588 = vsub.f32 %v586, %v587
    %v589 = vand.u32 %v588, 4294901760
    %590 = vmatpush.msra.mxu0 %v589
    %v591 = vand.u32 %v245, 4294901760
    %v592 = vsub.f32 %v245, %v591
    %v593 = vand.u32 %v592, 4294901760
    %v594 = vsub.f32 %v592, %v593
    %v595 = vand.u32 %v594, 4294901760
    %596 = vmatpush.msra.mxu0 %v595
    %v597 = vand.u32 %v244, 4294901760
    %v598 = vsub.f32 %v244, %v597
    %v599 = vand.u32 %v598, 4294901760
    %v600 = vsub.f32 %v598, %v599
    %v601 = vand.u32 %v600, 4294901760
    %602 = vmatpush.msra.mxu0 %v601
    %v603 = vand.u32 %v243, 4294901760
    %v604 = vsub.f32 %v243, %v603
    %v605 = vand.u32 %v604, 4294901760
    %v606 = vsub.f32 %v604, %v605
    %v607 = vand.u32 %v606, 4294901760
    %608 = vmatpush.msra.mxu0 %v607
    %v609 = vand.u32 %v242, 4294901760
    %v610 = vsub.f32 %v242, %v609
    %v611 = vand.u32 %v610, 4294901760
    %v612 = vsub.f32 %v610, %v611
    %v613 = vand.u32 %v612, 4294901760
    %614 = vmatpush.msra.mxu0 %v613
    %v615 = vand.u32 %v241, 4294901760
    %v616 = vsub.f32 %v241, %v615
    %v617 = vand.u32 %v616, 4294901760
    %v618 = vsub.f32 %v616, %v617
    %v619 = vand.u32 %v618, 4294901760
    %620 = vmatpush.msra.mxu0 %v619
    %v621 = vand.u32 %v240, 4294901760
    %v622 = vsub.f32 %v240, %v621
    %v623 = vand.u32 %v622, 4294901760
    %v624 = vsub.f32 %v622, %v623
    %v625 = vand.u32 %v624, 4294901760
    %626 = vmatpush.msra.mxu0 %v625
    %v627 = vand.u32 %v239, 4294901760
    %v628 = vsub.f32 %v239, %v627
    %v629 = vand.u32 %v628, 4294901760
    %v630 = vsub.f32 %v628, %v629
    %v631 = vand.u32 %v630, 4294901760
    %632 = vmatpush.msra.mxu0 %v631
    %v633 = vand.u32 %v238, 4294901760
    %v634 = vsub.f32 %v238, %v633
    %v635 = vand.u32 %v634, 4294901760
    %v636 = vsub.f32 %v634, %v635
    %v637 = vand.u32 %v636, 4294901760
    %638 = vmatpush.msra.mxu0 %v637
    %v639 = vand.u32 %v206, 4294901760
    %640 = vmatmul.f32.gmra.mxu0 %v639
    %v641 = vpop.f32.mrf.mxu0
    %v642 = vadd.f32 %v293, %v641
    %v643 = vand.u32 %v207, 4294901760
    %644 = vmatmul.f32.gmra.mxu0 %v643
    %v645 = vpop.f32.mrf.mxu0
    %v646 = vadd.f32 %v301, %v645
    %v647 = vand.u32 %v208, 4294901760
    %648 = vmatmul.f32.gmra.mxu0 %v647
    %v649 = vpop.f32.mrf.mxu0
    %v650 = vadd.f32 %v309, %v649
    %v651 = vand.u32 %v209, 4294901760
    %652 = vmatmul.f32.gmra.mxu0 %v651
    %v653 = vpop.f32.mrf.mxu0
    %v654 = vadd.f32 %v317, %v653
    %v655 = vand.u32 %v210, 4294901760
    %656 = vmatmul.f32.gmra.mxu0 %v655
    %v657 = vpop.f32.mrf.mxu0
    %v658 = vadd.f32 %v325, %v657
    %v659 = vand.u32 %v211, 4294901760
    %660 = vmatmul.f32.gmra.mxu0 %v659
    %v661 = vpop.f32.mrf.mxu0
    %v662 = vadd.f32 %v333, %v661
    %v663 = vand.u32 %v212, 4294901760
    %664 = vmatmul.f32.gmra.mxu0 %v663
    %v665 = vpop.f32.mrf.mxu0
    %v666 = vadd.f32 %v341, %v665
    %v667 = vand.u32 %v213, 4294901760
    %668 = vmatmul.f32.gmra.mxu0 %v667
    %v669 = vpop.f32.mrf.mxu0
    %v670 = vadd.f32 %v349, %v669
    %v671 = vand.u32 %v214, 4294901760
    %672 = vmatmul.f32.gmra.mxu0 %v671
    %v673 = vpop.f32.mrf.mxu0
    %v674 = vadd.f32 %v357, %v673
    %v675 = vand.u32 %v215, 4294901760
    %676 = vmatmul.f32.gmra.mxu0 %v675
    %v677 = vpop.f32.mrf.mxu0
    %v678 = vadd.f32 %v365, %v677
    %v679 = vand.u32 %v216, 4294901760
    %680 = vmatmul.f32.gmra.mxu0 %v679
    %v681 = vpop.f32.mrf.mxu0
    %v682 = vadd.f32 %v373, %v681
    %v683 = vand.u32 %v217, 4294901760
    %684 = vmatmul.f32.gmra.mxu0 %v683
    %v685 = vpop.f32.mrf.mxu0
    %v686 = vadd.f32 %v381, %v685
    %v687 = vand.u32 %v218, 4294901760
    %688 = vmatmul.f32.gmra.mxu0 %v687
    %v689 = vpop.f32.mrf.mxu0
    %v690 = vadd.f32 %v389, %v689
    %v691 = vand.u32 %v219, 4294901760
    %692 = vmatmul.f32.gmra.mxu0 %v691
    %v693 = vpop.f32.mrf.mxu0
    %v694 = vadd.f32 %v397, %v693
    %v695 = vand.u32 %v220, 4294901760
    %696 = vmatmul.f32.gmra.mxu0 %v695
    %v697 = vpop.f32.mrf.mxu0
    %v698 = vadd.f32 %v405, %v697
    %v699 = vand.u32 %v221, 4294901760
    %700 = vmatmul.f32.gmra.mxu0 %v699
    %v701 = vpop.f32.mrf.mxu0
    %v702 = vadd.f32 %v413, %v701
    %v703 = vand.u32 %v222, 4294901760
    %704 = vmatmul.f32.gmra.mxu0 %v703
    %v705 = vpop.f32.mrf.mxu0
    %v706 = vadd.f32 %v421, %v705
    %v707 = vand.u32 %v223, 4294901760
    %708 = vmatmul.f32.gmra.mxu0 %v707
    %v709 = vpop.f32.mrf.mxu0
    %v710 = vadd.f32 %v429, %v709
    %v711 = vand.u32 %v224, 4294901760
    %712 = vmatmul.f32.gmra.mxu0 %v711
    %v713 = vpop.f32.mrf.mxu0
    %v714 = vadd.f32 %v437, %v713
    %v715 = vand.u32 %v225, 4294901760
    %716 = vmatmul.f32.gmra.mxu0 %v715
    %v717 = vpop.f32.mrf.mxu0
    %v718 = vadd.f32 %v445, %v717
    %v719 = vand.u32 %v226, 4294901760
    %720 = vmatmul.f32.gmra.mxu0 %v719
    %v721 = vpop.f32.mrf.mxu0
    %v722 = vadd.f32 %v453, %v721
    %v723 = vand.u32 %v227, 4294901760
    %724 = vmatmul.f32.gmra.mxu0 %v723
    %v725 = vpop.f32.mrf.mxu0
    %v726 = vadd.f32 %v461, %v725
    %v727 = vand.u32 %v228, 4294901760
    %728 = vmatmul.f32.gmra.mxu0 %v727
    %v729 = vpop.f32.mrf.mxu0
    %v730 = vadd.f32 %v469, %v729
    %v731 = vand.u32 %v229, 4294901760
    %732 = vmatmul.f32.gmra.mxu0 %v731
    %v733 = vpop.f32.mrf.mxu0
    %v734 = vadd.f32 %v477, %v733
    %v735 = vand.u32 %v230, 4294901760
    %736 = vmatmul.f32.gmra.mxu0 %v735
    %v737 = vpop.f32.mrf.mxu0
    %v738 = vadd.f32 %v485, %v737
    %v739 = vand.u32 %v231, 4294901760
    %740 = vmatmul.f32.gmra.mxu0 %v739
    %v741 = vpop.f32.mrf.mxu0
    %v742 = vadd.f32 %v493, %v741
    %v743 = vand.u32 %v232, 4294901760
    %744 = vmatmul.f32.gmra.mxu0 %v743
    %v745 = vpop.f32.mrf.mxu0
    %v746 = vadd.f32 %v501, %v745
    %v747 = vand.u32 %v233, 4294901760
    %748 = vmatmul.f32.gmra.mxu0 %v747
    %v749 = vpop.f32.mrf.mxu0
    %v750 = vadd.f32 %v509, %v749
    %v751 = vand.u32 %v234, 4294901760
    %752 = vmatmul.f32.gmra.mxu0 %v751
    %v753 = vpop.f32.mrf.mxu0
    %v754 = vadd.f32 %v517, %v753
    %v755 = vand.u32 %v235, 4294901760
    %756 = vmatmul.f32.gmra.mxu0 %v755
    %v757 = vpop.f32.mrf.mxu0
    %v758 = vadd.f32 %v525, %v757
    %v759 = vand.u32 %v236, 4294901760
    %760 = vmatmul.f32.gmra.mxu0 %v759
    %v761 = vpop.f32.mrf.mxu0
    %v762 = vadd.f32 %v533, %v761
    %v763 = vand.u32 %v237, 4294901760
    %764 = vmatmul.f32.gmra.mxu0 %v763
    %v765 = vpop.f32.mrf.mxu0
    %v766 = vadd.f32 %v541, %v765
    %767 = vdwg.mxu0
    %v768 = vand.u32 %v253, 4294901760
    %v769 = vsub.f32 %v253, %v768
    %770 = vmatpush.msra.mxu0 %v769
    %v771 = vand.u32 %v252, 4294901760
    %v772 = vsub.f32 %v252, %v771
    %773 = vmatpush.msra.mxu0 %v772
    %v774 = vand.u32 %v251, 4294901760
    %v775 = vsub.f32 %v251, %v774
    %776 = vmatpush.msra.mxu0 %v775
    %v777 = vand.u32 %v250, 4294901760
    %v778 = vsub.f32 %v250, %v777
    %779 = vmatpush.msra.mxu0 %v778
    %v780 = vand.u32 %v249, 4294901760
    %v781 = vsub.f32 %v249, %v780
    %782 = vmatpush.msra.mxu0 %v781
    %v783 = vand.u32 %v248, 4294901760
    %v784 = vsub.f32 %v248, %v783
    %785 = vmatpush.msra.mxu0 %v784
    %v786 = vand.u32 %v247, 4294901760
    %v787 = vsub.f32 %v247, %v786
    %788 = vmatpush.msra.mxu0 %v787
    %v789 = vand.u32 %v246, 4294901760
    %v790 = vsub.f32 %v246, %v789
    %791 = vmatpush.msra.mxu0 %v790
    %v792 = vand.u32 %v245, 4294901760
    %v793 = vsub.f32 %v245, %v792
    %794 = vmatpush.msra.mxu0 %v793
    %v795 = vand.u32 %v244, 4294901760
    %v796 = vsub.f32 %v244, %v795
    %797 = vmatpush.msra.mxu0 %v796
    %v798 = vand.u32 %v243, 4294901760
    %v799 = vsub.f32 %v243, %v798
    %800 = vmatpush.msra.mxu0 %v799
    %v801 = vand.u32 %v242, 4294901760
    %v802 = vsub.f32 %v242, %v801
    %803 = vmatpush.msra.mxu0 %v802
    %v804 = vand.u32 %v241, 4294901760
    %v805 = vsub.f32 %v241, %v804
    %806 = vmatpush.msra.mxu0 %v805
    %v807 = vand.u32 %v240, 4294901760
    %v808 = vsub.f32 %v240, %v807
    %809 = vmatpush.msra.mxu0 %v808
    %v810 = vand.u32 %v239, 4294901760
    %v811 = vsub.f32 %v239, %v810
    %812 = vmatpush.msra.mxu0 %v811
    %v813 = vand.u32 %v238, 4294901760
    %v814 = vsub.f32 %v238, %v813
    %815 = vmatpush.msra.mxu0 %v814
    %v816 = vand.u32 %v206, 4294901760
    %v817 = vsub.f32 %v206, %v816
    %818 = vmatmul.f32.gmra.mxu0 %v817
    %v819 = vpop.f32.mrf.mxu0
    %v820 = vadd.f32 %v642, %v819
    %v821 = vand.u32 %v207, 4294901760
    %v822 = vsub.f32 %v207, %v821
    %823 = vmatmul.f32.gmra.mxu0 %v822
    %v824 = vpop.f32.mrf.mxu0
    %v825 = vadd.f32 %v646, %v824
    %v826 = vand.u32 %v208, 4294901760
    %v827 = vsub.f32 %v208, %v826
    %828 = vmatmul.f32.gmra.mxu0 %v827
    %v829 = vpop.f32.mrf.mxu0
    %v830 = vadd.f32 %v650, %v829
    %v831 = vand.u32 %v209, 4294901760
    %v832 = vsub.f32 %v209, %v831
    %833 = vmatmul.f32.gmra.mxu0 %v832
    %v834 = vpop.f32.mrf.mxu0
    %v835 = vadd.f32 %v654, %v834
    %v836 = vand.u32 %v210, 4294901760
    %v837 = vsub.f32 %v210, %v836
    %838 = vmatmul.f32.gmra.mxu0 %v837
    %v839 = vpop.f32.mrf.mxu0
    %v840 = vadd.f32 %v658, %v839
    %v841 = vand.u32 %v211, 4294901760
    %v842 = vsub.f32 %v211, %v841
    %843 = vmatmul.f32.gmra.mxu0 %v842
    %v844 = vpop.f32.mrf.mxu0
    %v845 = vadd.f32 %v662, %v844
    %v846 = vand.u32 %v212, 4294901760
    %v847 = vsub.f32 %v212, %v846
    %848 = vmatmul.f32.gmra.mxu0 %v847
    %v849 = vpop.f32.mrf.mxu0
    %v850 = vadd.f32 %v666, %v849
    %v851 = vand.u32 %v213, 4294901760
    %v852 = vsub.f32 %v213, %v851
    %853 = vmatmul.f32.gmra.mxu0 %v852
    %v854 = vpop.f32.mrf.mxu0
    %v855 = vadd.f32 %v670, %v854
    %v856 = vand.u32 %v214, 4294901760
    %v857 = vsub.f32 %v214, %v856
    %858 = vmatmul.f32.gmra.mxu0 %v857
    %v859 = vpop.f32.mrf.mxu0
    %v860 = vadd.f32 %v674, %v859
    %v861 = vand.u32 %v215, 4294901760
    %v862 = vsub.f32 %v215, %v861
    %863 = vmatmul.f32.gmra.mxu0 %v862
    %v864 = vpop.f32.mrf.mxu0
    %v865 = vadd.f32 %v678, %v864
    %v866 = vand.u32 %v216, 4294901760
    %v867 = vsub.f32 %v216, %v866
    %868 = vmatmul.f32.gmra.mxu0 %v867
    %v869 = vpop.f32.mrf.mxu0
    %v870 = vadd.f32 %v682, %v869
    %v871 = vand.u32 %v217, 4294901760
    %v872 = vsub.f32 %v217, %v871
    %873 = vmatmul.f32.gmra.mxu0 %v872
    %v874 = vpop.f32.mrf.mxu0
    %v875 = vadd.f32 %v686, %v874
    %v876 = vand.u32 %v218, 4294901760
    %v877 = vsub.f32 %v218, %v876
    %878 = vmatmul.f32.gmra.mxu0 %v877
    %v879 = vpop.f32.mrf.mxu0
    %v880 = vadd.f32 %v690, %v879
    %v881 = vand.u32 %v219, 4294901760
    %v882 = vsub.f32 %v219, %v881
    %883 = vmatmul.f32.gmra.mxu0 %v882
    %v884 = vpop.f32.mrf.mxu0
    %v885 = vadd.f32 %v694, %v884
    %v886 = vand.u32 %v220, 4294901760
    %v887 = vsub.f32 %v220, %v886
    %888 = vmatmul.f32.gmra.mxu0 %v887
    %v889 = vpop.f32.mrf.mxu0
    %v890 = vadd.f32 %v698, %v889
    %v891 = vand.u32 %v221, 4294901760
    %v892 = vsub.f32 %v221, %v891
    %893 = vmatmul.f32.gmra.mxu0 %v892
    %v894 = vpop.f32.mrf.mxu0
    %v895 = vadd.f32 %v702, %v894
    %v896 = vand.u32 %v222, 4294901760
    %v897 = vsub.f32 %v222, %v896
    %898 = vmatmul.f32.gmra.mxu0 %v897
    %v899 = vpop.f32.mrf.mxu0
    %v900 = vadd.f32 %v706, %v899
    %v901 = vand.u32 %v223, 4294901760
    %v902 = vsub.f32 %v223, %v901
    %903 = vmatmul.f32.gmra.mxu0 %v902
    %v904 = vpop.f32.mrf.mxu0
    %v905 = vadd.f32 %v710, %v904
    %v906 = vand.u32 %v224, 4294901760
    %v907 = vsub.f32 %v224, %v906
    %908 = vmatmul.f32.gmra.mxu0 %v907
    %v909 = vpop.f32.mrf.mxu0
    %v910 = vadd.f32 %v714, %v909
    %v911 = vand.u32 %v225, 4294901760
    %v912 = vsub.f32 %v225, %v911
    %913 = vmatmul.f32.gmra.mxu0 %v912
    %v914 = vpop.f32.mrf.mxu0
    %v915 = vadd.f32 %v718, %v914
    %v916 = vand.u32 %v226, 4294901760
    %v917 = vsub.f32 %v226, %v916
    %918 = vmatmul.f32.gmra.mxu0 %v917
    %v919 = vpop.f32.mrf.mxu0
    %v920 = vadd.f32 %v722, %v919
    %v921 = vand.u32 %v227, 4294901760
    %v922 = vsub.f32 %v227, %v921
    %923 = vmatmul.f32.gmra.mxu0 %v922
    %v924 = vpop.f32.mrf.mxu0
    %v925 = vadd.f32 %v726, %v924
    %v926 = vand.u32 %v228, 4294901760
    %v927 = vsub.f32 %v228, %v926
    %928 = vmatmul.f32.gmra.mxu0 %v927
    %v929 = vpop.f32.mrf.mxu0
    %v930 = vadd.f32 %v730, %v929
    %v931 = vand.u32 %v229, 4294901760
    %v932 = vsub.f32 %v229, %v931
    %933 = vmatmul.f32.gmra.mxu0 %v932
    %v934 = vpop.f32.mrf.mxu0
    %v935 = vadd.f32 %v734, %v934
    %v936 = vand.u32 %v230, 4294901760
    %v937 = vsub.f32 %v230, %v936
    %938 = vmatmul.f32.gmra.mxu0 %v937
    %v939 = vpop.f32.mrf.mxu0
    %v940 = vadd.f32 %v738, %v939
    %v941 = vand.u32 %v231, 4294901760
    %v942 = vsub.f32 %v231, %v941
    %943 = vmatmul.f32.gmra.mxu0 %v942
    %v944 = vpop.f32.mrf.mxu0
    %v945 = vadd.f32 %v742, %v944
    %v946 = vand.u32 %v232, 4294901760
    %v947 = vsub.f32 %v232, %v946
    %948 = vmatmul.f32.gmra.mxu0 %v947
    %v949 = vpop.f32.mrf.mxu0
    %v950 = vadd.f32 %v746, %v949
    %v951 = vand.u32 %v233, 4294901760
    %v952 = vsub.f32 %v233, %v951
    %953 = vmatmul.f32.gmra.mxu0 %v952
    %v954 = vpop.f32.mrf.mxu0
    %v955 = vadd.f32 %v750, %v954
    %v956 = vand.u32 %v234, 4294901760
    %v957 = vsub.f32 %v234, %v956
    %958 = vmatmul.f32.gmra.mxu0 %v957
    %v959 = vpop.f32.mrf.mxu0
    %v960 = vadd.f32 %v754, %v959
    %v961 = vand.u32 %v235, 4294901760
    %v962 = vsub.f32 %v235, %v961
    %963 = vmatmul.f32.gmra.mxu0 %v962
    %v964 = vpop.f32.mrf.mxu0
    %v965 = vadd.f32 %v758, %v964
    %v966 = vand.u32 %v236, 4294901760
    %v967 = vsub.f32 %v236, %v966
    %968 = vmatmul.f32.gmra.mxu0 %v967
    %v969 = vpop.f32.mrf.mxu0
    %v970 = vadd.f32 %v762, %v969
    %v971 = vand.u32 %v237, 4294901760
    %v972 = vsub.f32 %v237, %v971
    %973 = vmatmul.f32.gmra.mxu0 %v972
    %v974 = vpop.f32.mrf.mxu0
    %v975 = vadd.f32 %v766, %v974
    %976 = vdwg.mxu0
    %v977 = vand.u32 %v253, 4294901760
    %978 = vmatpush.msra.mxu0 %v977
    %v979 = vand.u32 %v252, 4294901760
    %980 = vmatpush.msra.mxu0 %v979
    %v981 = vand.u32 %v251, 4294901760
    %982 = vmatpush.msra.mxu0 %v981
    %v983 = vand.u32 %v250, 4294901760
    %984 = vmatpush.msra.mxu0 %v983
    %v985 = vand.u32 %v249, 4294901760
    %986 = vmatpush.msra.mxu0 %v985
    %v987 = vand.u32 %v248, 4294901760
    %988 = vmatpush.msra.mxu0 %v987
    %v989 = vand.u32 %v247, 4294901760
    %990 = vmatpush.msra.mxu0 %v989
    %v991 = vand.u32 %v246, 4294901760
    %992 = vmatpush.msra.mxu0 %v991
    %v993 = vand.u32 %v245, 4294901760
    %994 = vmatpush.msra.mxu0 %v993
    %v995 = vand.u32 %v244, 4294901760
    %996 = vmatpush.msra.mxu0 %v995
    %v997 = vand.u32 %v243, 4294901760
    %998 = vmatpush.msra.mxu0 %v997
    %v999 = vand.u32 %v242, 4294901760
    %1000 = vmatpush.msra.mxu0 %v999
    %v1001 = vand.u32 %v241, 4294901760
    %1002 = vmatpush.msra.mxu0 %v1001
    %v1003 = vand.u32 %v240, 4294901760
    %1004 = vmatpush.msra.mxu0 %v1003
    %v1005 = vand.u32 %v239, 4294901760
    %1006 = vmatpush.msra.mxu0 %v1005
    %v1007 = vand.u32 %v238, 4294901760
    %1008 = vmatpush.msra.mxu0 %v1007
    %v1009 = vand.u32 %v206, 4294901760
    %v1010 = vsub.f32 %v206, %v1009
    %v1011 = vand.u32 %v1010, 4294901760
    %1012 = vmatmul.f32.gmra.mxu0 %v1011
    %v1013 = vpop.f32.mrf.mxu0
    %v1014 = vadd.f32 %v820, %v1013
    %v1015 = vand.u32 %v207, 4294901760
    %v1016 = vsub.f32 %v207, %v1015
    %v1017 = vand.u32 %v1016, 4294901760
    %1018 = vmatmul.f32.gmra.mxu0 %v1017
    %v1019 = vpop.f32.mrf.mxu0
    %v1020 = vadd.f32 %v825, %v1019
    %v1021 = vand.u32 %v208, 4294901760
    %v1022 = vsub.f32 %v208, %v1021
    %v1023 = vand.u32 %v1022, 4294901760
    %1024 = vmatmul.f32.gmra.mxu0 %v1023
    %v1025 = vpop.f32.mrf.mxu0
    %v1026 = vadd.f32 %v830, %v1025
    %v1027 = vand.u32 %v209, 4294901760
    %v1028 = vsub.f32 %v209, %v1027
    %v1029 = vand.u32 %v1028, 4294901760
    %1030 = vmatmul.f32.gmra.mxu0 %v1029
    %v1031 = vpop.f32.mrf.mxu0
    %v1032 = vadd.f32 %v835, %v1031
    %v1033 = vand.u32 %v210, 4294901760
    %v1034 = vsub.f32 %v210, %v1033
    %v1035 = vand.u32 %v1034, 4294901760
    %1036 = vmatmul.f32.gmra.mxu0 %v1035
    %v1037 = vpop.f32.mrf.mxu0
    %v1038 = vadd.f32 %v840, %v1037
    %v1039 = vand.u32 %v211, 4294901760
    %v1040 = vsub.f32 %v211, %v1039
    %v1041 = vand.u32 %v1040, 4294901760
    %1042 = vmatmul.f32.gmra.mxu0 %v1041
    %v1043 = vpop.f32.mrf.mxu0
    %v1044 = vadd.f32 %v845, %v1043
    %v1045 = vand.u32 %v212, 4294901760
    %v1046 = vsub.f32 %v212, %v1045
    %v1047 = vand.u32 %v1046, 4294901760
    %1048 = vmatmul.f32.gmra.mxu0 %v1047
    %v1049 = vpop.f32.mrf.mxu0
    %v1050 = vadd.f32 %v850, %v1049
    %v1051 = vand.u32 %v213, 4294901760
    %v1052 = vsub.f32 %v213, %v1051
    %v1053 = vand.u32 %v1052, 4294901760
    %1054 = vmatmul.f32.gmra.mxu0 %v1053
    %v1055 = vpop.f32.mrf.mxu0
    %v1056 = vadd.f32 %v855, %v1055
    %v1057 = vand.u32 %v214, 4294901760
    %v1058 = vsub.f32 %v214, %v1057
    %v1059 = vand.u32 %v1058, 4294901760
    %1060 = vmatmul.f32.gmra.mxu0 %v1059
    %v1061 = vpop.f32.mrf.mxu0
    %v1062 = vadd.f32 %v860, %v1061
    %v1063 = vand.u32 %v215, 4294901760
    %v1064 = vsub.f32 %v215, %v1063
    %v1065 = vand.u32 %v1064, 4294901760
    %1066 = vmatmul.f32.gmra.mxu0 %v1065
    %v1067 = vpop.f32.mrf.mxu0
    %v1068 = vadd.f32 %v865, %v1067
    %v1069 = vand.u32 %v216, 4294901760
    %v1070 = vsub.f32 %v216, %v1069
    %v1071 = vand.u32 %v1070, 4294901760
    %1072 = vmatmul.f32.gmra.mxu0 %v1071
    %v1073 = vpop.f32.mrf.mxu0
    %v1074 = vadd.f32 %v870, %v1073
    %v1075 = vand.u32 %v217, 4294901760
    %v1076 = vsub.f32 %v217, %v1075
    %v1077 = vand.u32 %v1076, 4294901760
    %1078 = vmatmul.f32.gmra.mxu0 %v1077
    %v1079 = vpop.f32.mrf.mxu0
    %v1080 = vadd.f32 %v875, %v1079
    %v1081 = vand.u32 %v218, 4294901760
    %v1082 = vsub.f32 %v218, %v1081
    %v1083 = vand.u32 %v1082, 4294901760
    %1084 = vmatmul.f32.gmra.mxu0 %v1083
    %v1085 = vpop.f32.mrf.mxu0
    %v1086 = vadd.f32 %v880, %v1085
    %v1087 = vand.u32 %v219, 4294901760
    %v1088 = vsub.f32 %v219, %v1087
    %v1089 = vand.u32 %v1088, 4294901760
    %1090 = vmatmul.f32.gmra.mxu0 %v1089
    %v1091 = vpop.f32.mrf.mxu0
    %v1092 = vadd.f32 %v885, %v1091
    %v1093 = vand.u32 %v220, 4294901760
    %v1094 = vsub.f32 %v220, %v1093
    %v1095 = vand.u32 %v1094, 4294901760
    %1096 = vmatmul.f32.gmra.mxu0 %v1095
    %v1097 = vpop.f32.mrf.mxu0
    %v1098 = vadd.f32 %v890, %v1097
    %v1099 = vand.u32 %v221, 4294901760
    %v1100 = vsub.f32 %v221, %v1099
    %v1101 = vand.u32 %v1100, 4294901760
    %1102 = vmatmul.f32.gmra.mxu0 %v1101
    %v1103 = vpop.f32.mrf.mxu0
    %v1104 = vadd.f32 %v895, %v1103
    %v1105 = vand.u32 %v222, 4294901760
    %v1106 = vsub.f32 %v222, %v1105
    %v1107 = vand.u32 %v1106, 4294901760
    %1108 = vmatmul.f32.gmra.mxu0 %v1107
    %v1109 = vpop.f32.mrf.mxu0
    %v1110 = vadd.f32 %v900, %v1109
    %v1111 = vand.u32 %v223, 4294901760
    %v1112 = vsub.f32 %v223, %v1111
    %v1113 = vand.u32 %v1112, 4294901760
    %1114 = vmatmul.f32.gmra.mxu0 %v1113
    %v1115 = vpop.f32.mrf.mxu0
    %v1116 = vadd.f32 %v905, %v1115
    %v1117 = vand.u32 %v224, 4294901760
    %v1118 = vsub.f32 %v224, %v1117
    %v1119 = vand.u32 %v1118, 4294901760
    %1120 = vmatmul.f32.gmra.mxu0 %v1119
    %v1121 = vpop.f32.mrf.mxu0
    %v1122 = vadd.f32 %v910, %v1121
    %v1123 = vand.u32 %v225, 4294901760
    %v1124 = vsub.f32 %v225, %v1123
    %v1125 = vand.u32 %v1124, 4294901760
    %1126 = vmatmul.f32.gmra.mxu0 %v1125
    %v1127 = vpop.f32.mrf.mxu0
    %v1128 = vadd.f32 %v915, %v1127
    %v1129 = vand.u32 %v226, 4294901760
    %v1130 = vsub.f32 %v226, %v1129
    %v1131 = vand.u32 %v1130, 4294901760
    %1132 = vmatmul.f32.gmra.mxu0 %v1131
    %v1133 = vpop.f32.mrf.mxu0
    %v1134 = vadd.f32 %v920, %v1133
    %v1135 = vand.u32 %v227, 4294901760
    %v1136 = vsub.f32 %v227, %v1135
    %v1137 = vand.u32 %v1136, 4294901760
    %1138 = vmatmul.f32.gmra.mxu0 %v1137
    %v1139 = vpop.f32.mrf.mxu0
    %v1140 = vadd.f32 %v925, %v1139
    %v1141 = vand.u32 %v228, 4294901760
    %v1142 = vsub.f32 %v228, %v1141
    %v1143 = vand.u32 %v1142, 4294901760
    %1144 = vmatmul.f32.gmra.mxu0 %v1143
    %v1145 = vpop.f32.mrf.mxu0
    %v1146 = vadd.f32 %v930, %v1145
    %v1147 = vand.u32 %v229, 4294901760
    %v1148 = vsub.f32 %v229, %v1147
    %v1149 = vand.u32 %v1148, 4294901760
    %1150 = vmatmul.f32.gmra.mxu0 %v1149
    %v1151 = vpop.f32.mrf.mxu0
    %v1152 = vadd.f32 %v935, %v1151
    %v1153 = vand.u32 %v230, 4294901760
    %v1154 = vsub.f32 %v230, %v1153
    %v1155 = vand.u32 %v1154, 4294901760
    %1156 = vmatmul.f32.gmra.mxu0 %v1155
    %v1157 = vpop.f32.mrf.mxu0
    %v1158 = vadd.f32 %v940, %v1157
    %v1159 = vand.u32 %v231, 4294901760
    %v1160 = vsub.f32 %v231, %v1159
    %v1161 = vand.u32 %v1160, 4294901760
    %1162 = vmatmul.f32.gmra.mxu0 %v1161
    %v1163 = vpop.f32.mrf.mxu0
    %v1164 = vadd.f32 %v945, %v1163
    %v1165 = vand.u32 %v232, 4294901760
    %v1166 = vsub.f32 %v232, %v1165
    %v1167 = vand.u32 %v1166, 4294901760
    %1168 = vmatmul.f32.gmra.mxu0 %v1167
    %v1169 = vpop.f32.mrf.mxu0
    %v1170 = vadd.f32 %v950, %v1169
    %v1171 = vand.u32 %v233, 4294901760
    %v1172 = vsub.f32 %v233, %v1171
    %v1173 = vand.u32 %v1172, 4294901760
    %1174 = vmatmul.f32.gmra.mxu0 %v1173
    %v1175 = vpop.f32.mrf.mxu0
    %v1176 = vadd.f32 %v955, %v1175
    %v1177 = vand.u32 %v234, 4294901760
    %v1178 = vsub.f32 %v234, %v1177
    %v1179 = vand.u32 %v1178, 4294901760
    %1180 = vmatmul.f32.gmra.mxu0 %v1179
    %v1181 = vpop.f32.mrf.mxu0
    %v1182 = vadd.f32 %v960, %v1181
    %v1183 = vand.u32 %v235, 4294901760
    %v1184 = vsub.f32 %v235, %v1183
    %v1185 = vand.u32 %v1184, 4294901760
    %1186 = vmatmul.f32.gmra.mxu0 %v1185
    %v1187 = vpop.f32.mrf.mxu0
    %v1188 = vadd.f32 %v965, %v1187
    %v1189 = vand.u32 %v236, 4294901760
    %v1190 = vsub.f32 %v236, %v1189
    %v1191 = vand.u32 %v1190, 4294901760
    %1192 = vmatmul.f32.gmra.mxu0 %v1191
    %v1193 = vpop.f32.mrf.mxu0
    %v1194 = vadd.f32 %v970, %v1193
    %v1195 = vand.u32 %v237, 4294901760
    %v1196 = vsub.f32 %v237, %v1195
    %v1197 = vand.u32 %v1196, 4294901760
    %1198 = vmatmul.f32.gmra.mxu0 %v1197
    %v1199 = vpop.f32.mrf.mxu0
    %v1200 = vadd.f32 %v975, %v1199
    %1201 = vdwg.mxu0
    %v1202 = vand.u32 %v253, 4294901760
    %v1203 = vsub.f32 %v253, %v1202
    %v1204 = vand.u32 %v1203, 4294901760
    %1205 = vmatpush.msra.mxu0 %v1204
    %v1206 = vand.u32 %v252, 4294901760
    %v1207 = vsub.f32 %v252, %v1206
    %v1208 = vand.u32 %v1207, 4294901760
    %1209 = vmatpush.msra.mxu0 %v1208
    %v1210 = vand.u32 %v251, 4294901760
    %v1211 = vsub.f32 %v251, %v1210
    %v1212 = vand.u32 %v1211, 4294901760
    %1213 = vmatpush.msra.mxu0 %v1212
    %v1214 = vand.u32 %v250, 4294901760
    %v1215 = vsub.f32 %v250, %v1214
    %v1216 = vand.u32 %v1215, 4294901760
    %1217 = vmatpush.msra.mxu0 %v1216
    %v1218 = vand.u32 %v249, 4294901760
    %v1219 = vsub.f32 %v249, %v1218
    %v1220 = vand.u32 %v1219, 4294901760
    %1221 = vmatpush.msra.mxu0 %v1220
    %v1222 = vand.u32 %v248, 4294901760
    %v1223 = vsub.f32 %v248, %v1222
    %v1224 = vand.u32 %v1223, 4294901760
    %1225 = vmatpush.msra.mxu0 %v1224
    %v1226 = vand.u32 %v247, 4294901760
    %v1227 = vsub.f32 %v247, %v1226
    %v1228 = vand.u32 %v1227, 4294901760
    %1229 = vmatpush.msra.mxu0 %v1228
    %v1230 = vand.u32 %v246, 4294901760
    %v1231 = vsub.f32 %v246, %v1230
    %v1232 = vand.u32 %v1231, 4294901760
    %1233 = vmatpush.msra.mxu0 %v1232
    %v1234 = vand.u32 %v245, 4294901760
    %v1235 = vsub.f32 %v245, %v1234
    %v1236 = vand.u32 %v1235, 4294901760
    %1237 = vmatpush.msra.mxu0 %v1236
    %v1238 = vand.u32 %v244, 4294901760
    %v1239 = vsub.f32 %v244, %v1238
    %v1240 = vand.u32 %v1239, 4294901760
    %1241 = vmatpush.msra.mxu0 %v1240
    %v1242 = vand.u32 %v243, 4294901760
    %v1243 = vsub.f32 %v243, %v1242
    %v1244 = vand.u32 %v1243, 4294901760
    %1245 = vmatpush.msra.mxu0 %v1244
    %v1246 = vand.u32 %v242, 4294901760
    %v1247 = vsub.f32 %v242, %v1246
    %v1248 = vand.u32 %v1247, 4294901760
    %1249 = vmatpush.msra.mxu0 %v1248
    %v1250 = vand.u32 %v241, 4294901760
    %v1251 = vsub.f32 %v241, %v1250
    %v1252 = vand.u32 %v1251, 4294901760
    %1253 = vmatpush.msra.mxu0 %v1252
    %v1254 = vand.u32 %v240, 4294901760
    %v1255 = vsub.f32 %v240, %v1254
    %v1256 = vand.u32 %v1255, 4294901760
    %1257 = vmatpush.msra.mxu0 %v1256
    %v1258 = vand.u32 %v239, 4294901760
    %v1259 = vsub.f32 %v239, %v1258
    %v1260 = vand.u32 %v1259, 4294901760
    %1261 = vmatpush.msra.mxu0 %v1260
    %v1262 = vand.u32 %v238, 4294901760
    %v1263 = vsub.f32 %v238, %v1262
    %v1264 = vand.u32 %v1263, 4294901760
    %1265 = vmatpush.msra.mxu0 %v1264
    %v1266 = vand.u32 %v206, 4294901760
    %1267 = vmatmul.f32.gmra.mxu0 %v1266
    %v1268 = vpop.f32.mrf.mxu0
    %v1269 = vadd.f32 %v1014, %v1268
    %v1270 = vand.u32 %v207, 4294901760
    %1271 = vmatmul.f32.gmra.mxu0 %v1270
    %v1272 = vpop.f32.mrf.mxu0
    %v1273 = vadd.f32 %v1020, %v1272
    %v1274 = vand.u32 %v208, 4294901760
    %1275 = vmatmul.f32.gmra.mxu0 %v1274
    %v1276 = vpop.f32.mrf.mxu0
    %v1277 = vadd.f32 %v1026, %v1276
    %v1278 = vand.u32 %v209, 4294901760
    %1279 = vmatmul.f32.gmra.mxu0 %v1278
    %v1280 = vpop.f32.mrf.mxu0
    %v1281 = vadd.f32 %v1032, %v1280
    %v1282 = vand.u32 %v210, 4294901760
    %1283 = vmatmul.f32.gmra.mxu0 %v1282
    %v1284 = vpop.f32.mrf.mxu0
    %v1285 = vadd.f32 %v1038, %v1284
    %v1286 = vand.u32 %v211, 4294901760
    %1287 = vmatmul.f32.gmra.mxu0 %v1286
    %v1288 = vpop.f32.mrf.mxu0
    %v1289 = vadd.f32 %v1044, %v1288
    %v1290 = vand.u32 %v212, 4294901760
    %1291 = vmatmul.f32.gmra.mxu0 %v1290
    %v1292 = vpop.f32.mrf.mxu0
    %v1293 = vadd.f32 %v1050, %v1292
    %v1294 = vand.u32 %v213, 4294901760
    %1295 = vmatmul.f32.gmra.mxu0 %v1294
    %v1296 = vpop.f32.mrf.mxu0
    %v1297 = vadd.f32 %v1056, %v1296
    %v1298 = vand.u32 %v214, 4294901760
    %1299 = vmatmul.f32.gmra.mxu0 %v1298
    %v1300 = vpop.f32.mrf.mxu0
    %v1301 = vadd.f32 %v1062, %v1300
    %v1302 = vand.u32 %v215, 4294901760
    %1303 = vmatmul.f32.gmra.mxu0 %v1302
    %v1304 = vpop.f32.mrf.mxu0
    %v1305 = vadd.f32 %v1068, %v1304
    %v1306 = vand.u32 %v216, 4294901760
    %1307 = vmatmul.f32.gmra.mxu0 %v1306
    %v1308 = vpop.f32.mrf.mxu0
    %v1309 = vadd.f32 %v1074, %v1308
    %v1310 = vand.u32 %v217, 4294901760
    %1311 = vmatmul.f32.gmra.mxu0 %v1310
    %v1312 = vpop.f32.mrf.mxu0
    %v1313 = vadd.f32 %v1080, %v1312
    %v1314 = vand.u32 %v218, 4294901760
    %1315 = vmatmul.f32.gmra.mxu0 %v1314
    %v1316 = vpop.f32.mrf.mxu0
    %v1317 = vadd.f32 %v1086, %v1316
    %v1318 = vand.u32 %v219, 4294901760
    %1319 = vmatmul.f32.gmra.mxu0 %v1318
    %v1320 = vpop.f32.mrf.mxu0
    %v1321 = vadd.f32 %v1092, %v1320
    %v1322 = vand.u32 %v220, 4294901760
    %1323 = vmatmul.f32.gmra.mxu0 %v1322
    %v1324 = vpop.f32.mrf.mxu0
    %v1325 = vadd.f32 %v1098, %v1324
    %v1326 = vand.u32 %v221, 4294901760
    %1327 = vmatmul.f32.gmra.mxu0 %v1326
    %v1328 = vpop.f32.mrf.mxu0
    %v1329 = vadd.f32 %v1104, %v1328
    %v1330 = vand.u32 %v222, 4294901760
    %1331 = vmatmul.f32.gmra.mxu0 %v1330
    %v1332 = vpop.f32.mrf.mxu0
    %v1333 = vadd.f32 %v1110, %v1332
    %v1334 = vand.u32 %v223, 4294901760
    %1335 = vmatmul.f32.gmra.mxu0 %v1334
    %v1336 = vpop.f32.mrf.mxu0
    %v1337 = vadd.f32 %v1116, %v1336
    %v1338 = vand.u32 %v224, 4294901760
    %1339 = vmatmul.f32.gmra.mxu0 %v1338
    %v1340 = vpop.f32.mrf.mxu0
    %v1341 = vadd.f32 %v1122, %v1340
    %v1342 = vand.u32 %v225, 4294901760
    %1343 = vmatmul.f32.gmra.mxu0 %v1342
    %v1344 = vpop.f32.mrf.mxu0
    %v1345 = vadd.f32 %v1128, %v1344
    %v1346 = vand.u32 %v226, 4294901760
    %1347 = vmatmul.f32.gmra.mxu0 %v1346
    %v1348 = vpop.f32.mrf.mxu0
    %v1349 = vadd.f32 %v1134, %v1348
    %v1350 = vand.u32 %v227, 4294901760
    %1351 = vmatmul.f32.gmra.mxu0 %v1350
    %v1352 = vpop.f32.mrf.mxu0
    %v1353 = vadd.f32 %v1140, %v1352
    %v1354 = vand.u32 %v228, 4294901760
    %1355 = vmatmul.f32.gmra.mxu0 %v1354
    %v1356 = vpop.f32.mrf.mxu0
    %v1357 = vadd.f32 %v1146, %v1356
    %v1358 = vand.u32 %v229, 4294901760
    %1359 = vmatmul.f32.gmra.mxu0 %v1358
    %v1360 = vpop.f32.mrf.mxu0
    %v1361 = vadd.f32 %v1152, %v1360
    %v1362 = vand.u32 %v230, 4294901760
    %1363 = vmatmul.f32.gmra.mxu0 %v1362
    %v1364 = vpop.f32.mrf.mxu0
    %v1365 = vadd.f32 %v1158, %v1364
    %v1366 = vand.u32 %v231, 4294901760
    %1367 = vmatmul.f32.gmra.mxu0 %v1366
    %v1368 = vpop.f32.mrf.mxu0
    %v1369 = vadd.f32 %v1164, %v1368
    %v1370 = vand.u32 %v232, 4294901760
    %1371 = vmatmul.f32.gmra.mxu0 %v1370
    %v1372 = vpop.f32.mrf.mxu0
    %v1373 = vadd.f32 %v1170, %v1372
    %v1374 = vand.u32 %v233, 4294901760
    %1375 = vmatmul.f32.gmra.mxu0 %v1374
    %v1376 = vpop.f32.mrf.mxu0
    %v1377 = vadd.f32 %v1176, %v1376
    %v1378 = vand.u32 %v234, 4294901760
    %1379 = vmatmul.f32.gmra.mxu0 %v1378
    %v1380 = vpop.f32.mrf.mxu0
    %v1381 = vadd.f32 %v1182, %v1380
    %v1382 = vand.u32 %v235, 4294901760
    %1383 = vmatmul.f32.gmra.mxu0 %v1382
    %v1384 = vpop.f32.mrf.mxu0
    %v1385 = vadd.f32 %v1188, %v1384
    %v1386 = vand.u32 %v236, 4294901760
    %1387 = vmatmul.f32.gmra.mxu0 %v1386
    %v1388 = vpop.f32.mrf.mxu0
    %v1389 = vadd.f32 %v1194, %v1388
    %v1390 = vand.u32 %v237, 4294901760
    %1391 = vmatmul.f32.gmra.mxu0 %v1390
    %v1392 = vpop.f32.mrf.mxu0
    %v1393 = vadd.f32 %v1200, %v1392
    %1394 = vdwg.mxu0
    %v1395 = vand.u32 %v253, 4294901760
    %1396 = vmatpush.msra.mxu0 %v1395
    %v1397 = vand.u32 %v252, 4294901760
    %1398 = vmatpush.msra.mxu0 %v1397
    %v1399 = vand.u32 %v251, 4294901760
    %1400 = vmatpush.msra.mxu0 %v1399
    %v1401 = vand.u32 %v250, 4294901760
    %1402 = vmatpush.msra.mxu0 %v1401
    %v1403 = vand.u32 %v249, 4294901760
    %1404 = vmatpush.msra.mxu0 %v1403
    %v1405 = vand.u32 %v248, 4294901760
    %1406 = vmatpush.msra.mxu0 %v1405
    %v1407 = vand.u32 %v247, 4294901760
    %1408 = vmatpush.msra.mxu0 %v1407
    %v1409 = vand.u32 %v246, 4294901760
    %1410 = vmatpush.msra.mxu0 %v1409
    %v1411 = vand.u32 %v245, 4294901760
    %1412 = vmatpush.msra.mxu0 %v1411
    %v1413 = vand.u32 %v244, 4294901760
    %1414 = vmatpush.msra.mxu0 %v1413
    %v1415 = vand.u32 %v243, 4294901760
    %1416 = vmatpush.msra.mxu0 %v1415
    %v1417 = vand.u32 %v242, 4294901760
    %1418 = vmatpush.msra.mxu0 %v1417
    %v1419 = vand.u32 %v241, 4294901760
    %1420 = vmatpush.msra.mxu0 %v1419
    %v1421 = vand.u32 %v240, 4294901760
    %1422 = vmatpush.msra.mxu0 %v1421
    %v1423 = vand.u32 %v239, 4294901760
    %1424 = vmatpush.msra.mxu0 %v1423
    %v1425 = vand.u32 %v238, 4294901760
    %1426 = vmatpush.msra.mxu0 %v1425
    %v1427 = vand.u32 %v206, 4294901760
    %1428 = vmatmul.f32.gmra.mxu0 %v1427
    %v1429 = vpop.f32.mrf.mxu0
    %v1430 = vadd.f32 %v1269, %v1429
    %v1431 = vand.u32 %v207, 4294901760
    %1432 = vmatmul.f32.gmra.mxu0 %v1431
    %v1433 = vpop.f32.mrf.mxu0
    %v1434 = vadd.f32 %v1273, %v1433
    %v1435 = vand.u32 %v208, 4294901760
    %1436 = vmatmul.f32.gmra.mxu0 %v1435
    %v1437 = vpop.f32.mrf.mxu0
    %v1438 = vadd.f32 %v1277, %v1437
    %v1439 = vand.u32 %v209, 4294901760
    %1440 = vmatmul.f32.gmra.mxu0 %v1439
    %v1441 = vpop.f32.mrf.mxu0
    %v1442 = vadd.f32 %v1281, %v1441
    %v1443 = vand.u32 %v210, 4294901760
    %1444 = vmatmul.f32.gmra.mxu0 %v1443
    %v1445 = vpop.f32.mrf.mxu0
    %v1446 = vadd.f32 %v1285, %v1445
    %v1447 = vand.u32 %v211, 4294901760
    %1448 = vmatmul.f32.gmra.mxu0 %v1447
    %v1449 = vpop.f32.mrf.mxu0
    %v1450 = vadd.f32 %v1289, %v1449
    %v1451 = vand.u32 %v212, 4294901760
    %1452 = vmatmul.f32.gmra.mxu0 %v1451
    %v1453 = vpop.f32.mrf.mxu0
    %v1454 = vadd.f32 %v1293, %v1453
    %v1455 = vand.u32 %v213, 4294901760
    %1456 = vmatmul.f32.gmra.mxu0 %v1455
    %v1457 = vpop.f32.mrf.mxu0
    %v1458 = vadd.f32 %v1297, %v1457
    %v1459 = vand.u32 %v214, 4294901760
    %1460 = vmatmul.f32.gmra.mxu0 %v1459
    %v1461 = vpop.f32.mrf.mxu0
    %v1462 = vadd.f32 %v1301, %v1461
    %v1463 = vand.u32 %v215, 4294901760
    %1464 = vmatmul.f32.gmra.mxu0 %v1463
    %v1465 = vpop.f32.mrf.mxu0
    %v1466 = vadd.f32 %v1305, %v1465
    %v1467 = vand.u32 %v216, 4294901760
    %1468 = vmatmul.f32.gmra.mxu0 %v1467
    %v1469 = vpop.f32.mrf.mxu0
    %v1470 = vadd.f32 %v1309, %v1469
    %v1471 = vand.u32 %v217, 4294901760
    %1472 = vmatmul.f32.gmra.mxu0 %v1471
    %v1473 = vpop.f32.mrf.mxu0
    %v1474 = vadd.f32 %v1313, %v1473
    %v1475 = vand.u32 %v218, 4294901760
    %1476 = vmatmul.f32.gmra.mxu0 %v1475
    %v1477 = vpop.f32.mrf.mxu0
    %v1478 = vadd.f32 %v1317, %v1477
    %v1479 = vand.u32 %v219, 4294901760
    %1480 = vmatmul.f32.gmra.mxu0 %v1479
    %v1481 = vpop.f32.mrf.mxu0
    %v1482 = vadd.f32 %v1321, %v1481
    %v1483 = vand.u32 %v220, 4294901760
    %1484 = vmatmul.f32.gmra.mxu0 %v1483
    %v1485 = vpop.f32.mrf.mxu0
    %v1486 = vadd.f32 %v1325, %v1485
    %v1487 = vand.u32 %v221, 4294901760
    %1488 = vmatmul.f32.gmra.mxu0 %v1487
    %v1489 = vpop.f32.mrf.mxu0
    %v1490 = vadd.f32 %v1329, %v1489
    %v1491 = vand.u32 %v222, 4294901760
    %1492 = vmatmul.f32.gmra.mxu0 %v1491
    %v1493 = vpop.f32.mrf.mxu0
    %v1494 = vadd.f32 %v1333, %v1493
    %v1495 = vand.u32 %v223, 4294901760
    %1496 = vmatmul.f32.gmra.mxu0 %v1495
    %v1497 = vpop.f32.mrf.mxu0
    %v1498 = vadd.f32 %v1337, %v1497
    %v1499 = vand.u32 %v224, 4294901760
    %1500 = vmatmul.f32.gmra.mxu0 %v1499
    %v1501 = vpop.f32.mrf.mxu0
    %v1502 = vadd.f32 %v1341, %v1501
    %v1503 = vand.u32 %v225, 4294901760
    %1504 = vmatmul.f32.gmra.mxu0 %v1503
    %v1505 = vpop.f32.mrf.mxu0
    %v1506 = vadd.f32 %v1345, %v1505
    %v1507 = vand.u32 %v226, 4294901760
    %1508 = vmatmul.f32.gmra.mxu0 %v1507
    %v1509 = vpop.f32.mrf.mxu0
    %v1510 = vadd.f32 %v1349, %v1509
    %v1511 = vand.u32 %v227, 4294901760
    %1512 = vmatmul.f32.gmra.mxu0 %v1511
    %v1513 = vpop.f32.mrf.mxu0
    %v1514 = vadd.f32 %v1353, %v1513
    %v1515 = vand.u32 %v228, 4294901760
    %1516 = vmatmul.f32.gmra.mxu0 %v1515
    %v1517 = vpop.f32.mrf.mxu0
    %v1518 = vadd.f32 %v1357, %v1517
    %v1519 = vand.u32 %v229, 4294901760
    %1520 = vmatmul.f32.gmra.mxu0 %v1519
    %v1521 = vpop.f32.mrf.mxu0
    %v1522 = vadd.f32 %v1361, %v1521
    %v1523 = vand.u32 %v230, 4294901760
    %1524 = vmatmul.f32.gmra.mxu0 %v1523
    %v1525 = vpop.f32.mrf.mxu0
    %v1526 = vadd.f32 %v1365, %v1525
    %v1527 = vand.u32 %v231, 4294901760
    %1528 = vmatmul.f32.gmra.mxu0 %v1527
    %v1529 = vpop.f32.mrf.mxu0
    %v1530 = vadd.f32 %v1369, %v1529
    %v1531 = vand.u32 %v232, 4294901760
    %1532 = vmatmul.f32.gmra.mxu0 %v1531
    %v1533 = vpop.f32.mrf.mxu0
    %v1534 = vadd.f32 %v1373, %v1533
    %v1535 = vand.u32 %v233, 4294901760
    %1536 = vmatmul.f32.gmra.mxu0 %v1535
    %v1537 = vpop.f32.mrf.mxu0
    %v1538 = vadd.f32 %v1377, %v1537
    %v1539 = vand.u32 %v234, 4294901760
    %1540 = vmatmul.f32.gmra.mxu0 %v1539
    %v1541 = vpop.f32.mrf.mxu0
    %v1542 = vadd.f32 %v1381, %v1541
    %v1543 = vand.u32 %v235, 4294901760
    %1544 = vmatmul.f32.gmra.mxu0 %v1543
    %v1545 = vpop.f32.mrf.mxu0
    %v1546 = vadd.f32 %v1385, %v1545
    %v1547 = vand.u32 %v236, 4294901760
    %1548 = vmatmul.f32.gmra.mxu0 %v1547
    %v1549 = vpop.f32.mrf.mxu0
    %v1550 = vadd.f32 %v1389, %v1549
    %v1551 = vand.u32 %v237, 4294901760
    %1552 = vmatmul.f32.gmra.mxu0 %v1551
    %v1553 = vpop.f32.mrf.mxu0
    %v1554 = vadd.f32 %v1393, %v1553
    %1555 = vdwg.mxu0
    %1556 = vst [vmem:[#allocation2] sm:$0xff] %v1430
    %1557 = vst [vmem:[#allocation2 + $0x8] sm:$0xff] %v1434
    %1558 = vst [vmem:[#allocation2 + $0x10] sm:$0xff] %v1438
    %1559 = vst [vmem:[#allocation2 + $0x18] sm:$0xff] %v1442
    %1560 = vst [vmem:[#allocation2 + $0x20] sm:$0xff] %v1446
    %1561 = vst [vmem:[#allocation2 + $0x28] sm:$0xff] %v1450
    %1562 = vst [vmem:[#allocation2 + $0x30] sm:$0xff] %v1454
    %1563 = vst [vmem:[#allocation2 + $0x38] sm:$0xff] %v1458
    %1564 = vst [vmem:[#allocation2 + $0x40] sm:$0xff] %v1462
    %1565 = vst [vmem:[#allocation2 + $0x48] sm:$0xff] %v1466
    %1566 = vst [vmem:[#allocation2 + $0x50] sm:$0xff] %v1470
    %1567 = vst [vmem:[#allocation2 + $0x58] sm:$0xff] %v1474
    %1568 = vst [vmem:[#allocation2 + $0x60] sm:$0xff] %v1478
    %1569 = vst [vmem:[#allocation2 + $0x68] sm:$0xff] %v1482
    %1570 = vst [vmem:[#allocation2 + $0x70] sm:$0xff] %v1486
    %1571 = vst [vmem:[#allocation2 + $0x78] sm:$0xff] %v1490
    %1572 = vst [vmem:[#allocation2 + $0x80] sm:$0xff] %v1494
    %1573 = vst [vmem:[#allocation2 + $0x88] sm:$0xff] %v1498
    %1574 = vst [vmem:[#allocation2 + $0x90] sm:$0xff] %v1502
    %1575 = vst [vmem:[#allocation2 + $0x98] sm:$0xff] %v1506
    %1576 = vst [vmem:[#allocation2 + $0xa0] sm:$0xff] %v1510
    %1577 = vst [vmem:[#allocation2 + $0xa8] sm:$0xff] %v1514
    %1578 = vst [vmem:[#allocation2 + $0xb0] sm:$0xff] %v1518
    %1579 = vst [vmem:[#allocation2 + $0xb8] sm:$0xff] %v1522
    %1580 = vst [vmem:[#allocation2 + $0xc0] sm:$0xff] %v1526
    %1581 = vst [vmem:[#allocation2 + $0xc8] sm:$0xff] %v1530
    %1582 = vst [vmem:[#allocation2 + $0xd0] sm:$0xff] %v1534
    %1583 = vst [vmem:[#allocation2 + $0xd8] sm:$0xff] %v1538
    %1584 = vst [vmem:[#allocation2 + $0xe0] sm:$0xff] %v1542
    %1585 = vst [vmem:[#allocation2 + $0xe8] sm:$0xff] %v1546
    %1586 = vst [vmem:[#allocation2 + $0xf0] sm:$0xff] %v1550
    %1587 = vst [vmem:[#allocation2 + $0xf8] sm:$0xff] %v1554
    // Predicated region
    $region10: #{tpu_custom_call.1} parent=1 // pred_check
      _
    $region11: #{tpu_custom_call.1} parent=1 // pred_check_branch
      %1589 = sbr.rel (0) target = $region13
    $region12: #{tpu_custom_call.1} parent=1 // pred_region
      %1591 = vsyncadd [#allocation3], 0
      %s1592 = sshll.u32 [#allocation2], 4
      %s1593 = int_to_ptr.vmem [resolvable:$true] %s1592
      %s1594 = sshll.u32 %s2, 4
      %s1595 = int_to_ptr.hbm [resolvable:$true] %s1594
      %1600 = dma.vmem_to_hbm [thread:$0]  %s1593, 4096, %s1595, [#allocation3], 128, 128, 8
    $region13: #{tpu_custom_call.1} parent=1 // pred_fallthru
      _
    // Predicated region
    $region14: #{tpu_custom_call.1} parent=1 // pred_check
      _
    $region15: #{tpu_custom_call.1} parent=1 // pred_check_branch
      %1602 = sbr.rel (0) target = $region17
    $region16: #{tpu_custom_call.1} parent=1 // pred_region
      %1604 = dma.done [#allocation3], 4096
    $region17: #{tpu_custom_call.1} parent=1 // pred_fallthru
      _
    %1605 = vsyncpa [#allocation3], 1

// kernel: tpu_custom_call.1
$region0: #{tpu_custom_call.1}
  #allocation0 [shape = 'u32[]', space=smem, size = 0x4, offset = 0x4, fixed_abs, tag = 'smem constant byte address 0x4 - core index']
  #allocation1 [shape = 'u32[72,128]{1,0:T(1,128)}', space=vmem, size = 0x9000, scoped, tag = 'internal scratch']
  #allocation2 [shape = 's32[16]{0}', space=sflag, size = 0x40, scoped, tag = 'scratch operand']
  #allocation3 [shape = 's32[1]{0}', space=sflag, size = 0x4, scoped, tag = 'scoped memory for tpu_custom_call.1']
  #allocation4 [shape = 'u8[512]{0}', space=smem, size = 0x200, scoped, tag = 'prefetched SMEM operand 0']
  #allocation7 [shape = 's32[]', space=sflag, size = 0x4, offset = 0, fixed_abs, tag = 'sflag constant byte address 0x0 - dummy sync flag']
  #allocation8 [shape = 's32[]', space=sflag, size = 0x4, offset = 0, fixed_abs, tag = 'sflag constant byte address 0x0 - dummy sync flag']
  #allocation9 [shape = 'u32[]', space=smem, size = 0x4, offset = 0x44, fixed_abs, tag = 'smem constant byte address 0x44 - assertion arg 0']
  #allocation10 [shape = 'u32[]', space=smem, size = 0x4, offset = 0x48, fixed_abs, tag = 'smem constant byte address 0x48 - assertion arg 1']
  #allocation11 [shape = 's32[]', space=sflag, size = 0x4, offset = 0, fixed_abs, tag = 'sflag constant byte address 0x0 - dummy sync flag']
  #allocation12 [shape = 's32[]', space=sflag, size = 0x4, offset = 0, fixed_abs, tag = 'sflag constant byte address 0x0 - dummy sync flag']
  %s0 = inlined_call_operand.hbm [shape: s32[128], index: 0, kind: input, shape index: {}]
  %s1 = inlined_call_operand.hbm [shape: f32[50,128], index: 1, kind: input, shape index: {}]
  %s2 = inlined_call_operand.hbm [shape: f32[128,128], index: 2, kind: output, shape index: {}]
  %s3 = sld [smem:[#allocation0]]
  $region36: #{tpu_custom_call.1} parent=0
    _
  %s5 = ssub.s32 1, %s3
  %s6 = scalar_select 0, %s5, %s3
  %s8 = sshll.u32 %s0, 4
  %s9 = int_to_ptr.hbm [resolvable:$true] %s8
  %11 = dma.hbm_to_smem %s9, 16, [#allocation4], [#allocation3]
  %13 = dma.done [#allocation3], 16
  %14 = sfence
  $region1: #{tpu_custom_call.1} parent=0
    #allocation5 [shape = 'u8[65536]{0}', space=vmem, size = 0x10000, scoped, tag = 'output window, operand 0, single buffered']
    #allocation6 [shape = 's32[1]{0}', space=sflag, size = 0x4, scoped, tag = 'scoped memory for tpu_custom_call.1']
    %15 = vsyncpa [#allocation6], 0
    %s16 = smul.u32 0, 128
    loop: start=0, step=1, limit=16
    $region2: #{tpu_custom_call.1} parent=1 // loop_pre_header
      _
    $region3: #{tpu_custom_call.1} parent=1 // loop_header
      %s18 = sphi 0, %s22
      %p19 = scmp.ge.s32.totalorder %s18, 16
    $region4: #{tpu_custom_call.1} parent=1 // loop_header_branch
      %21 = sbr.rel (%p19) target = $region8
    $region5: #{tpu_custom_call.1} parent=1 // loop_body
      %s23 = sadd.s32 %s16, %s18
      %s24 = sld [smem:[#allocation4 + %s23]]
      %p25 = scmp.lt.s32.totalorder %s18, 0
      %s26 = ssub.s32 0, %s18
      %s27 = scalar_select %p25, %s26, %s18
      %s28 = sand.u32 %s27, 15
      %s29 = ssub.s32 0, %s28
      %s30 = scalar_select %p25, %s29, %s28
      %p31 = scmp.ne.s32.totalorder %s30, 0
      %p32 = scmp.lt.s32.totalorder %s30, 0
      %p33 = pnand %p32, %p31
      %p34 = pneg %p33
      %s35 = sadd.s32 %s30, 16
      %s36 = scalar_select %p34, %s35, %s30
      %s37 = scalar_lea.hbm %s1, %s24
      %s38 = scalar_lea.vmem [#allocation5], %s18
      %s39 = scalar_lea.sflag [#allocation2], %s36
      // Predicated region
      $region9: #{tpu_custom_call.1} parent=5 // pred_check
        _
      $region10: #{tpu_custom_call.1} parent=5 // pred_check_branch
        %41 = sbr.rel target = $region12
      $region11: #{tpu_custom_call.1} parent=5 // pred_region
        %42 = sst [smem:[#allocation9]] [#allocation8]
        %43 = sst [smem:[#allocation10]] [#allocation7]
      $region12: #{tpu_custom_call.1} parent=5 // pred_fallthru
        _
      %45 = shalt.err (0)
      %s47 = sshll.u32 %s37, 4
      %s48 = int_to_ptr.hbm [resolvable:$true] %s47
      %s49 = sshll.u32 %s38, 4
      %s50 = int_to_ptr.vmem [resolvable:$true] %s49
      %52 = dma.hbm_to_vmem [thread:$0]  %s48, 16, %s50, %s39
    $region6: #{tpu_custom_call.1} parent=1 // loop_footer
      %s22 = sadd.s32 1, %s18
    $region7: #{tpu_custom_call.1} parent=1 // loop_footer_branch
      %17 = sbr.rel target = $region3
    $region8: #{tpu_custom_call.1} parent=1 // loop_exit
      _
    loop: start=0, step=1, limit=128
    $region13: #{tpu_custom_call.1} parent=1 // loop_pre_header
      _
    $region14: #{tpu_custom_call.1} parent=1 // loop_header
      %s54 = sphi 0, %s58
      %p55 = scmp.ge.s32.totalorder %s54, 128
    $region15: #{tpu_custom_call.1} parent=1 // loop_header_branch
      %57 = sbr.rel (%p55) target = $region19
    $region16: #{tpu_custom_call.1} parent=1 // loop_body
      %s59 = sadd.s32 %s54, 16
      %p60 = scmp.lt.s32.totalorder %s59, 127
      %s61 = scalar_select %p60, %s59, 127
      %s62 = sadd.s32 %s16, %s61
      %s63 = sld [smem:[#allocation4 + %s62]]
      %p64 = scmp.lt.s32.totalorder %s54, 0
      %s65 = ssub.s32 0, %s54
      %s66 = scalar_select %p64, %s65, %s54
      %s67 = sand.u32 %s66, 15
      %s68 = ssub.s32 0, %s67
      %s69 = scalar_select %p64, %s68, %s67
      %p70 = scmp.ne.s32.totalorder %s69, 0
      %p71 = scmp.lt.s32.totalorder %s69, 0
      %p72 = pnand %p71, %p70
      %p73 = pneg %p72
      %s74 = sadd.s32 %s69, 16
      %s75 = scalar_select %p73, %s74, %s69
      %s76 = scalar_lea.sflag [#allocation2], %s75
      %78 = dma.done %s76, 16
      %p79 = scmp.lt.s32.totalorder %s59, 128
      // Predicated region
      $region20: #{tpu_custom_call.1} parent=16 // pred_check
        %p80 = pneg %p79
      $region21: #{tpu_custom_call.1} parent=16 // pred_check_branch
        %82 = sbr.rel (%p80) target = $region23
      $region22: #{tpu_custom_call.1} parent=16 // pred_region
        %p83 = scmp.lt.s32.totalorder %s59, 0
        %s84 = ssub.s32 0, %s59
        %s85 = scalar_select %p83, %s84, %s59
        %s86 = sand.u32 %s85, 15
        %s87 = ssub.s32 0, %s86
        %s88 = scalar_select %p83, %s87, %s86
        %p89 = scmp.ne.s32.totalorder %s88, 0
        %p90 = scmp.lt.s32.totalorder %s88, 0
        %p91 = pnand %p90, %p89
        %p92 = pneg %p91
        %s93 = sadd.s32 %s88, 16
        %s94 = scalar_select %p92, %s93, %s88
        %s95 = scalar_lea.hbm %s1, %s63
        %s96 = scalar_lea.vmem [#allocation5], %s59
        %s97 = scalar_lea.sflag [#allocation2], %s94
        // Predicated region
        $region24: #{tpu_custom_call.1} parent=22 // pred_check
          _
        $region25: #{tpu_custom_call.1} parent=22 // pred_check_branch
          %99 = sbr.rel target = $region27
        $region26: #{tpu_custom_call.1} parent=22 // pred_region
          %100 = sst [smem:[#allocation9]] [#allocation12]
          %101 = sst [smem:[#allocation10]] [#allocation11]
        $region27: #{tpu_custom_call.1} parent=22 // pred_fallthru
          _
        %103 = shalt.err (0)
        %s105 = sshll.u32 %s95, 4
        %s106 = int_to_ptr.hbm [resolvable:$true] %s105
        %s107 = sshll.u32 %s96, 4
        %s108 = int_to_ptr.vmem [resolvable:$true] %s107
        %110 = dma.hbm_to_vmem [thread:$0]  %s106, 16, %s108, %s97
      $region23: #{tpu_custom_call.1} parent=16 // pred_fallthru
        _
    $region17: #{tpu_custom_call.1} parent=1 // loop_footer
      %s58 = sadd.s32 1, %s54
    $region18: #{tpu_custom_call.1} parent=1 // loop_footer_branch
      %53 = sbr.rel target = $region14
    $region19: #{tpu_custom_call.1} parent=1 // loop_exit
      _
    // Predicated region
    $region28: #{tpu_custom_call.1} parent=1 // pred_check
      _
    $region29: #{tpu_custom_call.1} parent=1 // pred_check_branch
      %112 = sbr.rel (0) target = $region31
    $region30: #{tpu_custom_call.1} parent=1 // pred_region
      %114 = vsyncadd [#allocation6], 0
      %s115 = sshll.u32 [#allocation5], 4
      %s116 = int_to_ptr.vmem [resolvable:$true] %s115
      %s117 = sshll.u32 %s2, 4
      %s118 = int_to_ptr.hbm [resolvable:$true] %s117
      %123 = dma.vmem_to_hbm [thread:$0]  %s116, 2048, %s118, [#allocation6], 128, 128, 8
    $region31: #{tpu_custom_call.1} parent=1 // pred_fallthru
      _
    // Predicated region
    $region32: #{tpu_custom_call.1} parent=1 // pred_check
      _
    $region33: #{tpu_custom_call.1} parent=1 // pred_check_branch
      %125 = sbr.rel (0) target = $region35
    $region34: #{tpu_custom_call.1} parent=1 // pred_region
      %127 = dma.done [#allocation6], 2048
    $region35: #{tpu_custom_call.1} parent=1 // pred_fallthru
      _
    %128 = vsyncpa [#allocation6], 1
  %129 = vsyncmov [#allocation2]
  %s130 = vpop.sfrf %129
  %p131 = scmp.eq.s32.totalorder %s130, 0
  %p132 = pneg %p131
  %134 = shalt.err (%p132)
  %s135 = scalar_lea.sflag [#allocation2], 1
  %136 = vsyncmov %s135
  %s137 = vpop.sfrf %136
  %p138 = scmp.eq.s32.totalorder %s137, 0
  %p139 = pneg %p138
  %141 = shalt.err (%p139)
  %s142 = scalar_lea.sflag [#allocation2], 2
  %143 = vsyncmov %s142
  %s144 = vpop.sfrf %143
  %p145 = scmp.eq.s32.totalorder %s144, 0
  %p146 = pneg %p145
  %148 = shalt.err (%p146)
  %s149 = scalar_lea.sflag [#allocation2], 3
  %150 = vsyncmov %s149
  %s151 = vpop.sfrf %150
  %p152 = scmp.eq.s32.totalorder %s151, 0
  %p153 = pneg %p152
  %155 = shalt.err (%p153)
  %s156 = scalar_lea.sflag [#allocation2], 4
  %157 = vsyncmov %s156
  %s158 = vpop.sfrf %157
  %p159 = scmp.eq.s32.totalorder %s158, 0
  %p160 = pneg %p159
  %162 = shalt.err (%p160)
  %s163 = scalar_lea.sflag [#allocation2], 5
  %164 = vsyncmov %s163
  %s165 = vpop.sfrf %164
  %p166 = scmp.eq.s32.totalorder %s165, 0
  %p167 = pneg %p166
  %169 = shalt.err (%p167)
  %s170 = scalar_lea.sflag [#allocation2], 6
  %171 = vsyncmov %s170
  %s172 = vpop.sfrf %171
  %p173 = scmp.eq.s32.totalorder %s172, 0
  %p174 = pneg %p173
  %176 = shalt.err (%p174)
  %s177 = scalar_lea.sflag [#allocation2], 7
  %178 = vsyncmov %s177
  %s179 = vpop.sfrf %178
  %p180 = scmp.eq.s32.totalorder %s179, 0
  %p181 = pneg %p180
  %183 = shalt.err (%p181)
  %s184 = scalar_lea.sflag [#allocation2], 8
  %185 = vsyncmov %s184
  %s186 = vpop.sfrf %185
  %p187 = scmp.eq.s32.totalorder %s186, 0
  %p188 = pneg %p187
  %190 = shalt.err (%p188)
  %s191 = scalar_lea.sflag [#allocation2], 9
  %192 = vsyncmov %s191
  %s193 = vpop.sfrf %192
  %p194 = scmp.eq.s32.totalorder %s193, 0
  %p195 = pneg %p194
  %197 = shalt.err (%p195)
  %s198 = scalar_lea.sflag [#allocation2], 10
  %199 = vsyncmov %s198
  %s200 = vpop.sfrf %199
  %p201 = scmp.eq.s32.totalorder %s200, 0
  %p202 = pneg %p201
  %204 = shalt.err (%p202)
  %s205 = scalar_lea.sflag [#allocation2], 11
  %206 = vsyncmov %s205
  %s207 = vpop.sfrf %206
  %p208 = scmp.eq.s32.totalorder %s207, 0
  %p209 = pneg %p208
  %211 = shalt.err (%p209)
  %s212 = scalar_lea.sflag [#allocation2], 12
  %213 = vsyncmov %s212
  %s214 = vpop.sfrf %213
  %p215 = scmp.eq.s32.totalorder %s214, 0
  %p216 = pneg %p215
  %218 = shalt.err (%p216)
  %s219 = scalar_lea.sflag [#allocation2], 13
  %220 = vsyncmov %s219
  %s221 = vpop.sfrf %220
  %p222 = scmp.eq.s32.totalorder %s221, 0
  %p223 = pneg %p222
  %225 = shalt.err (%p223)
  %s226 = scalar_lea.sflag [#allocation2], 14
  %227 = vsyncmov %s226
  %s228 = vpop.sfrf %227
  %p229 = scmp.eq.s32.totalorder %s228, 0
  %p230 = pneg %p229
  %232 = shalt.err (%p230)
  %s233 = scalar_lea.sflag [#allocation2], 15
  %234 = vsyncmov %s233
  %s235 = vpop.sfrf %234
  %p236 = scmp.eq.s32.totalorder %s235, 0
  %p237 = pneg %p236
  %239 = shalt.err (%p237)

</llo_original>
